<compile_context>
chip_gen: v7x
topology: tpu7x:2x2x1
jax: 0.10.0
libtpu: 0.0.40
codegen_flags: <defaults>
</compile_context>

<pallas_src>
import functools

import jax
import jax.numpy as jnp
from jax import lax
from jax.experimental import pallas as pl
from jax.experimental.pallas import tpu as pltpu


def _phase1_kernel(x_ref, h0_ref, wx_ref, wzh_ref, bz_ref, bh_ref,
                   zg_ref, cx_ref):
    """Time-parallel work for one timestep t (grid axis, 'parallel').

    x_ref  : (1, B*H, 3*W*Cin)  im2col'd (H taps folded into K) input rows
    h0_ref : (B*H, 3*W*F)       im2col'd *initial* hidden state (same for all t)
    wx_ref : (3*W*Cin, 2*W*F)   K-stacked banded x-part weights [conv_xz|conv_xh]
    wzh_ref: (3*W*F, W*F)       K-stacked banded h-part weights of conv_xz
    bz_ref : (1, W*F)           conv_xz bias (tiled along W)
    bh_ref : (1, W*F)           conv_xh bias (tiled along W)
    zg_ref : (1, B*H, W*F)      out: zgate (== rgate, reference quirk)
    cx_ref : (1, B*H, W*F)      out: conv_xh x-half + bias
    """
    WF = zg_ref.shape[-1]
    # One K=3*W*Cin matmul computes BOTH the gate and candidate x-halves.
    q = jnp.dot(x_ref[0], wx_ref[...], preferred_element_type=jnp.float32)
    # Gate h-half applied to the fixed initial h0 (the gate conv never sees
    # the recurrent state in the reference).
    g = jnp.dot(h0_ref[...], wzh_ref[...], preferred_element_type=jnp.float32)
    zg_ref[0] = jax.nn.sigmoid(q[:, :WF] + g + bz_ref[...])
    cx_ref[0] = q[:, WF:] + bh_ref[...]


def _phase2_kernel(zg_ref, cx_ref, h0_ref, whh_ref, out_ref, *, H):
    """Serial recurrence, fully unrolled, everything VMEM resident.

    zg_ref : (S, B*H, W*F)   zgate for every step (phase-1 output)
    cx_ref : (S, B*H, W*F)   conv_xh x-half (+ bias) for every step
    h0_ref : (B*H, W*F)      initial hidden-state rows
    whh_ref: (W*F, 3*W*F)    N-concatenated banded h-part weights of conv_xh
    out_ref: (S, B*H, W*F)   h_t for every step
    """
    S, BH, WF = out_ref.shape
    B = BH // H
    # Boundary masks for the output-side dy shifts (hoisted, built once).
    y = lax.broadcasted_iota(jnp.int32, (B, H, WF), 1).reshape(BH, WF)
    m_top = (y > 0).astype(jnp.float32)        # kills the y-1 tap at y == 0
    m_bot = (y < H - 1).astype(jnp.float32)    # kills the y+1 tap at y == H-1

    whh = whh_ref[...]
    h_prev = h0_ref[...]
    for t in range(S):                         # S static & small -> full unroll
        z = zg_ref[t]
        rh = z * h_prev                        # rgate * h_prev (rgate == zgate)
        # ONE MXU push per step (N = 3*W*F).  conv_h[y] = P0[y-1]+P1[y]+P2[y+1]
        # with the dy shifts done on the output side: XLU sublane rolls plus
        # boundary masks (the roll wrap-around and the cross-batch row both
        # land exactly on the masked rows).
        p = jnp.dot(rh, whh, preferred_element_type=jnp.float32)   # (BH, 3*WF)
        conv_h = (m_top * pltpu.roll(p[:, 0:WF], shift=1, axis=0)
                  + p[:, WF:2 * WF]
                  + m_bot * pltpu.roll(p[:, 2 * WF:], shift=BH - 1, axis=0))
        ht = jnp.tanh(cx_ref[t] + conv_h)
        h_prev = h_prev + z * (ht - h_prev)    # == (1-z)*h_prev + z*ht
        out_ref[t] = h_prev


def _band_weights(w_oihw, W):
    """(F, C, 3, 3) conv weight -> (3, W*C, W*F) block-banded per-row matrices.

    big[dy][xin*C + c, xout*F + f] = w[f, c, dy, dx] with dx = xin - xout + 1,
    so a 'same' 3x3 conv over (H, W, C) becomes, for each kernel row dy, one
    matmul over the fused (W*C) axis; W zero-padding is encoded by the band.
    """
    Fo, C = w_oihw.shape[0], w_oihw.shape[1]
    w = w_oihw.astype(jnp.float32)
    rows = []
    for dy in range(3):
        acc = jnp.zeros((W * C, W * Fo), jnp.float32)
        for dx in range(3):
            sel = jnp.eye(W, k=1 - dx, dtype=jnp.float32)  # xin == xout + dx - 1
            acc = acc + jnp.kron(sel, w[:, :, dy, dx].T)
        rows.append(acc)
    return jnp.stack(rows)


def convgru_pallas(x_seq_nchw, h0_nchw, wz, bz, wh, bh):
    """x_seq_nchw: (S, B, Cin, H, W); h0_nchw: (B, F, H, W); wz/wh OIHW."""
    S, B, Cin, H, W = x_seq_nchw.shape
    F = wz.shape[0]
    WC, WF, BH = W * Cin, W * F, B * H

    # ---- host-side layout glue: lane-dense W*channel fusion + H im2col ----
    x_r = jnp.transpose(x_seq_nchw, (0, 1, 3, 4, 2)).reshape(S, B, H, WC)
    x_r = jnp.pad(x_r.astype(jnp.float32), ((0, 0), (0, 0), (1, 1), (0, 0)))
    x_col = jnp.concatenate(
        [x_r[:, :, 0:H], x_r[:, :, 1:H + 1], x_r[:, :, 2:H + 2]],
        axis=-1).reshape(S, BH, 3 * WC)                      # (S, BH, 192)

    h0_r = jnp.transpose(h0_nchw, (0, 2, 3, 1)).reshape(B, H, WF)
    h0_r = h0_r.astype(jnp.float32)
    h0_pad = jnp.pad(h0_r, ((0, 0), (1, 1), (0, 0)))
    h0_col = jnp.concatenate(
        [h0_pad[:, 0:H], h0_pad[:, 1:H + 1], h0_pad[:, 2:H + 2]],
        axis=-1).reshape(BH, 3 * WF)                         # (BH, 384)
    h0_flat = h0_r.reshape(BH, WF)

    # Split the concat-channel convs (conv(cat(x,h)) == conv_x(x) + conv_h(h))
    # and build banded per-dy weights, then fold dy into K (phase 1) / N
    # (phase 2) so each conv is a single matmul.
    wzx_b = _band_weights(wz[:, :Cin], W)                    # (3, WC, WF)
    whx_b = _band_weights(wh[:, :Cin], W)                    # (3, WC, WF)
    wx_cat = jnp.concatenate([wzx_b, whx_b], axis=2).reshape(3 * WC, 2 * WF)
    wzh_cat = _band_weights(wz[:, Cin:], W).reshape(3 * WF, WF)
    whh_b = _band_weights(wh[:, Cin:], W)                    # (3, WF, WF)
    whh_cat = jnp.concatenate([whh_b[0], whh_b[1], whh_b[2]], axis=1)  # (WF,3WF)
    bz_r = jnp.tile(bz.astype(jnp.float32), W).reshape(1, WF)
    bh_r = jnp.tile(bh.astype(jnp.float32), W).reshape(1, WF)

    # ---- phase 1: time-parallel gate / candidate x-parts, grid over S ----
    zg, cx = pl.pallas_call(
        _phase1_kernel,
        out_shape=(jax.ShapeDtypeStruct((S, BH, WF), jnp.float32),
                   jax.ShapeDtypeStruct((S, BH, WF), jnp.float32)),
        grid=(S,),
        in_specs=[
            pl.BlockSpec((1, BH, 3 * WC), lambda s: (s, 0, 0)),
            pl.BlockSpec((BH, 3 * WF), lambda s: (0, 0)),
            pl.BlockSpec((3 * WC, 2 * WF), lambda s: (0, 0)),
            pl.BlockSpec((3 * WF, WF), lambda s: (0, 0)),
            pl.BlockSpec((1, WF), lambda s: (0, 0)),
            pl.BlockSpec((1, WF), lambda s: (0, 0)),
        ],
        out_specs=(pl.BlockSpec((1, BH, WF), lambda s: (s, 0, 0)),
                   pl.BlockSpec((1, BH, WF), lambda s: (s, 0, 0))),
        compiler_params=pltpu.CompilerParams(
            dimension_semantics=("parallel",)),
        cost_estimate=pl.CostEstimate(
            flops=2 * S * BH * (3 * WC * 2 * WF + 3 * WF * WF),
            transcendentals=S * BH * WF,
            bytes_accessed=4 * (S * BH * 3 * WC + BH * 3 * WF
                                + 3 * WC * 2 * WF + 3 * WF * WF + 2 * WF
                                + 2 * S * BH * WF),
        ),
    )(x_col, h0_col, wx_cat, wzh_cat, bz_r, bh_r)

    # ---- phase 2: serial recurrence, single gridless call ----
    vmem = pl.BlockSpec(memory_space=pltpu.MemorySpace.VMEM)
    out = pl.pallas_call(
        functools.partial(_phase2_kernel, H=H),
        out_shape=jax.ShapeDtypeStruct((S, BH, WF), jnp.float32),
        in_specs=[vmem] * 4,
        out_specs=vmem,
        cost_estimate=pl.CostEstimate(
            flops=2 * S * BH * WF * 3 * WF,
            transcendentals=S * BH * WF,
            bytes_accessed=4 * (3 * S * BH * WF + BH * WF + 3 * WF * WF),
        ),
    )(zg, cx, h0_flat, whh_cat)

    out_nchw = jnp.transpose(out.reshape(S, B, H, W, F), (0, 1, 4, 2, 3))
    return out_nchw, (out_nchw[-1], None)


def convgru_ref(x_seq_nchw, h0, wz, bz, wh, bh):
    """Pure-JAX replica of the PyTorch forward (NCHW) for verification."""
    def conv(inp, w, b):
        y = jax.lax.conv_general_dilated(
            inp, w, window_strides=(1, 1), padding=((1, 1), (1, 1)),
            dimension_numbers=("NCHW", "OIHW", "NCHW"))
        return y + b[None, :, None, None]

    S = x_seq_nchw.shape[0]
    h = h0                      # never reassigned, mirroring the reference
    h_prev = h
    outs = []
    for t in range(S):
        x = x_seq_nchw[t]
        z = jax.nn.sigmoid(conv(jnp.concatenate([x, h], axis=1), wz, bz))
        r = z                   # conv_xz applied to the identical cat -> rgate == zgate
        ht = jnp.tanh(conv(jnp.concatenate([x, r * h_prev], axis=1), wh, bh))
        h_next = (1.0 - z) * h_prev + z * ht
        outs.append(h_next)
        h_prev = h_next
    return jnp.stack(outs)


if __name__ == "__main__":
    # ConvGRU(input_channel=4, num_filter=8, b_h_w=(2, 16, 16), kernel_size=3)
    S, B, Cin, F, H, W = 8, 2, 4, 8, 16, 16

    key = jax.random.PRNGKey(0)
    k1, k2, k3, k4, k5, k6 = jax.random.split(key, 6)
    x = jax.random.normal(k1, (S, B, Cin, H, W), jnp.float32)
    wz = 0.1 * jax.random.normal(k2, (F, Cin + F, 3, 3), jnp.float32)
    bz = 0.1 * jax.random.normal(k3, (F,), jnp.float32)
    wh = 0.1 * jax.random.normal(k4, (F, Cin + F, 3, 3), jnp.float32)
    bh = 0.1 * jax.random.normal(k5, (F,), jnp.float32)
    # conv_xr parameters exist in the PyTorch module but are never used in
    # forward, so they are intentionally not materialized here.
    h0 = 0.5 * jax.random.normal(k6, (B, F, H, W), jnp.float32)  # states=(h, None)

    fwd = jax.jit(convgru_pallas)
    outs, (h_last, _) = fwd(x, h0, wz, bz, wh, bh)
    outs = jax.block_until_ready(outs)

    ref = convgru_ref(x, h0, wz, bz, wh, bh)
    assert outs.shape == (S, B, F, H, W)
    assert h_last.shape == (B, F, H, W)
    max_err = float(jnp.max(jnp.abs(outs - ref)))
    assert max_err < 2e-3, f"max abs error {max_err}"

    print("KERNEL_OK")
</pallas_src>

<mosaic_0001>
module attributes {stable_mosaic.version = 11 : i64} {
  func.func @_phase1_kernel(%arg0: i32, %arg1: memref<1x32x192xf32, #tpu.memory_space<vmem>>, %arg2: memref<32x384xf32, #tpu.memory_space<vmem>>, %arg3: memref<192x256xf32, #tpu.memory_space<vmem>>, %arg4: memref<384x128xf32, #tpu.memory_space<vmem>>, %arg5: memref<1x128xf32, #tpu.memory_space<vmem>>, %arg6: memref<1x128xf32, #tpu.memory_space<vmem>>, %arg7: memref<1x32x128xf32, #tpu.memory_space<vmem>>, %arg8: memref<1x32x128xf32, #tpu.memory_space<vmem>>) attributes {dimension_semantics = [#tpu.dimension_semantics<parallel>], iteration_bounds = array<i64: 8>, scalar_prefetch = 0 : i64, scratch_operands = 0 : i64, tpu.core_type = #tpu.core_type<tc>, window_params = [{transform_indices = @transform_0, window_bounds = array<i64: 1, 32, 192>}, {pipeline_mode = #tpu.pipeline_mode<synchronous>, transform_indices = @transform_1, window_bounds = array<i64: 32, 384>}, {pipeline_mode = #tpu.pipeline_mode<synchronous>, transform_indices = @transform_2, window_bounds = array<i64: 192, 256>}, {pipeline_mode = #tpu.pipeline_mode<synchronous>, transform_indices = @transform_3, window_bounds = array<i64: 384, 128>}, {pipeline_mode = #tpu.pipeline_mode<synchronous>, transform_indices = @transform_4, window_bounds = array<i64: 1, 128>}, {pipeline_mode = #tpu.pipeline_mode<synchronous>, transform_indices = @transform_5, window_bounds = array<i64: 1, 128>}, {transform_indices = @transform_6, window_bounds = array<i64: 1, 32, 128>}, {transform_indices = @transform_7, window_bounds = array<i64: 1, 32, 128>}]} {
    %c0 = arith.constant 0 : index
    %c0_0 = arith.constant 0 : index
    %c0_1 = arith.constant 0 : index
    %0 = vector.load %arg1[%c0, %c0_0, %c0_1] : memref<1x32x192xf32, #tpu.memory_space<vmem>>, vector<1x32x192xf32>
    %1 = vector.shape_cast %0 : vector<1x32x192xf32> to vector<32x192xf32>
    %c0_2 = arith.constant 0 : index
    %c0_3 = arith.constant 0 : index
    %2 = vector.load %arg3[%c0_2, %c0_3] : memref<192x256xf32, #tpu.memory_space<vmem>>, vector<192x256xf32>
    %cst = arith.constant dense<0.000000e+00> : vector<32x256xf32>
    %3 = tpu.matmul %1, %2, %cst {dimension_numbers = #tpu.dot_dimension_numbers<[1], [0], [0], [1], [0, 0, 1, 1], [], []>} : vector<32x192xf32>, vector<192x256xf32>, vector<32x256xf32> -> vector<32x256xf32>
    %c0_4 = arith.constant 0 : index
    %c0_5 = arith.constant 0 : index
    %4 = vector.load %arg2[%c0_4, %c0_5] : memref<32x384xf32, #tpu.memory_space<vmem>>, vector<32x384xf32>
    %c0_6 = arith.constant 0 : index
    %c0_7 = arith.constant 0 : index
    %5 = vector.load %arg4[%c0_6, %c0_7] : memref<384x128xf32, #tpu.memory_space<vmem>>, vector<384x128xf32>
    %cst_8 = arith.constant dense<0.000000e+00> : vector<32x128xf32>
    %6 = tpu.matmul %4, %5, %cst_8 {dimension_numbers = #tpu.dot_dimension_numbers<[1], [0], [0], [1], [0, 0, 1, 1], [], []>} : vector<32x384xf32>, vector<384x128xf32>, vector<32x128xf32> -> vector<32x128xf32>
    %7 = vector.extract_strided_slice %3 {offsets = [0, 0], sizes = [32, 128], strides = [1, 1]} : vector<32x256xf32> to vector<32x128xf32>
    %8 = arith.addf %7, %6 : vector<32x128xf32>
    %c0_9 = arith.constant 0 : index
    %c0_10 = arith.constant 0 : index
    %9 = vector.load %arg5[%c0_9, %c0_10] : memref<1x128xf32, #tpu.memory_space<vmem>>, vector<1x128xf32>
    %10 = vector.broadcast %9 : vector<1x128xf32> to vector<32x128xf32>
    %11 = arith.addf %8, %10 : vector<32x128xf32>
    %12 = arith.negf %11 : vector<32x128xf32>
    %13 = math.exp %12 : vector<32x128xf32>
    %cst_11 = arith.constant 1.000000e+00 : f32
    %14 = vector.broadcast %cst_11 : f32 to vector<32x128xf32>
    %15 = arith.addf %14, %13 : vector<32x128xf32>
    %16 = arith.divf %14, %15 : vector<32x128xf32>
    %c0_12 = arith.constant 0 : index
    %c0_13 = arith.constant 0 : index
    %c0_14 = arith.constant 0 : index
    %17 = vector.load %arg7[%c0_12, %c0_13, %c0_14] : memref<1x32x128xf32, #tpu.memory_space<vmem>>, vector<1x32x128xf32>
    %18 = vector.shape_cast %17 : vector<1x32x128xf32> to vector<32x128xf32>
    %19 = vector.shape_cast %16 : vector<32x128xf32> to vector<1x32x128xf32>
    tpu.vector_store %arg7[%c0_12, %c0_13, %c0_14], %19 {strides = array<i32>} : memref<1x32x128xf32, #tpu.memory_space<vmem>>, vector<1x32x128xf32>,
    %20 = vector.extract_strided_slice %3 {offsets = [0, 128], sizes = [32, 128], strides = [1, 1]} : vector<32x256xf32> to vector<32x128xf32>
    %c0_15 = arith.constant 0 : index
    %c0_16 = arith.constant 0 : index
    %21 = vector.load %arg6[%c0_15, %c0_16] : memref<1x128xf32, #tpu.memory_space<vmem>>, vector<1x128xf32>
    %22 = vector.broadcast %21 : vector<1x128xf32> to vector<32x128xf32>
    %23 = arith.addf %20, %22 : vector<32x128xf32>
    %c0_17 = arith.constant 0 : index
    %c0_18 = arith.constant 0 : index
    %c0_19 = arith.constant 0 : index
    %24 = vector.load %arg8[%c0_17, %c0_18, %c0_19] : memref<1x32x128xf32, #tpu.memory_space<vmem>>, vector<1x32x128xf32>
    %25 = vector.shape_cast %24 : vector<1x32x128xf32> to vector<32x128xf32>
    %26 = vector.shape_cast %23 : vector<32x128xf32> to vector<1x32x128xf32>
    tpu.vector_store %arg8[%c0_17, %c0_18, %c0_19], %26 {strides = array<i32>} : memref<1x32x128xf32, #tpu.memory_space<vmem>>, vector<1x32x128xf32>,
    return
  }
  func.func @transform_0(%arg0: i32) -> (i32, i32, i32) {
    %c0_i32 = arith.constant 0 : i32
    %c0_i32_0 = arith.constant 0 : i32
    %c0_i32_1 = arith.constant 0 : i32
    return %arg0, %c0_i32, %c0_i32_0 : i32, i32, i32
  }
  func.func @transform_1(%arg0: i32) -> (i32, i32) {
    %c0_i32 = arith.constant 0 : i32
    %c0_i32_0 = arith.constant 0 : i32
    %c0_i32_1 = arith.constant 0 : i32
    return %c0_i32, %c0_i32_0 : i32, i32
  }
  func.func @transform_2(%arg0: i32) -> (i32, i32) {
    %c0_i32 = arith.constant 0 : i32
    %c0_i32_0 = arith.constant 0 : i32
    %c0_i32_1 = arith.constant 0 : i32
    return %c0_i32, %c0_i32_0 : i32, i32
  }
  func.func @transform_3(%arg0: i32) -> (i32, i32) {
    %c0_i32 = arith.constant 0 : i32
    %c0_i32_0 = arith.constant 0 : i32
    %c0_i32_1 = arith.constant 0 : i32
    return %c0_i32, %c0_i32_0 : i32, i32
  }
  func.func @transform_4(%arg0: i32) -> (i32, i32) {
    %c0_i32 = arith.constant 0 : i32
    %c0_i32_0 = arith.constant 0 : i32
    %c0_i32_1 = arith.constant 0 : i32
    return %c0_i32, %c0_i32_0 : i32, i32
  }
  func.func @transform_5(%arg0: i32) -> (i32, i32) {
    %c0_i32 = arith.constant 0 : i32
    %c0_i32_0 = arith.constant 0 : i32
    %c0_i32_1 = arith.constant 0 : i32
    return %c0_i32, %c0_i32_0 : i32, i32
  }
  func.func @transform_6(%arg0: i32) -> (i32, i32, i32) {
    %c0_i32 = arith.constant 0 : i32
    %c0_i32_0 = arith.constant 0 : i32
    %c0_i32_1 = arith.constant 0 : i32
    return %arg0, %c0_i32, %c0_i32_0 : i32, i32, i32
  }
  func.func @transform_7(%arg0: i32) -> (i32, i32, i32) {
    %c0_i32 = arith.constant 0 : i32
    %c0_i32_0 = arith.constant 0 : i32
    %c0_i32_1 = arith.constant 0 : i32
    return %arg0, %c0_i32, %c0_i32_0 : i32, i32, i32
  }
}

module attributes {stable_mosaic.version = 11 : i64} {
  func.func @_phase2_kernel(%arg0: memref<8x32x128xf32, #tpu.memory_space<vmem>>, %arg1: memref<8x32x128xf32, #tpu.memory_space<vmem>>, %arg2: memref<32x128xf32, #tpu.memory_space<vmem>>, %arg3: memref<128x384xf32, #tpu.memory_space<vmem>>, %arg4: memref<8x32x128xf32, #tpu.memory_space<vmem>>) attributes {dimension_semantics = [], scalar_prefetch = 0 : i64, scratch_operands = 0 : i64, tpu.core_type = #tpu.core_type<tc>} {
    %0 = tpu.iota {dimensions = array<i32: 1>} : vector<2x16x128xi32>
    %1 = vector.shape_cast %0 : vector<2x16x128xi32> to vector<32x128xi32>
    %c0_i32 = arith.constant 0 : i32
    %2 = vector.broadcast %c0_i32 : i32 to vector<32x128xi32>
    %3 = arith.cmpi sgt, %1, %2 : vector<32x128xi32>
    %4 = arith.extui %3 : vector<32x128xi1> to vector<32x128xi32>
    %5 = arith.sitofp %4 : vector<32x128xi32> to vector<32x128xf32>
    %c15_i32 = arith.constant 15 : i32
    %6 = vector.broadcast %c15_i32 : i32 to vector<32x128xi32>
    %7 = arith.cmpi slt, %1, %6 : vector<32x128xi32>
    %8 = arith.extui %7 : vector<32x128xi1> to vector<32x128xi32>
    %9 = arith.sitofp %8 : vector<32x128xi32> to vector<32x128xf32>
    %c0 = arith.constant 0 : index
    %c0_0 = arith.constant 0 : index
    %10 = vector.load %arg3[%c0, %c0_0] : memref<128x384xf32, #tpu.memory_space<vmem>>, vector<128x384xf32>
    %c0_1 = arith.constant 0 : index
    %c0_2 = arith.constant 0 : index
    %11 = vector.load %arg2[%c0_1, %c0_2] : memref<32x128xf32, #tpu.memory_space<vmem>>, vector<32x128xf32>
    %c0_3 = arith.constant 0 : index
    %c0_4 = arith.constant 0 : index
    %c0_5 = arith.constant 0 : index
    %12 = vector.load %arg0[%c0_3, %c0_4, %c0_5] : memref<8x32x128xf32, #tpu.memory_space<vmem>>, vector<1x32x128xf32>
    %13 = vector.shape_cast %12 : vector<1x32x128xf32> to vector<32x128xf32>
    %14 = arith.mulf %13, %11 : vector<32x128xf32>
    %cst = arith.constant dense<0.000000e+00> : vector<32x384xf32>
    %15 = tpu.matmul %14, %10, %cst {dimension_numbers = #tpu.dot_dimension_numbers<[1], [0], [0], [1], [0, 0, 1, 1], [], []>} : vector<32x128xf32>, vector<128x384xf32>, vector<32x384xf32> -> vector<32x384xf32>
    %16 = vector.extract_strided_slice %15 {offsets = [0, 0], sizes = [32, 128], strides = [1, 1]} : vector<32x384xf32> to vector<32x128xf32>
    %c1_i32 = arith.constant 1 : i32
    %17 = tpu.dynamic_rotate %16 by %c1_i32 dim 0 : vector<32x128xf32>, i32 -> vector<32x128xf32>
    %18 = arith.mulf %5, %17 : vector<32x128xf32>
    %19 = vector.extract_strided_slice %15 {offsets = [0, 128], sizes = [32, 128], strides = [1, 1]} : vector<32x384xf32> to vector<32x128xf32>
    %20 = arith.addf %18, %19 : vector<32x128xf32>
    %21 = vector.extract_strided_slice %15 {offsets = [0, 256], sizes = [32, 128], strides = [1, 1]} : vector<32x384xf32> to vector<32x128xf32>
    %c31_i32 = arith.constant 31 : i32
    %22 = tpu.dynamic_rotate %21 by %c31_i32 dim 0 : vector<32x128xf32>, i32 -> vector<32x128xf32>
    %23 = arith.mulf %9, %22 : vector<32x128xf32>
    %24 = arith.addf %20, %23 : vector<32x128xf32>
    %c0_6 = arith.constant 0 : index
    %c0_7 = arith.constant 0 : index
    %c0_8 = arith.constant 0 : index
    %25 = vector.load %arg1[%c0_6, %c0_7, %c0_8] : memref<8x32x128xf32, #tpu.memory_space<vmem>>, vector<1x32x128xf32>
    %26 = vector.shape_cast %25 : vector<1x32x128xf32> to vector<32x128xf32>
    %27 = arith.addf %26, %24 : vector<32x128xf32>
    %28 = math.tanh %27 : vector<32x128xf32>
    %29 = arith.subf %28, %11 : vector<32x128xf32>
    %30 = arith.mulf %13, %29 : vector<32x128xf32>
    %31 = arith.addf %11, %30 : vector<32x128xf32>
    %c0_9 = arith.constant 0 : index
    %c0_10 = arith.constant 0 : index
    %c0_11 = arith.constant 0 : index
    %32 = vector.load %arg4[%c0_9, %c0_10, %c0_11] : memref<8x32x128xf32, #tpu.memory_space<vmem>>, vector<1x32x128xf32>
    %33 = vector.shape_cast %32 : vector<1x32x128xf32> to vector<32x128xf32>
    %34 = vector.shape_cast %31 : vector<32x128xf32> to vector<1x32x128xf32>
    tpu.vector_store %arg4[%c0_9, %c0_10, %c0_11], %34 {strides = array<i32>} : memref<8x32x128xf32, #tpu.memory_space<vmem>>, vector<1x32x128xf32>,
    %c1 = arith.constant 1 : index
    %c0_12 = arith.constant 0 : index
    %c0_13 = arith.constant 0 : index
    %35 = vector.load %arg0[%c1, %c0_12, %c0_13] : memref<8x32x128xf32, #tpu.memory_space<vmem>>, vector<1x32x128xf32>
    %36 = vector.shape_cast %35 : vector<1x32x128xf32> to vector<32x128xf32>
    %37 = arith.mulf %36, %31 : vector<32x128xf32>
    %cst_14 = arith.constant dense<0.000000e+00> : vector<32x384xf32>
    %38 = tpu.matmul %37, %10, %cst_14 {dimension_numbers = #tpu.dot_dimension_numbers<[1], [0], [0], [1], [0, 0, 1, 1], [], []>} : vector<32x128xf32>, vector<128x384xf32>, vector<32x384xf32> -> vector<32x384xf32>
    %39 = vector.extract_strided_slice %38 {offsets = [0, 0], sizes = [32, 128], strides = [1, 1]} : vector<32x384xf32> to vector<32x128xf32>
    %c1_i32_15 = arith.constant 1 : i32
    %40 = tpu.dynamic_rotate %39 by %c1_i32_15 dim 0 : vector<32x128xf32>, i32 -> vector<32x128xf32>
    %41 = arith.mulf %5, %40 : vector<32x128xf32>
    %42 = vector.extract_strided_slice %38 {offsets = [0, 128], sizes = [32, 128], strides = [1, 1]} : vector<32x384xf32> to vector<32x128xf32>
    %43 = arith.addf %41, %42 : vector<32x128xf32>
    %44 = vector.extract_strided_slice %38 {offsets = [0, 256], sizes = [32, 128], strides = [1, 1]} : vector<32x384xf32> to vector<32x128xf32>
    %c31_i32_16 = arith.constant 31 : i32
    %45 = tpu.dynamic_rotate %44 by %c31_i32_16 dim 0 : vector<32x128xf32>, i32 -> vector<32x128xf32>
    %46 = arith.mulf %9, %45 : vector<32x128xf32>
    %47 = arith.addf %43, %46 : vector<32x128xf32>
    %c1_17 = arith.constant 1 : index
    %c0_18 = arith.constant 0 : index
    %c0_19 = arith.constant 0 : index
    %48 = vector.load %arg1[%c1_17, %c0_18, %c0_19] : memref<8x32x128xf32, #tpu.memory_space<vmem>>, vector<1x32x128xf32>
    %49 = vector.shape_cast %48 : vector<1x32x128xf32> to vector<32x128xf32>
    %50 = arith.addf %49, %47 : vector<32x128xf32>
    %51 = math.tanh %50 : vector<32x128xf32>
    %52 = arith.subf %51, %31 : vector<32x128xf32>
    %53 = arith.mulf %36, %52 : vector<32x128xf32>
    %54 = arith.addf %31, %53 : vector<32x128xf32>
    %c1_20 = arith.constant 1 : index
    %c0_21 = arith.constant 0 : index
    %c0_22 = arith.constant 0 : index
    %55 = vector.load %arg4[%c1_20, %c0_21, %c0_22] : memref<8x32x128xf32, #tpu.memory_space<vmem>>, vector<1x32x128xf32>
    %56 = vector.shape_cast %55 : vector<1x32x128xf32> to vector<32x128xf32>
    %57 = vector.shape_cast %54 : vector<32x128xf32> to vector<1x32x128xf32>
    tpu.vector_store %arg4[%c1_20, %c0_21, %c0_22], %57 {strides = array<i32>} : memref<8x32x128xf32, #tpu.memory_space<vmem>>, vector<1x32x128xf32>,
    %c2 = arith.constant 2 : index
    %c0_23 = arith.constant 0 : index
    %c0_24 = arith.constant 0 : index
    %58 = vector.load %arg0[%c2, %c0_23, %c0_24] : memref<8x32x128xf32, #tpu.memory_space<vmem>>, vector<1x32x128xf32>
    %59 = vector.shape_cast %58 : vector<1x32x128xf32> to vector<32x128xf32>
    %60 = arith.mulf %59, %54 : vector<32x128xf32>
    %cst_25 = arith.constant dense<0.000000e+00> : vector<32x384xf32>
    %61 = tpu.matmul %60, %10, %cst_25 {dimension_numbers = #tpu.dot_dimension_numbers<[1], [0], [0], [1], [0, 0, 1, 1], [], []>} : vector<32x128xf32>, vector<128x384xf32>, vector<32x384xf32> -> vector<32x384xf32>
    %62 = vector.extract_strided_slice %61 {offsets = [0, 0], sizes = [32, 128], strides = [1, 1]} : vector<32x384xf32> to vector<32x128xf32>
    %c1_i32_26 = arith.constant 1 : i32
    %63 = tpu.dynamic_rotate %62 by %c1_i32_26 dim 0 : vector<32x128xf32>, i32 -> vector<32x128xf32>
    %64 = arith.mulf %5, %63 : vector<32x128xf32>
    %65 = vector.extract_strided_slice %61 {offsets = [0, 128], sizes = [32, 128], strides = [1, 1]} : vector<32x384xf32> to vector<32x128xf32>
    %66 = arith.addf %64, %65 : vector<32x128xf32>
    %67 = vector.extract_strided_slice %61 {offsets = [0, 256], sizes = [32, 128], strides = [1, 1]} : vector<32x384xf32> to vector<32x128xf32>
    %c31_i32_27 = arith.constant 31 : i32
    %68 = tpu.dynamic_rotate %67 by %c31_i32_27 dim 0 : vector<32x128xf32>, i32 -> vector<32x128xf32>
    %69 = arith.mulf %9, %68 : vector<32x128xf32>
    %70 = arith.addf %66, %69 : vector<32x128xf32>
    %c2_28 = arith.constant 2 : index
    %c0_29 = arith.constant 0 : index
    %c0_30 = arith.constant 0 : index
    %71 = vector.load %arg1[%c2_28, %c0_29, %c0_30] : memref<8x32x128xf32, #tpu.memory_space<vmem>>, vector<1x32x128xf32>
    %72 = vector.shape_cast %71 : vector<1x32x128xf32> to vector<32x128xf32>
    %73 = arith.addf %72, %70 : vector<32x128xf32>
    %74 = math.tanh %73 : vector<32x128xf32>
    %75 = arith.subf %74, %54 : vector<32x128xf32>
    %76 = arith.mulf %59, %75 : vector<32x128xf32>
    %77 = arith.addf %54, %76 : vector<32x128xf32>
    %c2_31 = arith.constant 2 : index
    %c0_32 = arith.constant 0 : index
    %c0_33 = arith.constant 0 : index
    %78 = vector.load %arg4[%c2_31, %c0_32, %c0_33] : memref<8x32x128xf32, #tpu.memory_space<vmem>>, vector<1x32x128xf32>
    %79 = vector.shape_cast %78 : vector<1x32x128xf32> to vector<32x128xf32>
    %80 = vector.shape_cast %77 : vector<32x128xf32> to vector<1x32x128xf32>
    tpu.vector_store %arg4[%c2_31, %c0_32, %c0_33], %80 {strides = array<i32>} : memref<8x32x128xf32, #tpu.memory_space<vmem>>, vector<1x32x128xf32>,
    %c3 = arith.constant 3 : index
    %c0_34 = arith.constant 0 : index
    %c0_35 = arith.constant 0 : index
    %81 = vector.load %arg0[%c3, %c0_34, %c0_35] : memref<8x32x128xf32, #tpu.memory_space<vmem>>, vector<1x32x128xf32>
    %82 = vector.shape_cast %81 : vector<1x32x128xf32> to vector<32x128xf32>
    %83 = arith.mulf %82, %77 : vector<32x128xf32>
    %cst_36 = arith.constant dense<0.000000e+00> : vector<32x384xf32>
    %84 = tpu.matmul %83, %10, %cst_36 {dimension_numbers = #tpu.dot_dimension_numbers<[1], [0], [0], [1], [0, 0, 1, 1], [], []>} : vector<32x128xf32>, vector<128x384xf32>, vector<32x384xf32> -> vector<32x384xf32>
    %85 = vector.extract_strided_slice %84 {offsets = [0, 0], sizes = [32, 128], strides = [1, 1]} : vector<32x384xf32> to vector<32x128xf32>
    %c1_i32_37 = arith.constant 1 : i32
    %86 = tpu.dynamic_rotate %85 by %c1_i32_37 dim 0 : vector<32x128xf32>, i32 -> vector<32x128xf32>
    %87 = arith.mulf %5, %86 : vector<32x128xf32>
    %88 = vector.extract_strided_slice %84 {offsets = [0, 128], sizes = [32, 128], strides = [1, 1]} : vector<32x384xf32> to vector<32x128xf32>
    %89 = arith.addf %87, %88 : vector<32x128xf32>
    %90 = vector.extract_strided_slice %84 {offsets = [0, 256], sizes = [32, 128], strides = [1, 1]} : vector<32x384xf32> to vector<32x128xf32>
    %c31_i32_38 = arith.constant 31 : i32
    %91 = tpu.dynamic_rotate %90 by %c31_i32_38 dim 0 : vector<32x128xf32>, i32 -> vector<32x128xf32>
    %92 = arith.mulf %9, %91 : vector<32x128xf32>
    %93 = arith.addf %89, %92 : vector<32x128xf32>
    %c3_39 = arith.constant 3 : index
    %c0_40 = arith.constant 0 : index
    %c0_41 = arith.constant 0 : index
    %94 = vector.load %arg1[%c3_39, %c0_40, %c0_41] : memref<8x32x128xf32, #tpu.memory_space<vmem>>, vector<1x32x128xf32>
    %95 = vector.shape_cast %94 : vector<1x32x128xf32> to vector<32x128xf32>
    %96 = arith.addf %95, %93 : vector<32x128xf32>
    %97 = math.tanh %96 : vector<32x128xf32>
    %98 = arith.subf %97, %77 : vector<32x128xf32>
    %99 = arith.mulf %82, %98 : vector<32x128xf32>
    %100 = arith.addf %77, %99 : vector<32x128xf32>
    %c3_42 = arith.constant 3 : index
    %c0_43 = arith.constant 0 : index
    %c0_44 = arith.constant 0 : index
    %101 = vector.load %arg4[%c3_42, %c0_43, %c0_44] : memref<8x32x128xf32, #tpu.memory_space<vmem>>, vector<1x32x128xf32>
    %102 = vector.shape_cast %101 : vector<1x32x128xf32> to vector<32x128xf32>
    %103 = vector.shape_cast %100 : vector<32x128xf32> to vector<1x32x128xf32>
    tpu.vector_store %arg4[%c3_42, %c0_43, %c0_44], %103 {strides = array<i32>} : memref<8x32x128xf32, #tpu.memory_space<vmem>>, vector<1x32x128xf32>,
    %c4 = arith.constant 4 : index
    %c0_45 = arith.constant 0 : index
    %c0_46 = arith.constant 0 : index
    %104 = vector.load %arg0[%c4, %c0_45, %c0_46] : memref<8x32x128xf32, #tpu.memory_space<vmem>>, vector<1x32x128xf32>
    %105 = vector.shape_cast %104 : vector<1x32x128xf32> to vector<32x128xf32>
    %106 = arith.mulf %105, %100 : vector<32x128xf32>
    %cst_47 = arith.constant dense<0.000000e+00> : vector<32x384xf32>
    %107 = tpu.matmul %106, %10, %cst_47 {dimension_numbers = #tpu.dot_dimension_numbers<[1], [0], [0], [1], [0, 0, 1, 1], [], []>} : vector<32x128xf32>, vector<128x384xf32>, vector<32x384xf32> -> vector<32x384xf32>
    %108 = vector.extract_strided_slice %107 {offsets = [0, 0], sizes = [32, 128], strides = [1, 1]} : vector<32x384xf32> to vector<32x128xf32>
    %c1_i32_48 = arith.constant 1 : i32
    %109 = tpu.dynamic_rotate %108 by %c1_i32_48 dim 0 : vector<32x128xf32>, i32 -> vector<32x128xf32>
    %110 = arith.mulf %5, %109 : vector<32x128xf32>
    %111 = vector.extract_strided_slice %107 {offsets = [0, 128], sizes = [32, 128], strides = [1, 1]} : vector<32x384xf32> to vector<32x128xf32>
    %112 = arith.addf %110, %111 : vector<32x128xf32>
    %113 = vector.extract_strided_slice %107 {offsets = [0, 256], sizes = [32, 128], strides = [1, 1]} : vector<32x384xf32> to vector<32x128xf32>
    %c31_i32_49 = arith.constant 31 : i32
    %114 = tpu.dynamic_rotate %113 by %c31_i32_49 dim 0 : vector<32x128xf32>, i32 -> vector<32x128xf32>
    %115 = arith.mulf %9, %114 : vector<32x128xf32>
    %116 = arith.addf %112, %115 : vector<32x128xf32>
    %c4_50 = arith.constant 4 : index
    %c0_51 = arith.constant 0 : index
    %c0_52 = arith.constant 0 : index
    %117 = vector.load %arg1[%c4_50, %c0_51, %c0_52] : memref<8x32x128xf32, #tpu.memory_space<vmem>>, vector<1x32x128xf32>
    %118 = vector.shape_cast %117 : vector<1x32x128xf32> to vector<32x128xf32>
    %119 = arith.addf %118, %116 : vector<32x128xf32>
    %120 = math.tanh %119 : vector<32x128xf32>
    %121 = arith.subf %120, %100 : vector<32x128xf32>
    %122 = arith.mulf %105, %121 : vector<32x128xf32>
    %123 = arith.addf %100, %122 : vector<32x128xf32>
    %c4_53 = arith.constant 4 : index
    %c0_54 = arith.constant 0 : index
    %c0_55 = arith.constant 0 : index
    %124 = vector.load %arg4[%c4_53, %c0_54, %c0_55] : memref<8x32x128xf32, #tpu.memory_space<vmem>>, vector<1x32x128xf32>
    %125 = vector.shape_cast %124 : vector<1x32x128xf32> to vector<32x128xf32>
    %126 = vector.shape_cast %123 : vector<32x128xf32> to vector<1x32x128xf32>
    tpu.vector_store %arg4[%c4_53, %c0_54, %c0_55], %126 {strides = array<i32>} : memref<8x32x128xf32, #tpu.memory_space<vmem>>, vector<1x32x128xf32>,
    %c5 = arith.constant 5 : index
    %c0_56 = arith.constant 0 : index
    %c0_57 = arith.constant 0 : index
    %127 = vector.load %arg0[%c5, %c0_56, %c0_57] : memref<8x32x128xf32, #tpu.memory_space<vmem>>, vector<1x32x128xf32>
    %128 = vector.shape_cast %127 : vector<1x32x128xf32> to vector<32x128xf32>
    %129 = arith.mulf %128, %123 : vector<32x128xf32>
    %cst_58 = arith.constant dense<0.000000e+00> : vector<32x384xf32>
    %130 = tpu.matmul %129, %10, %cst_58 {dimension_numbers = #tpu.dot_dimension_numbers<[1], [0], [0], [1], [0, 0, 1, 1], [], []>} : vector<32x128xf32>, vector<128x384xf32>, vector<32x384xf32> -> vector<32x384xf32>
    %131 = vector.extract_strided_slice %130 {offsets = [0, 0], sizes = [32, 128], strides = [1, 1]} : vector<32x384xf32> to vector<32x128xf32>
    %c1_i32_59 = arith.constant 1 : i32
    %132 = tpu.dynamic_rotate %131 by %c1_i32_59 dim 0 : vector<32x128xf32>, i32 -> vector<32x128xf32>
    %133 = arith.mulf %5, %132 : vector<32x128xf32>
    %134 = vector.extract_strided_slice %130 {offsets = [0, 128], sizes = [32, 128], strides = [1, 1]} : vector<32x384xf32> to vector<32x128xf32>
    %135 = arith.addf %133, %134 : vector<32x128xf32>
    %136 = vector.extract_strided_slice %130 {offsets = [0, 256], sizes = [32, 128], strides = [1, 1]} : vector<32x384xf32> to vector<32x128xf32>
    %c31_i32_60 = arith.constant 31 : i32
    %137 = tpu.dynamic_rotate %136 by %c31_i32_60 dim 0 : vector<32x128xf32>, i32 -> vector<32x128xf32>
    %138 = arith.mulf %9, %137 : vector<32x128xf32>
    %139 = arith.addf %135, %138 : vector<32x128xf32>
    %c5_61 = arith.constant 5 : index
    %c0_62 = arith.constant 0 : index
    %c0_63 = arith.constant 0 : index
    %140 = vector.load %arg1[%c5_61, %c0_62, %c0_63] : memref<8x32x128xf32, #tpu.memory_space<vmem>>, vector<1x32x128xf32>
    %141 = vector.shape_cast %140 : vector<1x32x128xf32> to vector<32x128xf32>
    %142 = arith.addf %141, %139 : vector<32x128xf32>
    %143 = math.tanh %142 : vector<32x128xf32>
    %144 = arith.subf %143, %123 : vector<32x128xf32>
    %145 = arith.mulf %128, %144 : vector<32x128xf32>
    %146 = arith.addf %123, %145 : vector<32x128xf32>
    %c5_64 = arith.constant 5 : index
    %c0_65 = arith.constant 0 : index
    %c0_66 = arith.constant 0 : index
    %147 = vector.load %arg4[%c5_64, %c0_65, %c0_66] : memref<8x32x128xf32, #tpu.memory_space<vmem>>, vector<1x32x128xf32>
    %148 = vector.shape_cast %147 : vector<1x32x128xf32> to vector<32x128xf32>
    %149 = vector.shape_cast %146 : vector<32x128xf32> to vector<1x32x128xf32>
    tpu.vector_store %arg4[%c5_64, %c0_65, %c0_66], %149 {strides = array<i32>} : memref<8x32x128xf32, #tpu.memory_space<vmem>>, vector<1x32x128xf32>,
    %c6 = arith.constant 6 : index
    %c0_67 = arith.constant 0 : index
    %c0_68 = arith.constant 0 : index
    %150 = vector.load %arg0[%c6, %c0_67, %c0_68] : memref<8x32x128xf32, #tpu.memory_space<vmem>>, vector<1x32x128xf32>
    %151 = vector.shape_cast %150 : vector<1x32x128xf32> to vector<32x128xf32>
    %152 = arith.mulf %151, %146 : vector<32x128xf32>
    %cst_69 = arith.constant dense<0.000000e+00> : vector<32x384xf32>
    %153 = tpu.matmul %152, %10, %cst_69 {dimension_numbers = #tpu.dot_dimension_numbers<[1], [0], [0], [1], [0, 0, 1, 1], [], []>} : vector<32x128xf32>, vector<128x384xf32>, vector<32x384xf32> -> vector<32x384xf32>
    %154 = vector.extract_strided_slice %153 {offsets = [0, 0], sizes = [32, 128], strides = [1, 1]} : vector<32x384xf32> to vector<32x128xf32>
    %c1_i32_70 = arith.constant 1 : i32
    %155 = tpu.dynamic_rotate %154 by %c1_i32_70 dim 0 : vector<32x128xf32>, i32 -> vector<32x128xf32>
    %156 = arith.mulf %5, %155 : vector<32x128xf32>
    %157 = vector.extract_strided_slice %153 {offsets = [0, 128], sizes = [32, 128], strides = [1, 1]} : vector<32x384xf32> to vector<32x128xf32>
    %158 = arith.addf %156, %157 : vector<32x128xf32>
    %159 = vector.extract_strided_slice %153 {offsets = [0, 256], sizes = [32, 128], strides = [1, 1]} : vector<32x384xf32> to vector<32x128xf32>
    %c31_i32_71 = arith.constant 31 : i32
    %160 = tpu.dynamic_rotate %159 by %c31_i32_71 dim 0 : vector<32x128xf32>, i32 -> vector<32x128xf32>
    %161 = arith.mulf %9, %160 : vector<32x128xf32>
    %162 = arith.addf %158, %161 : vector<32x128xf32>
    %c6_72 = arith.constant 6 : index
    %c0_73 = arith.constant 0 : index
    %c0_74 = arith.constant 0 : index
    %163 = vector.load %arg1[%c6_72, %c0_73, %c0_74] : memref<8x32x128xf32, #tpu.memory_space<vmem>>, vector<1x32x128xf32>
    %164 = vector.shape_cast %163 : vector<1x32x128xf32> to vector<32x128xf32>
    %165 = arith.addf %164, %162 : vector<32x128xf32>
    %166 = math.tanh %165 : vector<32x128xf32>
    %167 = arith.subf %166, %146 : vector<32x128xf32>
    %168 = arith.mulf %151, %167 : vector<32x128xf32>
    %169 = arith.addf %146, %168 : vector<32x128xf32>
    %c6_75 = arith.constant 6 : index
    %c0_76 = arith.constant 0 : index
    %c0_77 = arith.constant 0 : index
    %170 = vector.load %arg4[%c6_75, %c0_76, %c0_77] : memref<8x32x128xf32, #tpu.memory_space<vmem>>, vector<1x32x128xf32>
    %171 = vector.shape_cast %170 : vector<1x32x128xf32> to vector<32x128xf32>
    %172 = vector.shape_cast %169 : vector<32x128xf32> to vector<1x32x128xf32>
    tpu.vector_store %arg4[%c6_75, %c0_76, %c0_77], %172 {strides = array<i32>} : memref<8x32x128xf32, #tpu.memory_space<vmem>>, vector<1x32x128xf32>,
    %c7 = arith.constant 7 : index
    %c0_78 = arith.constant 0 : index
    %c0_79 = arith.constant 0 : index
    %173 = vector.load %arg0[%c7, %c0_78, %c0_79] : memref<8x32x128xf32, #tpu.memory_space<vmem>>, vector<1x32x128xf32>
    %174 = vector.shape_cast %173 : vector<1x32x128xf32> to vector<32x128xf32>
    %175 = arith.mulf %174, %169 : vector<32x128xf32>
    %cst_80 = arith.constant dense<0.000000e+00> : vector<32x384xf32>
    %176 = tpu.matmul %175, %10, %cst_80 {dimension_numbers = #tpu.dot_dimension_numbers<[1], [0], [0], [1], [0, 0, 1, 1], [], []>} : vector<32x128xf32>, vector<128x384xf32>, vector<32x384xf32> -> vector<32x384xf32>
    %177 = vector.extract_strided_slice %176 {offsets = [0, 0], sizes = [32, 128], strides = [1, 1]} : vector<32x384xf32> to vector<32x128xf32>
    %c1_i32_81 = arith.constant 1 : i32
    %178 = tpu.dynamic_rotate %177 by %c1_i32_81 dim 0 : vector<32x128xf32>, i32 -> vector<32x128xf32>
    %179 = arith.mulf %5, %178 : vector<32x128xf32>
    %180 = vector.extract_strided_slice %176 {offsets = [0, 128], sizes = [32, 128], strides = [1, 1]} : vector<32x384xf32> to vector<32x128xf32>
    %181 = arith.addf %179, %180 : vector<32x128xf32>
    %182 = vector.extract_strided_slice %176 {offsets = [0, 256], sizes = [32, 128], strides = [1, 1]} : vector<32x384xf32> to vector<32x128xf32>
    %c31_i32_82 = arith.constant 31 : i32
    %183 = tpu.dynamic_rotate %182 by %c31_i32_82 dim 0 : vector<32x128xf32>, i32 -> vector<32x128xf32>
    %184 = arith.mulf %9, %183 : vector<32x128xf32>
    %185 = arith.addf %181, %184 : vector<32x128xf32>
    %c7_83 = arith.constant 7 : index
    %c0_84 = arith.constant 0 : index
    %c0_85 = arith.constant 0 : index
    %186 = vector.load %arg1[%c7_83, %c0_84, %c0_85] : memref<8x32x128xf32, #tpu.memory_space<vmem>>, vector<1x32x128xf32>
    %187 = vector.shape_cast %186 : vector<1x32x128xf32> to vector<32x128xf32>
    %188 = arith.addf %187, %185 : vector<32x128xf32>
    %189 = math.tanh %188 : vector<32x128xf32>
    %190 = arith.subf %189, %169 : vector<32x128xf32>
    %191 = arith.mulf %174, %190 : vector<32x128xf32>
    %192 = arith.addf %169, %191 : vector<32x128xf32>
    %c7_86 = arith.constant 7 : index
    %c0_87 = arith.constant 0 : index
    %c0_88 = arith.constant 0 : index
    %193 = vector.load %arg4[%c7_86, %c0_87, %c0_88] : memref<8x32x128xf32, #tpu.memory_space<vmem>>, vector<1x32x128xf32>
    %194 = vector.shape_cast %193 : vector<1x32x128xf32> to vector<32x128xf32>
    %195 = vector.shape_cast %192 : vector<32x128xf32> to vector<1x32x128xf32>
    tpu.vector_store %arg4[%c7_86, %c0_87, %c0_88], %195 {strides = array<i32>} : memref<8x32x128xf32, #tpu.memory_space<vmem>>, vector<1x32x128xf32>,
    return
  }
}

</mosaic_0001>

<llo_original>
// kernel: tile.13
$region0: #{tile.13}
  #allocation0 [shape = 's32[1]{0}', space=sflag, size = 0x4, scoped, tag = 'scoped memory for tile.13']
  %s0 = inlined_call_operand.vmem [shape: f32[8], index: 0, kind: input, shape index: {}]
  %s1 = inlined_call_operand.vmem [shape: f32[16,8], index: 1, kind: output, shape index: {}]
  // Predicated region
  $region2: #{tile.13} parent=0 // pred_check
    _
  $region3: #{tile.13} parent=0 // pred_check_branch
    %3 = sbr.rel (0) target = $region5
  $region4: #{tile.13} parent=0 // pred_region
    _
  $region5: #{tile.13} parent=0 // pred_fallthru
    _
  %v4 = vld [vmem:[%s0] ss:$0 sm:$0xff]
  %5 = vst [vmem:[%s1] sm:$0xff] %v4
  %s6 = scalar_lea.vmem %s1, 8
  %7 = vst [vmem:[%s6] sm:$0xff] %v4

// kernel: tile.14
$region0: #{tile.14}
  %s0 = inlined_call_operand.vmem [shape: f32[16,8], index: 0, kind: input, shape index: {}]
  %s1 = inlined_call_operand.vmem [shape: f32[1,128], index: 1, kind: output, shape index: {}]
  $region1: #{tile.14} parent=0
    #allocation0 [shape = 'u8[4096]{0}', space=vmem, size = 0x1000, scoped, tag = 'scoped mem for output reshape']
    %v2 = vld [vmem:[%s0] sm:$0x1]
    %vm3 = vcmask 64512
    %4 = vst.msk [vmem:[#allocation0] sm:$0x1] %vm3, %v2
    %s5 = scalar_lea.vmem %s0, 15
    %v6 = vld [vmem:[%s5] sm:$0x1]
    %7 = vrot.lane.b32.xlu0 %v6, 120
    %v8 = vpop.permute.xlu0 %7
    %vm9 = vcmask 1048512
    %10 = vst.msk [vmem:[#allocation0] sm:$0x1] %vm9, %v8
    %s11 = scalar_lea.vmem %s0, 14
    %v12 = vld [vmem:[%s11] sm:$0x1]
    %13 = vrot.lane.b32.xlu0 %v12, 112
    %v14 = vpop.permute.xlu0 %13
    %vm15 = vcmask 982912
    %16 = vst.msk [vmem:[#allocation0] sm:$0x1] %vm15, %v14
    %s17 = scalar_lea.vmem %s0, 13
    %v18 = vld [vmem:[%s17] sm:$0x1]
    %19 = vrot.lane.b32.xlu0 %v18, 104
    %v20 = vpop.permute.xlu0 %19
    %vm21 = vcmask 917312
    %22 = vst.msk [vmem:[#allocation0] sm:$0x1] %vm21, %v20
    %s23 = scalar_lea.vmem %s0, 12
    %v24 = vld [vmem:[%s23] sm:$0x1]
    %25 = vrot.lane.b32.xlu0 %v24, 96
    %v26 = vpop.permute.xlu0 %25
    %vm27 = vcmask 851712
    %28 = vst.msk [vmem:[#allocation0] sm:$0x1] %vm27, %v26
    %s29 = scalar_lea.vmem %s0, 11
    %v30 = vld [vmem:[%s29] sm:$0x1]
    %31 = vrot.lane.b32.xlu0 %v30, 88
    %v32 = vpop.permute.xlu0 %31
    %vm33 = vcmask 786112
    %34 = vst.msk [vmem:[#allocation0] sm:$0x1] %vm33, %v32
    %s35 = scalar_lea.vmem %s0, 10
    %v36 = vld [vmem:[%s35] sm:$0x1]
    %37 = vrot.lane.b32.xlu0 %v36, 80
    %v38 = vpop.permute.xlu0 %37
    %vm39 = vcmask 720512
    %40 = vst.msk [vmem:[#allocation0] sm:$0x1] %vm39, %v38
    %s41 = scalar_lea.vmem %s0, 9
    %v42 = vld [vmem:[%s41] sm:$0x1]
    %43 = vrot.lane.b32.xlu0 %v42, 72
    %v44 = vpop.permute.xlu0 %43
    %vm45 = vcmask 654912
    %46 = vst.msk [vmem:[#allocation0] sm:$0x1] %vm45, %v44
    %s47 = scalar_lea.vmem %s0, 8
    %v48 = vld [vmem:[%s47] sm:$0x1]
    %49 = vrot.lane.b32.xlu0 %v48, 64
    %v50 = vpop.permute.xlu0 %49
    %vm51 = vcmask 589312
    %52 = vst.msk [vmem:[#allocation0] sm:$0x1] %vm51, %v50
    %s53 = scalar_lea.vmem %s0, 7
    %v54 = vld [vmem:[%s53] sm:$0x1]
    %55 = vrot.lane.b32.xlu0 %v54, 56
    %v56 = vpop.permute.xlu0 %55
    %vm57 = vcmask 523712
    %58 = vst.msk [vmem:[#allocation0] sm:$0x1] %vm57, %v56
    %s59 = scalar_lea.vmem %s0, 6
    %v60 = vld [vmem:[%s59] sm:$0x1]
    %61 = vrot.lane.b32.xlu0 %v60, 48
    %v62 = vpop.permute.xlu0 %61
    %vm63 = vcmask 458112
    %64 = vst.msk [vmem:[#allocation0] sm:$0x1] %vm63, %v62
    %s65 = scalar_lea.vmem %s0, 5
    %v66 = vld [vmem:[%s65] sm:$0x1]
    %67 = vrot.lane.b32.xlu0 %v66, 40
    %v68 = vpop.permute.xlu0 %67
    %vm69 = vcmask 392512
    %70 = vst.msk [vmem:[#allocation0] sm:$0x1] %vm69, %v68
    %s71 = scalar_lea.vmem %s0, 4
    %v72 = vld [vmem:[%s71] sm:$0x1]
    %73 = vrot.lane.b32.xlu0 %v72, 32
    %v74 = vpop.permute.xlu0 %73
    %vm75 = vcmask 326912
    %76 = vst.msk [vmem:[#allocation0] sm:$0x1] %vm75, %v74
    %s77 = scalar_lea.vmem %s0, 3
    %v78 = vld [vmem:[%s77] sm:$0x1]
    %79 = vrot.lane.b32.xlu0 %v78, 24
    %v80 = vpop.permute.xlu0 %79
    %vm81 = vcmask 261312
    %82 = vst.msk [vmem:[#allocation0] sm:$0x1] %vm81, %v80
    %s83 = scalar_lea.vmem %s0, 2
    %v84 = vld [vmem:[%s83] sm:$0x1]
    %85 = vrot.lane.b32.xlu0 %v84, 16
    %v86 = vpop.permute.xlu0 %85
    %vm87 = vcmask 195712
    %88 = vst.msk [vmem:[#allocation0] sm:$0x1] %vm87, %v86
    %s89 = scalar_lea.vmem %s0, 1
    %v90 = vld [vmem:[%s89] sm:$0x1]
    %91 = vrot.lane.b32.xlu0 %v90, 8
    %v92 = vpop.permute.xlu0 %91
    %vm93 = vcmask 130112
    %94 = vst.msk [vmem:[#allocation0] sm:$0x1] %vm93, %v92
    %s96 = sshllo.u32 0, 1
    %v98 = vld [vmem:[#allocation0] sm:%s96]
    %s99 = sshllo.u32 0, 1
    %100 = vst [vmem:[%s1] sm:%s99] %v98

// kernel: convgru_pallas.2
$region0: #{convgru_pallas.2}
  #allocation0 [shape = 'u32[]', space=smem, size = 0x4, offset = 0x4, fixed_abs, tag = 'smem constant byte address 0x4 - core index']
  #allocation1 [shape = 'u32[144,128]{1,0:T(1,128)}', space=vmem, size = 0x12000, scoped, tag = 'internal scratch']
  %s0 = inlined_call_operand.vmem [shape: f32[8,32,192], index: 0, kind: input, shape index: {}]
  %s1 = inlined_call_operand.vmem [shape: f32[32,384], index: 1, kind: input, shape index: {}]
  %s2 = inlined_call_operand.vmem [shape: f32[192,256], index: 2, kind: input, shape index: {}]
  %s3 = inlined_call_operand.vmem [shape: f32[384,128], index: 3, kind: input, shape index: {}]
  %s4 = inlined_call_operand.vmem [shape: f32[1,128], index: 4, kind: input, shape index: {}]
  %s5 = inlined_call_operand.vmem [shape: f32[1,128], index: 5, kind: input, shape index: {}]
  %s6 = inlined_call_operand.vmem [shape: f32[8,32,128], index: 6, kind: output, shape index: {0}]
  %s7 = inlined_call_operand.vmem [shape: f32[8,32,128], index: 7, kind: output, shape index: {1}]
  %8 = xla_tuple %s6, %s7
  %s9 = sld [smem:[#allocation0]]
  $region65: #{convgru_pallas.2} parent=0
    _
  %s11 = ssub.s32 1, %s9
  %s12 = scalar_select 0, %s11, %s9
  loop: start=0, step=1, limit=10
  $region2: #{convgru_pallas.2} parent=0 // loop_pre_header
    _
  $region3: #{convgru_pallas.2} parent=0 // loop_header
    %s14 = sphi 0, %s18
    %p15 = scmp.ge.s32.totalorder %s14, 10
    %s24 = sphi 0, %s26
    %s27 = sphi 0, %s24
    %s28 = sphi 0, %s27
    %s44 = sphi 0, %s28
    %s48 = sphi 0, %s48
    %s50 = sphi 0, %s48
    %s51 = sphi 0, %s50
    %s65 = sphi 0, %s51
    %s69 = sphi 0, %s69
    %s71 = sphi 0, %s69
    %s72 = sphi 0, %s71
    %s86 = sphi 0, %s72
    %s90 = sphi 0, %s90
    %s92 = sphi 0, %s90
    %s93 = sphi 0, %s92
    %s107 = sphi 0, %s93
    %s111 = sphi 0, %s111
    %s113 = sphi 0, %s111
    %s114 = sphi 0, %s113
    %s128 = sphi 0, %s114
    %s132 = sphi 0, %s132
    %s134 = sphi 0, %s132
    %s135 = sphi 0, %s134
    %s149 = sphi 0, %s135
    %s155 = sphi 0, %s157
    %s158 = sphi 0, %s155
    %s159 = sphi 0, %s158
    %s175 = sphi 0, %s159
    %s181 = sphi 0, %s183
    %s184 = sphi 0, %s181
    %s185 = sphi 0, %s184
    %s201 = sphi 0, %s185
  $region4: #{convgru_pallas.2} parent=0 // loop_header_branch
    %17 = sbr.rel (%p15) target = $region8
  $region5: #{convgru_pallas.2} parent=0 // loop_body
    %s19 = ssub.s32 %s14, 1
    %s20 = ssub.s32 %s14, 2
    %s21 = sadd.s32 %s14, 1
    %s22 = ssub.s32 %s14, %s21
    %p23 = scmp.eq.s32.totalorder %s22, 0
    %s25 = sadd.s32 %s24, 1
    %s26 = scalar_select %p23, %s24, %s25
    %p29 = pneg %p23
    %p30 = scmp.eq.s32.totalorder %s14, 7
    %p31 = por %p29, %p30
    %p32 = scmp.ne.s32.totalorder %s24, %s27
    %p33 = scmp.eq.s32.totalorder %s14, 0
    %p34 = por %p32, %p33
    %p35 = scmp.ne.s32.totalorder %s24, %s27
    %p36 = scmp.eq.s32.totalorder %s19, 7
    %p37 = por %p35, %p36
    %p38 = scmp.ne.s32.totalorder %s27, %s28
    %p39 = scmp.eq.s32.totalorder %s19, 0
    %p40 = por %p38, %p39
    %p41 = scmp.ne.s32.totalorder %s27, %s28
    %p42 = scmp.eq.s32.totalorder %s20, 7
    %p43 = por %p41, %p42
    %p45 = scmp.ne.s32.totalorder %s28, %s44
    %p46 = scmp.eq.s32.totalorder %s20, 0
    %p47 = por %p45, %p46
    %s49 = sadd.s32 %s48, 1
    %p52 = scmp.eq.s32.totalorder %s14, 7
    %p53 = scmp.ne.s32.totalorder %s48, %s50
    %p54 = scmp.eq.s32.totalorder %s14, 0
    %p55 = por %p53, %p54
    %p56 = scmp.ne.s32.totalorder %s48, %s50
    %p57 = scmp.eq.s32.totalorder %s19, 7
    %p58 = por %p56, %p57
    %p59 = scmp.ne.s32.totalorder %s50, %s51
    %p60 = scmp.eq.s32.totalorder %s19, 0
    %p61 = por %p59, %p60
    %p62 = scmp.ne.s32.totalorder %s50, %s51
    %p63 = scmp.eq.s32.totalorder %s20, 7
    %p64 = por %p62, %p63
    %p66 = scmp.ne.s32.totalorder %s51, %s65
    %p67 = scmp.eq.s32.totalorder %s20, 0
    %p68 = por %p66, %p67
    %s70 = sadd.s32 %s69, 1
    %p73 = scmp.eq.s32.totalorder %s14, 7
    %p74 = scmp.ne.s32.totalorder %s69, %s71
    %p75 = scmp.eq.s32.totalorder %s14, 0
    %p76 = por %p74, %p75
    %p77 = scmp.ne.s32.totalorder %s69, %s71
    %p78 = scmp.eq.s32.totalorder %s19, 7
    %p79 = por %p77, %p78
    %p80 = scmp.ne.s32.totalorder %s71, %s72
    %p81 = scmp.eq.s32.totalorder %s19, 0
    %p82 = por %p80, %p81
    %p83 = scmp.ne.s32.totalorder %s71, %s72
    %p84 = scmp.eq.s32.totalorder %s20, 7
    %p85 = por %p83, %p84
    %p87 = scmp.ne.s32.totalorder %s72, %s86
    %p88 = scmp.eq.s32.totalorder %s20, 0
    %p89 = por %p87, %p88
    %s91 = sadd.s32 %s90, 1
    %p94 = scmp.eq.s32.totalorder %s14, 7
    %p95 = scmp.ne.s32.totalorder %s90, %s92
    %p96 = scmp.eq.s32.totalorder %s14, 0
    %p97 = por %p95, %p96
    %p98 = scmp.ne.s32.totalorder %s90, %s92
    %p99 = scmp.eq.s32.totalorder %s19, 7
    %p100 = por %p98, %p99
    %p101 = scmp.ne.s32.totalorder %s92, %s93
    %p102 = scmp.eq.s32.totalorder %s19, 0
    %p103 = por %p101, %p102
    %p104 = scmp.ne.s32.totalorder %s92, %s93
    %p105 = scmp.eq.s32.totalorder %s20, 7
    %p106 = por %p104, %p105
    %p108 = scmp.ne.s32.totalorder %s93, %s107
    %p109 = scmp.eq.s32.totalorder %s20, 0
    %p110 = por %p108, %p109
    %s112 = sadd.s32 %s111, 1
    %p115 = scmp.eq.s32.totalorder %s14, 7
    %p116 = scmp.ne.s32.totalorder %s111, %s113
    %p117 = scmp.eq.s32.totalorder %s14, 0
    %p118 = por %p116, %p117
    %p119 = scmp.ne.s32.totalorder %s111, %s113
    %p120 = scmp.eq.s32.totalorder %s19, 7
    %p121 = por %p119, %p120
    %p122 = scmp.ne.s32.totalorder %s113, %s114
    %p123 = scmp.eq.s32.totalorder %s19, 0
    %p124 = por %p122, %p123
    %p125 = scmp.ne.s32.totalorder %s113, %s114
    %p126 = scmp.eq.s32.totalorder %s20, 7
    %p127 = por %p125, %p126
    %p129 = scmp.ne.s32.totalorder %s114, %s128
    %p130 = scmp.eq.s32.totalorder %s20, 0
    %p131 = por %p129, %p130
    %s133 = sadd.s32 %s132, 1
    %p136 = scmp.eq.s32.totalorder %s14, 7
    %p137 = scmp.ne.s32.totalorder %s132, %s134
    %p138 = scmp.eq.s32.totalorder %s14, 0
    %p139 = por %p137, %p138
    %p140 = scmp.ne.s32.totalorder %s132, %s134
    %p141 = scmp.eq.s32.totalorder %s19, 7
    %p142 = por %p140, %p141
    %p143 = scmp.ne.s32.totalorder %s134, %s135
    %p144 = scmp.eq.s32.totalorder %s19, 0
    %p145 = por %p143, %p144
    %p146 = scmp.ne.s32.totalorder %s134, %s135
    %p147 = scmp.eq.s32.totalorder %s20, 7
    %p148 = por %p146, %p147
    %p150 = scmp.ne.s32.totalorder %s135, %s149
    %p151 = scmp.eq.s32.totalorder %s20, 0
    %p152 = por %p150, %p151
    %s153 = ssub.s32 %s14, %s21
    %p154 = scmp.eq.s32.totalorder %s153, 0
    %s156 = sadd.s32 %s155, 1
    %s157 = scalar_select %p154, %s155, %s156
    %p160 = pneg %p154
    %p161 = scmp.eq.s32.totalorder %s14, 7
    %p162 = por %p160, %p161
    %p163 = scmp.ne.s32.totalorder %s155, %s158
    %p164 = scmp.eq.s32.totalorder %s14, 0
    %p165 = por %p163, %p164
    %p166 = scmp.ne.s32.totalorder %s155, %s158
    %p167 = scmp.eq.s32.totalorder %s19, 7
    %p168 = por %p166, %p167
    %p169 = scmp.ne.s32.totalorder %s158, %s159
    %p170 = scmp.eq.s32.totalorder %s19, 0
    %p171 = por %p169, %p170
    %p172 = scmp.ne.s32.totalorder %s158, %s159
    %p173 = scmp.eq.s32.totalorder %s20, 7
    %p174 = por %p172, %p173
    %p176 = scmp.ne.s32.totalorder %s159, %s175
    %p177 = scmp.eq.s32.totalorder %s20, 0
    %p178 = por %p176, %p177
    %s179 = ssub.s32 %s14, %s21
    %p180 = scmp.eq.s32.totalorder %s179, 0
    %s182 = sadd.s32 %s181, 1
    %s183 = scalar_select %p180, %s181, %s182
    %p186 = pneg %p180
    %p187 = scmp.eq.s32.totalorder %s14, 7
    %p188 = por %p186, %p187
    %p189 = scmp.ne.s32.totalorder %s181, %s184
    %p190 = scmp.eq.s32.totalorder %s14, 0
    %p191 = por %p189, %p190
    %p192 = scmp.ne.s32.totalorder %s181, %s184
    %p193 = scmp.eq.s32.totalorder %s19, 7
    %p194 = por %p192, %p193
    %p195 = scmp.ne.s32.totalorder %s184, %s185
    %p196 = scmp.eq.s32.totalorder %s19, 0
    %p197 = por %p195, %p196
    %p198 = scmp.ne.s32.totalorder %s184, %s185
    %p199 = scmp.eq.s32.totalorder %s20, 7
    %p200 = por %p198, %p199
    %p202 = scmp.ne.s32.totalorder %s185, %s201
    %p203 = scmp.eq.s32.totalorder %s20, 0
    %p204 = por %p202, %p203
    %p205 = scmp.le.s32.totalorder 1, %s14
    %p206 = scmp.lt.s32.totalorder %s14, 9
    %p207 = pnand %p205, %p206
    %p208 = pneg %p207
    // Predicated region
    $region9: #{convgru_pallas.2} parent=5 // pred_check
      _
    $region10: #{convgru_pallas.2} parent=5 // pred_check_branch
      %210 = sbr.rel (%p207) target = $region12
    $region11: #{convgru_pallas.2} parent=5 // pred_region
      %s211 = ssub.s32 %s14, 1
      // Predicated region
      $region13: #{convgru_pallas.2} parent=11 // pred_check
        %p212 = pneg %p61
      $region14: #{convgru_pallas.2} parent=11 // pred_check_branch
        %214 = sbr.rel (%p212) target = $region16
      $region15: #{convgru_pallas.2} parent=11 // pred_region
        _
      $region16: #{convgru_pallas.2} parent=11 // pred_fallthru
        _
      // Predicated region
      $region17: #{convgru_pallas.2} parent=11 // pred_check
        %p215 = pneg %p82
      $region18: #{convgru_pallas.2} parent=11 // pred_check_branch
        %217 = sbr.rel (%p215) target = $region20
      $region19: #{convgru_pallas.2} parent=11 // pred_region
        _
      $region20: #{convgru_pallas.2} parent=11 // pred_fallthru
        _
      // Predicated region
      $region21: #{convgru_pallas.2} parent=11 // pred_check
        %p218 = pneg %p103
      $region22: #{convgru_pallas.2} parent=11 // pred_check_branch
        %220 = sbr.rel (%p218) target = $region24
      $region23: #{convgru_pallas.2} parent=11 // pred_region
        _
      $region24: #{convgru_pallas.2} parent=11 // pred_fallthru
        _
      // Predicated region
      $region25: #{convgru_pallas.2} parent=11 // pred_check
        %p221 = pneg %p124
      $region26: #{convgru_pallas.2} parent=11 // pred_check_branch
        %223 = sbr.rel (%p221) target = $region28
      $region27: #{convgru_pallas.2} parent=11 // pred_region
        _
      $region28: #{convgru_pallas.2} parent=11 // pred_fallthru
        _
      // Predicated region
      $region29: #{convgru_pallas.2} parent=11 // pred_check
        %p224 = pneg %p145
      $region30: #{convgru_pallas.2} parent=11 // pred_check_branch
        %226 = sbr.rel (%p224) target = $region32
      $region31: #{convgru_pallas.2} parent=11 // pred_region
        _
      $region32: #{convgru_pallas.2} parent=11 // pred_fallthru
        _
    $region12: #{convgru_pallas.2} parent=5 // pred_fallthru
      _
    %p227 = scmp.lt.s32.totalorder %s14, 8
    // Predicated region
    $region33: #{convgru_pallas.2} parent=5 // pred_check
      %p228 = pneg %p227
    $region34: #{convgru_pallas.2} parent=5 // pred_check_branch
      %230 = sbr.rel (%p228) target = $region36
    $region35: #{convgru_pallas.2} parent=5 // pred_region
      // Predicated region
      $region37: #{convgru_pallas.2} parent=35 // pred_check
        %p231 = pneg %p34
      $region38: #{convgru_pallas.2} parent=35 // pred_check_branch
        %233 = sbr.rel (%p231) target = $region40
      $region39: #{convgru_pallas.2} parent=35 // pred_region
        %p234 = scmp.lt.s32.totalorder %s14, 7
        %s235 = scalar_select %p234, %s14, 7
        %s236 = smul.addr %s235, 8
        %s237 = smul.addr %s236, 8
        %s238 = scalar_lea.vmem %s0, %s237
      $region40: #{convgru_pallas.2} parent=35 // pred_fallthru
        _
    $region36: #{convgru_pallas.2} parent=5 // pred_fallthru
      _
    %p239 = scmp.le.s32.totalorder 1, %s14
    %p240 = scmp.lt.s32.totalorder %s14, 9
    %p241 = pnand %p239, %p240
    %p242 = pneg %p241
    // Predicated region
    $region41: #{convgru_pallas.2} parent=5 // pred_check
      _
    $region42: #{convgru_pallas.2} parent=5 // pred_check_branch
      %244 = sbr.rel (%p241) target = $region44
    $region43: #{convgru_pallas.2} parent=5 // pred_region
      %s245 = ssub.s32 %s14, 1
      %p246 = scmp.lt.s32.totalorder %s19, 7
      %s247 = scalar_select %p246, %s19, 7
      %s248 = smul.addr %s247, 8
      %s249 = smul.addr %s248, 8
      %s250 = scalar_lea.vmem %s0, %s249
      %p251 = pneg %p40
      %p252 = pneg %p37
      %p253 = pneg %p61
      %p254 = pneg %p58
      %p255 = pneg %p82
      %p256 = pneg %p79
      %p257 = pneg %p103
      %p258 = pneg %p100
      %p259 = pneg %p124
      %p260 = pneg %p121
      %p261 = pneg %p145
      %p262 = pneg %p142
      %p263 = pneg %p171
      %p264 = pneg %p168
      %p265 = scmp.lt.s32.totalorder %s19, 7
      %s266 = scalar_select %p265, %s19, 7
      %s267 = smul.addr %s266, 4
      %s268 = smul.addr %s267, 8
      %s269 = scalar_lea.vmem %s6, %s268
      %p270 = pneg %p197
      %p271 = pneg %p194
      %p272 = scmp.lt.s32.totalorder %s19, 7
      %s273 = scalar_select %p272, %s19, 7
      %s274 = smul.addr %s273, 4
      %s275 = smul.addr %s274, 8
      %s276 = scalar_lea.vmem %s7, %s275
      %p277 = scmp.lt.s32.totalorder %s19, 7
      %s278 = scalar_select %p277, %s19, 7
      %s279 = smul.addr %s278, 8
      %s280 = smul.addr %s279, 8
      %s281 = scalar_lea.vmem %s0, %s280
      %p282 = scmp.lt.s32.totalorder %s19, 7
      %s283 = scalar_select %p282, %s19, 7
      %s284 = smul.addr %s283, 4
      %s285 = smul.addr %s284, 8
      %s286 = scalar_lea.vmem %s6, %s285
      %p287 = scmp.lt.s32.totalorder %s19, 7
      %s288 = scalar_select %p287, %s19, 7
      %s289 = smul.addr %s288, 4
      %s290 = smul.addr %s289, 8
      %s291 = scalar_lea.vmem %s7, %s290
      %v292 = vld [vmem:[%s281] sm:$0xff]
      %v293 = vld [vmem:[%s281 + $0x8] sm:$0xff]
      %v294 = vld [vmem:[%s281 + $0x10] sm:$0xff]
      %v295 = vld [vmem:[%s281 + $0x18] sm:$0xff]
      %v296 = vld [vmem:[%s281 + $0x20] sm:$0xff]
      %v297 = vld [vmem:[%s281 + $0x28] sm:$0xff]
      %v298 = vld [vmem:[%s281 + $0x30] sm:$0xff]
      %v299 = vld [vmem:[%s281 + $0x38] sm:$0xff]
      %v300 = vld [vmem:[%s2] sm:$0xff]
      %v301 = vld [vmem:[%s2 + $0x8] sm:$0xff]
      %v302 = vld [vmem:[%s2 + $0x10] sm:$0xff]
      %v303 = vld [vmem:[%s2 + $0x18] sm:$0xff]
      %v304 = vld [vmem:[%s2 + $0x20] sm:$0xff]
      %v305 = vld [vmem:[%s2 + $0x28] sm:$0xff]
      %v306 = vld [vmem:[%s2 + $0x30] sm:$0xff]
      %v307 = vld [vmem:[%s2 + $0x38] sm:$0xff]
      %v308 = vld [vmem:[%s2 + $0x40] sm:$0xff]
      %v309 = vld [vmem:[%s2 + $0x48] sm:$0xff]
      %v310 = vld [vmem:[%s2 + $0x50] sm:$0xff]
      %v311 = vld [vmem:[%s2 + $0x58] sm:$0xff]
      %v312 = vld [vmem:[%s2 + $0x60] sm:$0xff]
      %v313 = vld [vmem:[%s2 + $0x68] sm:$0xff]
      %v314 = vld [vmem:[%s2 + $0x70] sm:$0xff]
      %v315 = vld [vmem:[%s2 + $0x78] sm:$0xff]
      %v316 = vld [vmem:[%s2 + $0x80] sm:$0xff]
      %v317 = vld [vmem:[%s2 + $0x88] sm:$0xff]
      %v318 = vld [vmem:[%s2 + $0x90] sm:$0xff]
      %v319 = vld [vmem:[%s2 + $0x98] sm:$0xff]
      %v320 = vld [vmem:[%s2 + $0xa0] sm:$0xff]
      %v321 = vld [vmem:[%s2 + $0xa8] sm:$0xff]
      %v322 = vld [vmem:[%s2 + $0xb0] sm:$0xff]
      %v323 = vld [vmem:[%s2 + $0xb8] sm:$0xff]
      %v324 = vld [vmem:[%s2 + $0xc0] sm:$0xff]
      %v325 = vld [vmem:[%s2 + $0xc8] sm:$0xff]
      %v326 = vld [vmem:[%s2 + $0xd0] sm:$0xff]
      %v327 = vld [vmem:[%s2 + $0xd8] sm:$0xff]
      %v328 = vld [vmem:[%s2 + $0xe0] sm:$0xff]
      %v329 = vld [vmem:[%s2 + $0xe8] sm:$0xff]
      %v330 = vld [vmem:[%s2 + $0xf0] sm:$0xff]
      %v331 = vld [vmem:[%s2 + $0xf8] sm:$0xff]
      %v332 = vld [vmem:[%s2 + $0x100] sm:$0xff]
      %v333 = vld [vmem:[%s2 + $0x108] sm:$0xff]
      %v334 = vld [vmem:[%s2 + $0x110] sm:$0xff]
      %v335 = vld [vmem:[%s2 + $0x118] sm:$0xff]
      %v336 = vld [vmem:[%s2 + $0x120] sm:$0xff]
      %v337 = vld [vmem:[%s2 + $0x128] sm:$0xff]
      %v338 = vld [vmem:[%s2 + $0x130] sm:$0xff]
      %v339 = vld [vmem:[%s2 + $0x138] sm:$0xff]
      %v340 = vld [vmem:[%s2 + $0x140] sm:$0xff]
      %v341 = vld [vmem:[%s2 + $0x148] sm:$0xff]
      %v342 = vld [vmem:[%s2 + $0x150] sm:$0xff]
      %v343 = vld [vmem:[%s2 + $0x158] sm:$0xff]
      %v344 = vld [vmem:[%s2 + $0x160] sm:$0xff]
      %v345 = vld [vmem:[%s2 + $0x168] sm:$0xff]
      %v346 = vld [vmem:[%s2 + $0x170] sm:$0xff]
      %v347 = vld [vmem:[%s2 + $0x178] sm:$0xff]
      %vm348 = vcmask 523264
      %v350 = vsel %vm348, %v293, 0
      %v353 = vsel %vm348, %v295, 0
      %v356 = vsel %vm348, %v297, 0
      %v359 = vsel %vm348, %v299, 0
      %361 = vmatprep.subr.mxu0 %v301
      %362 = vmatpush1.msra.mxu0 %v300
      %363 = vmatprep.subr.mxu0 %v303
      %364 = vmatpush1.msra.mxu0 %v302
      %365 = vmatprep.subr.mxu0 %v305
      %366 = vmatpush1.msra.mxu0 %v304
      %367 = vmatprep.subr.mxu0 %v307
      %368 = vmatpush1.msra.mxu0 %v306
      %369 = vmatprep.subr.mxu0 %v309
      %370 = vmatpush1.msra.mxu0 %v308
      %371 = vmatprep.subr.mxu0 %v311
      %372 = vmatpush1.msra.mxu0 %v310
      %373 = vmatprep.subr.mxu0 %v313
      %374 = vmatpush1.msra.mxu0 %v312
      %375 = vmatprep.subr.mxu0 %v315
      %376 = vmatpush1.msra.mxu0 %v314
      %377 = vmatprep.subr.mxu0 %v317
      %378 = vmatpush1.msra.mxu0 %v316
      %379 = vmatprep.subr.mxu0 %v319
      %380 = vmatpush1.msra.mxu0 %v318
      %381 = vmatprep.subr.mxu0 %v321
      %382 = vmatpush1.msra.mxu0 %v320
      %383 = vmatprep.subr.mxu0 %v323
      %384 = vmatpush1.msra.mxu0 %v322
      %385 = vmatprep.subr.mxu0 %v325
      %386 = vmatpush1.msra.mxu0 %v324
      %387 = vmatprep.subr.mxu0 %v327
      %388 = vmatpush1.msra.mxu0 %v326
      %389 = vmatprep.subr.mxu0 %v329
      %390 = vmatpush1.msra.mxu0 %v328
      %391 = vmatprep.subr.mxu0 %v331
      %392 = vmatpush1.msra.mxu0 %v330
      %393 = vmatprep.subr.mxu0 %v333
      %394 = vmatpush1.msra.mxu0 %v332
      %395 = vmatprep.subr.mxu0 %v335
      %396 = vmatpush1.msra.mxu0 %v334
      %397 = vmatprep.subr.mxu0 %v337
      %398 = vmatpush1.msra.mxu0 %v336
      %399 = vmatprep.subr.mxu0 %v339
      %400 = vmatpush1.msra.mxu0 %v338
      %401 = vmatprep.subr.mxu0 %v341
      %402 = vmatpush1.msra.mxu0 %v340
      %403 = vmatprep.subr.mxu0 %v343
      %404 = vmatpush1.msra.mxu0 %v342
      %405 = vmatprep.subr.mxu0 %v345
      %406 = vmatpush1.msra.mxu0 %v344
      %407 = vmatprep.subr.mxu0 %v347
      %408 = vmatpush1.msra.mxu0 %v346
      %409 = vmatprep.subr.mxu0 0.0
      %410 = vmatpush1.msra.mxu0 0.0
      %411 = vmatprep.subr.mxu0 0.0
      %412 = vmatpush1.msra.mxu0 0.0
      %413 = vmatprep.subr.mxu0 0.0
      %414 = vmatpush1.msra.mxu0 0.0
      %415 = vmatprep.subr.mxu0 0.0
      %416 = vmatpush1.msra.mxu0 0.0
      %417 = vmatprep.subr.mxu0 0.0
      %418 = vmatpush1.msra.mxu0 0.0
      %419 = vmatprep.subr.mxu0 0.0
      %420 = vmatpush1.msra.mxu0 0.0
      %421 = vmatprep.subr.mxu0 0.0
      %422 = vmatpush1.msra.mxu0 0.0
      %423 = vmatprep.subr.mxu0 0.0
      %424 = vmatpush1.msra.mxu0 0.0
      %425 = vmatprep.mubr.f32.mxu0 %v350
      %426 = vmatmul.mubr.f32.gmra.mrb[0].mxu0 %v292
      %v427 = vpop.f32.mrb[0].mxu0
      %v428 = vadd.f32 0.0, %v427
      %v429 = vpop.f32.mrb[0].mxu0
      %v430 = vadd.f32 0.0, %v429
      %431 = vmatprep.mubr.f32.mxu0 %v353
      %432 = vmatmul.mubr.f32.gmra.mrb[0].mxu0 %v294
      %v433 = vpop.f32.mrb[0].mxu0
      %v434 = vadd.f32 0.0, %v433
      %v435 = vpop.f32.mrb[0].mxu0
      %v436 = vadd.f32 0.0, %v435
      %437 = vmatprep.mubr.f32.mxu0 %v356
      %438 = vmatmul.mubr.f32.gmra.mrb[0].mxu0 %v296
      %v439 = vpop.f32.mrb[0].mxu0
      %v440 = vadd.f32 0.0, %v439
      %v441 = vpop.f32.mrb[0].mxu0
      %v442 = vadd.f32 0.0, %v441
      %443 = vmatprep.mubr.f32.mxu0 %v359
      %444 = vmatmul.mubr.f32.gmra.mrb[0].mxu0 %v298
      %v445 = vpop.f32.mrb[0].mxu0
      %v446 = vadd.f32 0.0, %v445
      %v447 = vpop.f32.mrb[0].mxu0
      %v448 = vadd.f32 0.0, %v447
      %449 = vdwg.mxu0
      %v450 = vld [vmem:[%s1] sm:$0xff]
      %v451 = vld [vmem:[%s1 + $0x8] sm:$0xff]
      %v452 = vld [vmem:[%s1 + $0x10] sm:$0xff]
      %v453 = vld [vmem:[%s1 + $0x18] sm:$0xff]
      %v454 = vld [vmem:[%s1 + $0x20] sm:$0xff]
      %v455 = vld [vmem:[%s1 + $0x28] sm:$0xff]
      %v456 = vld [vmem:[%s1 + $0x30] sm:$0xff]
      %v457 = vld [vmem:[%s1 + $0x38] sm:$0xff]
      %v458 = vld [vmem:[%s1 + $0x40] sm:$0xff]
      %v459 = vld [vmem:[%s1 + $0x48] sm:$0xff]
      %v460 = vld [vmem:[%s1 + $0x50] sm:$0xff]
      %v461 = vld [vmem:[%s1 + $0x58] sm:$0xff]
      %v462 = vld [vmem:[%s3] sm:$0xff]
      %v463 = vld [vmem:[%s3 + $0x8] sm:$0xff]
      %v464 = vld [vmem:[%s3 + $0x10] sm:$0xff]
      %v465 = vld [vmem:[%s3 + $0x18] sm:$0xff]
      %v466 = vld [vmem:[%s3 + $0x20] sm:$0xff]
      %v467 = vld [vmem:[%s3 + $0x28] sm:$0xff]
      %v468 = vld [vmem:[%s3 + $0x30] sm:$0xff]
      %v469 = vld [vmem:[%s3 + $0x38] sm:$0xff]
      %v470 = vld [vmem:[%s3 + $0x40] sm:$0xff]
      %v471 = vld [vmem:[%s3 + $0x48] sm:$0xff]
      %v472 = vld [vmem:[%s3 + $0x50] sm:$0xff]
      %v473 = vld [vmem:[%s3 + $0x58] sm:$0xff]
      %v474 = vld [vmem:[%s3 + $0x60] sm:$0xff]
      %v475 = vld [vmem:[%s3 + $0x68] sm:$0xff]
      %v476 = vld [vmem:[%s3 + $0x70] sm:$0xff]
      %v477 = vld [vmem:[%s3 + $0x78] sm:$0xff]
      %v478 = vld [vmem:[%s3 + $0x80] sm:$0xff]
      %v479 = vld [vmem:[%s3 + $0x88] sm:$0xff]
      %v480 = vld [vmem:[%s3 + $0x90] sm:$0xff]
      %v481 = vld [vmem:[%s3 + $0x98] sm:$0xff]
      %v482 = vld [vmem:[%s3 + $0xa0] sm:$0xff]
      %v483 = vld [vmem:[%s3 + $0xa8] sm:$0xff]
      %v484 = vld [vmem:[%s3 + $0xb0] sm:$0xff]
      %v485 = vld [vmem:[%s3 + $0xb8] sm:$0xff]
      %v486 = vld [vmem:[%s3 + $0xc0] sm:$0xff]
      %v487 = vld [vmem:[%s3 + $0xc8] sm:$0xff]
      %v488 = vld [vmem:[%s3 + $0xd0] sm:$0xff]
      %v489 = vld [vmem:[%s3 + $0xd8] sm:$0xff]
      %v490 = vld [vmem:[%s3 + $0xe0] sm:$0xff]
      %v491 = vld [vmem:[%s3 + $0xe8] sm:$0xff]
      %v492 = vld [vmem:[%s3 + $0xf0] sm:$0xff]
      %v493 = vld [vmem:[%s3 + $0xf8] sm:$0xff]
      %v494 = vld [vmem:[%s3 + $0x100] sm:$0xff]
      %v495 = vld [vmem:[%s3 + $0x108] sm:$0xff]
      %v496 = vld [vmem:[%s3 + $0x110] sm:$0xff]
      %v497 = vld [vmem:[%s3 + $0x118] sm:$0xff]
      %v498 = vld [vmem:[%s3 + $0x120] sm:$0xff]
      %v499 = vld [vmem:[%s3 + $0x128] sm:$0xff]
      %v500 = vld [vmem:[%s3 + $0x130] sm:$0xff]
      %v501 = vld [vmem:[%s3 + $0x138] sm:$0xff]
      %v502 = vld [vmem:[%s3 + $0x140] sm:$0xff]
      %v503 = vld [vmem:[%s3 + $0x148] sm:$0xff]
      %v504 = vld [vmem:[%s3 + $0x150] sm:$0xff]
      %v505 = vld [vmem:[%s3 + $0x158] sm:$0xff]
      %v506 = vld [vmem:[%s3 + $0x160] sm:$0xff]
      %v507 = vld [vmem:[%s3 + $0x168] sm:$0xff]
      %v508 = vld [vmem:[%s3 + $0x170] sm:$0xff]
      %v509 = vld [vmem:[%s3 + $0x178] sm:$0xff]
      %510 = vmatprep.subr.mxu0 0.0
      %511 = vmatpush1.msra.mxu0 %v462
      %512 = vmatprep.subr.mxu0 0.0
      %513 = vmatpush1.msra.mxu0 %v463
      %514 = vmatprep.subr.mxu0 0.0
      %515 = vmatpush1.msra.mxu0 %v464
      %516 = vmatprep.subr.mxu0 0.0
      %517 = vmatpush1.msra.mxu0 %v465
      %518 = vmatprep.subr.mxu0 0.0
      %519 = vmatpush1.msra.mxu0 %v466
      %520 = vmatprep.subr.mxu0 0.0
      %521 = vmatpush1.msra.mxu0 %v467
      %522 = vmatprep.subr.mxu0 0.0
      %523 = vmatpush1.msra.mxu0 %v468
      %524 = vmatprep.subr.mxu0 0.0
      %525 = vmatpush1.msra.mxu0 %v469
      %526 = vmatprep.subr.mxu0 0.0
      %527 = vmatpush1.msra.mxu0 %v470
      %528 = vmatprep.subr.mxu0 0.0
      %529 = vmatpush1.msra.mxu0 %v471
      %530 = vmatprep.subr.mxu0 0.0
      %531 = vmatpush1.msra.mxu0 %v472
      %532 = vmatprep.subr.mxu0 0.0
      %533 = vmatpush1.msra.mxu0 %v473
      %534 = vmatprep.subr.mxu0 0.0
      %535 = vmatpush1.msra.mxu0 %v474
      %536 = vmatprep.subr.mxu0 0.0
      %537 = vmatpush1.msra.mxu0 %v475
      %538 = vmatprep.subr.mxu0 0.0
      %539 = vmatpush1.msra.mxu0 %v476
      %540 = vmatprep.subr.mxu0 0.0
      %541 = vmatpush1.msra.mxu0 %v477
      %542 = vmatprep.subr.mxu0 0.0
      %543 = vmatpush1.msra.mxu0 %v478
      %544 = vmatprep.subr.mxu0 0.0
      %545 = vmatpush1.msra.mxu0 %v479
      %546 = vmatprep.subr.mxu0 0.0
      %547 = vmatpush1.msra.mxu0 %v480
      %548 = vmatprep.subr.mxu0 0.0
      %549 = vmatpush1.msra.mxu0 %v481
      %550 = vmatprep.subr.mxu0 0.0
      %551 = vmatpush1.msra.mxu0 %v482
      %552 = vmatprep.subr.mxu0 0.0
      %553 = vmatpush1.msra.mxu0 %v483
      %554 = vmatprep.subr.mxu0 0.0
      %555 = vmatpush1.msra.mxu0 %v484
      %556 = vmatprep.subr.mxu0 0.0
      %557 = vmatpush1.msra.mxu0 %v485
      %558 = vmatprep.subr.mxu0 0.0
      %559 = vmatpush1.msra.mxu0 %v486
      %560 = vmatprep.subr.mxu0 0.0
      %561 = vmatpush1.msra.mxu0 %v487
      %562 = vmatprep.subr.mxu0 0.0
      %563 = vmatpush1.msra.mxu0 %v488
      %564 = vmatprep.subr.mxu0 0.0
      %565 = vmatpush1.msra.mxu0 %v489
      %566 = vmatprep.subr.mxu0 0.0
      %567 = vmatpush1.msra.mxu0 %v490
      %568 = vmatprep.subr.mxu0 0.0
      %569 = vmatpush1.msra.mxu0 %v491
      %570 = vmatprep.subr.mxu0 0.0
      %571 = vmatpush1.msra.mxu0 %v492
      %572 = vmatprep.subr.mxu0 0.0
      %573 = vmatpush1.msra.mxu0 %v493
      %574 = vmatprep.mubr.f32.mxu0 %v451
      %575 = vmatmul.mubr.f32.gmra.mrb[0].mxu0 %v450
      %v576 = vpop.f32.mrb[0].mxu0
      %v577 = vadd.f32 0.0, %v576
      %v578 = vpop.f32.mrb[0].mxu0
      %579 = vmatprep.mubr.f32.mxu0 %v454
      %580 = vmatmul.mubr.f32.gmra.mrb[0].mxu0 %v453
      %v581 = vpop.f32.mrb[0].mxu0
      %v582 = vadd.f32 0.0, %v581
      %v583 = vpop.f32.mrb[0].mxu0
      %584 = vmatprep.mubr.f32.mxu0 %v457
      %585 = vmatmul.mubr.f32.gmra.mrb[0].mxu0 %v456
      %v586 = vpop.f32.mrb[0].mxu0
      %v587 = vadd.f32 0.0, %v586
      %v588 = vpop.f32.mrb[0].mxu0
      %589 = vmatprep.mubr.f32.mxu0 %v460
      %590 = vmatmul.mubr.f32.gmra.mrb[0].mxu0 %v459
      %v591 = vpop.f32.mrb[0].mxu0
      %v592 = vadd.f32 0.0, %v591
      %v593 = vpop.f32.mrb[0].mxu0
      %594 = vdwg.mxu0
      %595 = vmatprep.subr.mxu0 0.0
      %596 = vmatpush1.msra.mxu0 %v494
      %597 = vmatprep.subr.mxu0 0.0
      %598 = vmatpush1.msra.mxu0 %v495
      %599 = vmatprep.subr.mxu0 0.0
      %600 = vmatpush1.msra.mxu0 %v496
      %601 = vmatprep.subr.mxu0 0.0
      %602 = vmatpush1.msra.mxu0 %v497
      %603 = vmatprep.subr.mxu0 0.0
      %604 = vmatpush1.msra.mxu0 %v498
      %605 = vmatprep.subr.mxu0 0.0
      %606 = vmatpush1.msra.mxu0 %v499
      %607 = vmatprep.subr.mxu0 0.0
      %608 = vmatpush1.msra.mxu0 %v500
      %609 = vmatprep.subr.mxu0 0.0
      %610 = vmatpush1.msra.mxu0 %v501
      %611 = vmatprep.subr.mxu0 0.0
      %612 = vmatpush1.msra.mxu0 %v502
      %613 = vmatprep.subr.mxu0 0.0
      %614 = vmatpush1.msra.mxu0 %v503
      %615 = vmatprep.subr.mxu0 0.0
      %616 = vmatpush1.msra.mxu0 %v504
      %617 = vmatprep.subr.mxu0 0.0
      %618 = vmatpush1.msra.mxu0 %v505
      %619 = vmatprep.subr.mxu0 0.0
      %620 = vmatpush1.msra.mxu0 %v506
      %621 = vmatprep.subr.mxu0 0.0
      %622 = vmatpush1.msra.mxu0 %v507
      %623 = vmatprep.subr.mxu0 0.0
      %624 = vmatpush1.msra.mxu0 %v508
      %625 = vmatprep.subr.mxu0 0.0
      %626 = vmatpush1.msra.mxu0 %v509
      %627 = vmatprep.subr.mxu0 0.0
      %628 = vmatpush1.msra.mxu0 0.0
      %629 = vmatprep.subr.mxu0 0.0
      %630 = vmatpush1.msra.mxu0 0.0
      %631 = vmatprep.subr.mxu0 0.0
      %632 = vmatpush1.msra.mxu0 0.0
      %633 = vmatprep.subr.mxu0 0.0
      %634 = vmatpush1.msra.mxu0 0.0
      %635 = vmatprep.subr.mxu0 0.0
      %636 = vmatpush1.msra.mxu0 0.0
      %637 = vmatprep.subr.mxu0 0.0
      %638 = vmatpush1.msra.mxu0 0.0
      %639 = vmatprep.subr.mxu0 0.0
      %640 = vmatpush1.msra.mxu0 0.0
      %641 = vmatprep.subr.mxu0 0.0
      %642 = vmatpush1.msra.mxu0 0.0
      %643 = vmatprep.subr.mxu0 0.0
      %644 = vmatpush1.msra.mxu0 0.0
      %645 = vmatprep.subr.mxu0 0.0
      %646 = vmatpush1.msra.mxu0 0.0
      %647 = vmatprep.subr.mxu0 0.0
      %648 = vmatpush1.msra.mxu0 0.0
      %649 = vmatprep.subr.mxu0 0.0
      %650 = vmatpush1.msra.mxu0 0.0
      %651 = vmatprep.subr.mxu0 0.0
      %652 = vmatpush1.msra.mxu0 0.0
      %653 = vmatprep.subr.mxu0 0.0
      %654 = vmatpush1.msra.mxu0 0.0
      %655 = vmatprep.subr.mxu0 0.0
      %656 = vmatpush1.msra.mxu0 0.0
      %657 = vmatprep.subr.mxu0 0.0
      %658 = vmatpush1.msra.mxu0 0.0
      %659 = vmatprep.mubr.f32.mxu0 0.0
      %660 = vmatmul.mubr.f32.gmra.mrb[0].mxu0 %v452
      %v661 = vpop.f32.mrb[0].mxu0
      %v662 = vadd.f32 %v577, %v661
      %v663 = vpop.f32.mrb[0].mxu0
      %664 = vmatprep.mubr.f32.mxu0 0.0
      %665 = vmatmul.mubr.f32.gmra.mrb[0].mxu0 %v455
      %v666 = vpop.f32.mrb[0].mxu0
      %v667 = vadd.f32 %v582, %v666
      %v668 = vpop.f32.mrb[0].mxu0
      %669 = vmatprep.mubr.f32.mxu0 0.0
      %670 = vmatmul.mubr.f32.gmra.mrb[0].mxu0 %v458
      %v671 = vpop.f32.mrb[0].mxu0
      %v672 = vadd.f32 %v587, %v671
      %v673 = vpop.f32.mrb[0].mxu0
      %674 = vmatprep.mubr.f32.mxu0 0.0
      %675 = vmatmul.mubr.f32.gmra.mrb[0].mxu0 %v461
      %v676 = vpop.f32.mrb[0].mxu0
      %v677 = vadd.f32 %v592, %v676
      %v678 = vpop.f32.mrb[0].mxu0
      %679 = vdwg.mxu0
      %v680 = vadd.f32 %v428, %v662
      %v681 = vadd.f32 %v434, %v667
      %v682 = vadd.f32 %v440, %v672
      %v683 = vadd.f32 %v446, %v677
      %v684 = vld [vmem:[%s4] sm:$0x1]
      %v686 = vlaneseq
      %v687 = vshrl.u32 %v686, 7
      %v688 = vsub.s32 0, %v687
      %v689 = vrot.slane %v684, %v688
      %v691 = vadd.f32 %v680, %v689
      %v692 = vadd.f32 %v681, %v689
      %v693 = vadd.f32 %v682, %v689
      %v694 = vadd.f32 %v683, %v689
      %v695 = vxor.u32 %v691, 2147483648
      %v696 = vxor.u32 %v692, 2147483648
      %v697 = vxor.u32 %v693, 2147483648
      %v698 = vxor.u32 %v694, 2147483648
      %v699 = vmul.f32 %v695, 1.442695
      %v700 = vpow.pop %v699
      %v701 = vmul.f32 %v696, 1.442695
      %v702 = vpow.pop %v701
      %v703 = vmul.f32 %v697, 1.442695
      %v704 = vpow.pop %v703
      %v705 = vmul.f32 %v698, 1.442695
      %v706 = vpow.pop %v705
      %v707 = vadd.f32 %v700, 1.0
      %v708 = vadd.f32 %v702, 1.0
      %v709 = vadd.f32 %v704, 1.0
      %v710 = vadd.f32 %v706, 1.0
      %v711 = vrcp.pop %v707
      %v712 = vmul.f32 1.0, %v711
      %v713 = vrcp.pop %v708
      %v714 = vmul.f32 1.0, %v713
      %v715 = vrcp.pop %v709
      %v716 = vmul.f32 1.0, %v715
      %v717 = vrcp.pop %v710
      %v718 = vmul.f32 1.0, %v717
      %719 = vst [vmem:[%s286] sm:$0xff] %v712
      %720 = vst [vmem:[%s286 + $0x8] sm:$0xff] %v714
      %721 = vst [vmem:[%s286 + $0x10] sm:$0xff] %v716
      %722 = vst [vmem:[%s286 + $0x18] sm:$0xff] %v718
      %v723 = vld [vmem:[%s5] sm:$0x1]
      %v725 = vlaneseq
      %v726 = vshrl.u32 %v725, 7
      %v727 = vsub.s32 0, %v726
      %v728 = vrot.slane %v723, %v727
      %v730 = vadd.f32 %v430, %v728
      %v731 = vadd.f32 %v436, %v728
      %v732 = vadd.f32 %v442, %v728
      %v733 = vadd.f32 %v448, %v728
      %734 = vst [vmem:[%s291] sm:$0xff] %v730
      %735 = vst [vmem:[%s291 + $0x8] sm:$0xff] %v731
      %736 = vst [vmem:[%s291 + $0x10] sm:$0xff] %v732
      %737 = vst [vmem:[%s291 + $0x18] sm:$0xff] %v733
      %p738 = scmp.lt.s32.totalorder %s19, 7
      %s739 = scalar_select %p738, %s19, 7
      %s740 = smul.addr %s739, 4
      %s741 = smul.addr %s740, 8
      %s742 = scalar_lea.vmem %s6, %s741
      %p743 = scmp.lt.s32.totalorder %s19, 7
      %s744 = scalar_select %p743, %s19, 7
      %s745 = smul.addr %s744, 4
      %s746 = smul.addr %s745, 8
      %s747 = scalar_lea.vmem %s7, %s746
      // Predicated region
      $region45: #{convgru_pallas.2} parent=43 // pred_check
        %p748 = pneg %p168
      $region46: #{convgru_pallas.2} parent=43 // pred_check_branch
        %750 = sbr.rel (%p748) target = $region48
      $region47: #{convgru_pallas.2} parent=43 // pred_region
        _
      $region48: #{convgru_pallas.2} parent=43 // pred_fallthru
        _
      // Predicated region
      $region49: #{convgru_pallas.2} parent=43 // pred_check
        %p751 = pneg %p194
      $region50: #{convgru_pallas.2} parent=43 // pred_check_branch
        %753 = sbr.rel (%p751) target = $region52
      $region51: #{convgru_pallas.2} parent=43 // pred_region
        _
      $region52: #{convgru_pallas.2} parent=43 // pred_fallthru
        _
    $region44: #{convgru_pallas.2} parent=5 // pred_fallthru
      _
    %p754 = scmp.le.s32.totalorder 2, %s14
    // Predicated region
    $region53: #{convgru_pallas.2} parent=5 // pred_check
      %p755 = pneg %p754
    $region54: #{convgru_pallas.2} parent=5 // pred_check_branch
      %757 = sbr.rel (%p755) target = $region56
    $region55: #{convgru_pallas.2} parent=5 // pred_region
      %s758 = ssub.s32 %s14, 2
      // Predicated region
      $region57: #{convgru_pallas.2} parent=55 // pred_check
        %p759 = pneg %p174
      $region58: #{convgru_pallas.2} parent=55 // pred_check_branch
        %761 = sbr.rel (%p759) target = $region60
      $region59: #{convgru_pallas.2} parent=55 // pred_region
        %p762 = scmp.lt.s32.totalorder %s20, 7
        %s763 = scalar_select %p762, %s20, 7
        %s764 = smul.addr %s763, 4
        %s765 = smul.addr %s764, 8
        %s766 = scalar_lea.vmem %s6, %s765
      $region60: #{convgru_pallas.2} parent=55 // pred_fallthru
        _
      // Predicated region
      $region61: #{convgru_pallas.2} parent=55 // pred_check
        %p767 = pneg %p200
      $region62: #{convgru_pallas.2} parent=55 // pred_check_branch
        %769 = sbr.rel (%p767) target = $region64
      $region63: #{convgru_pallas.2} parent=55 // pred_region
        %p770 = scmp.lt.s32.totalorder %s20, 7
        %s771 = scalar_select %p770, %s20, 7
        %s772 = smul.addr %s771, 4
        %s773 = smul.addr %s772, 8
        %s774 = scalar_lea.vmem %s7, %s773
      $region64: #{convgru_pallas.2} parent=55 // pred_fallthru
        _
    $region56: #{convgru_pallas.2} parent=5 // pred_fallthru
      _
  $region6: #{convgru_pallas.2} parent=0 // loop_footer
    %s18 = sadd.s32 1, %s14
  $region7: #{convgru_pallas.2} parent=0 // loop_footer_branch
    %13 = sbr.rel target = $region3
  $region8: #{convgru_pallas.2} parent=0 // loop_exit
    _

// kernel: convgru_pallas.3
$region0: #{convgru_pallas.3}
  #allocation0 [shape = 'u32[]', space=smem, size = 0x4, offset = 0x4, fixed_abs, tag = 'smem constant byte address 0x4 - core index']
  #allocation1 [shape = 'u32[144,128]{1,0:T(1,128)}', space=vmem, size = 0x12000, scoped, tag = 'internal scratch']
  %s0 = inlined_call_operand.vmem [shape: f32[8,32,128], index: 0, kind: input, shape index: {}]
  %s1 = inlined_call_operand.vmem [shape: f32[8,32,128], index: 1, kind: input, shape index: {}]
  %s2 = inlined_call_operand.vmem [shape: f32[32,128], index: 2, kind: input, shape index: {}]
  %s3 = inlined_call_operand.vmem [shape: f32[128,384], index: 3, kind: input, shape index: {}]
  %s4 = inlined_call_operand.vmem [shape: f32[8,32,128], index: 4, kind: output, shape index: {}]
  %s5 = sld [smem:[#allocation0]]
  $region26: #{convgru_pallas.3} parent=0
    _
  %s7 = ssub.s32 1, %s5
  %s8 = scalar_select 0, %s7, %s5
  // Predicated region
  $region2: #{convgru_pallas.3} parent=0 // pred_check
    _
  $region3: #{convgru_pallas.3} parent=0 // pred_check_branch
    %10 = sbr.rel (0) target = $region5
  $region4: #{convgru_pallas.3} parent=0 // pred_region
    _
  $region5: #{convgru_pallas.3} parent=0 // pred_fallthru
    _
  // Predicated region
  $region6: #{convgru_pallas.3} parent=0 // pred_check
    _
  $region7: #{convgru_pallas.3} parent=0 // pred_check_branch
    %12 = sbr.rel (0) target = $region9
  $region8: #{convgru_pallas.3} parent=0 // pred_region
    _
  $region9: #{convgru_pallas.3} parent=0 // pred_fallthru
    _
  // Predicated region
  $region10: #{convgru_pallas.3} parent=0 // pred_check
    _
  $region11: #{convgru_pallas.3} parent=0 // pred_check_branch
    %14 = sbr.rel (0) target = $region13
  $region12: #{convgru_pallas.3} parent=0 // pred_region
    _
  $region13: #{convgru_pallas.3} parent=0 // pred_fallthru
    _
  // Predicated region
  $region14: #{convgru_pallas.3} parent=0 // pred_check
    _
  $region15: #{convgru_pallas.3} parent=0 // pred_check_branch
    %16 = sbr.rel (0) target = $region17
  $region16: #{convgru_pallas.3} parent=0 // pred_region
    _
  $region17: #{convgru_pallas.3} parent=0 // pred_fallthru
    _
  %v17 = vlaneseq
  %v18 = vshrl.u32 %v17, 7
  %v19 = vadd.s32 %v18, 8
  %vm20 = vcmp.gt.s32.totalorder %v18, 0
  %vm21 = vcmp.gt.s32.totalorder %v19, 0
  %v22 = vsel %vm20, 1, 0
  %v23 = vsel %vm21, 1, 0
  %v24 = vcvt.s32.f32 %v22
  %v25 = vcvt.s32.f32 %v23
  %vm26 = vcmp.lt.s32.totalorder %v18, 15
  %vm27 = vcmp.lt.s32.totalorder %v19, 15
  %v28 = vsel %vm26, 1, 0
  %v29 = vsel %vm27, 1, 0
  %v30 = vcvt.s32.f32 %v28
  %v31 = vcvt.s32.f32 %v29
  %v32 = vld [vmem:[%s3] sm:$0xff]
  %v33 = vld [vmem:[%s3 + $0x8] sm:$0xff]
  %v34 = vld [vmem:[%s3 + $0x10] sm:$0xff]
  %v35 = vld [vmem:[%s3 + $0x18] sm:$0xff]
  %v36 = vld [vmem:[%s3 + $0x20] sm:$0xff]
  %v37 = vld [vmem:[%s3 + $0x28] sm:$0xff]
  %v38 = vld [vmem:[%s3 + $0x30] sm:$0xff]
  %v39 = vld [vmem:[%s3 + $0x38] sm:$0xff]
  %v40 = vld [vmem:[%s3 + $0x40] sm:$0xff]
  %v41 = vld [vmem:[%s3 + $0x48] sm:$0xff]
  %v42 = vld [vmem:[%s3 + $0x50] sm:$0xff]
  %v43 = vld [vmem:[%s3 + $0x58] sm:$0xff]
  %v44 = vld [vmem:[%s3 + $0x60] sm:$0xff]
  %v45 = vld [vmem:[%s3 + $0x68] sm:$0xff]
  %v46 = vld [vmem:[%s3 + $0x70] sm:$0xff]
  %v47 = vld [vmem:[%s3 + $0x78] sm:$0xff]
  %v48 = vld [vmem:[%s3 + $0x80] sm:$0xff]
  %v49 = vld [vmem:[%s3 + $0x88] sm:$0xff]
  %v50 = vld [vmem:[%s3 + $0x90] sm:$0xff]
  %v51 = vld [vmem:[%s3 + $0x98] sm:$0xff]
  %v52 = vld [vmem:[%s3 + $0xa0] sm:$0xff]
  %v53 = vld [vmem:[%s3 + $0xa8] sm:$0xff]
  %v54 = vld [vmem:[%s3 + $0xb0] sm:$0xff]
  %v55 = vld [vmem:[%s3 + $0xb8] sm:$0xff]
  %v56 = vld [vmem:[%s3 + $0xc0] sm:$0xff]
  %v57 = vld [vmem:[%s3 + $0xc8] sm:$0xff]
  %v58 = vld [vmem:[%s3 + $0xd0] sm:$0xff]
  %v59 = vld [vmem:[%s3 + $0xd8] sm:$0xff]
  %v60 = vld [vmem:[%s3 + $0xe0] sm:$0xff]
  %v61 = vld [vmem:[%s3 + $0xe8] sm:$0xff]
  %v62 = vld [vmem:[%s3 + $0xf0] sm:$0xff]
  %v63 = vld [vmem:[%s3 + $0xf8] sm:$0xff]
  %v64 = vld [vmem:[%s3 + $0x100] sm:$0xff]
  %v65 = vld [vmem:[%s3 + $0x108] sm:$0xff]
  %v66 = vld [vmem:[%s3 + $0x110] sm:$0xff]
  %v67 = vld [vmem:[%s3 + $0x118] sm:$0xff]
  %v68 = vld [vmem:[%s3 + $0x120] sm:$0xff]
  %v69 = vld [vmem:[%s3 + $0x128] sm:$0xff]
  %v70 = vld [vmem:[%s3 + $0x130] sm:$0xff]
  %v71 = vld [vmem:[%s3 + $0x138] sm:$0xff]
  %v72 = vld [vmem:[%s3 + $0x140] sm:$0xff]
  %v73 = vld [vmem:[%s3 + $0x148] sm:$0xff]
  %v74 = vld [vmem:[%s3 + $0x150] sm:$0xff]
  %v75 = vld [vmem:[%s3 + $0x158] sm:$0xff]
  %v76 = vld [vmem:[%s3 + $0x160] sm:$0xff]
  %v77 = vld [vmem:[%s3 + $0x168] sm:$0xff]
  %v78 = vld [vmem:[%s3 + $0x170] sm:$0xff]
  %v79 = vld [vmem:[%s3 + $0x178] sm:$0xff]
  %v80 = vld [vmem:[%s2] sm:$0xff]
  %v81 = vld [vmem:[%s2 + $0x8] sm:$0xff]
  %v82 = vld [vmem:[%s2 + $0x10] sm:$0xff]
  %v83 = vld [vmem:[%s2 + $0x18] sm:$0xff]
  %v84 = vld [vmem:[%s0] sm:$0xff]
  %v85 = vld [vmem:[%s0 + $0x8] sm:$0xff]
  %v86 = vld [vmem:[%s0 + $0x10] sm:$0xff]
  %v87 = vld [vmem:[%s0 + $0x18] sm:$0xff]
  %v88 = vmul.f32 %v84, %v80
  %v89 = vmul.f32 %v85, %v81
  %v90 = vmul.f32 %v86, %v82
  %v91 = vmul.f32 %v87, %v83
  %92 = vmatprep.subr.mxu0 %v33
  %93 = vmatpush1.msra.mxu0 %v32
  %94 = vmatprep.subr.mxu0 %v36
  %95 = vmatpush1.msra.mxu0 %v35
  %96 = vmatprep.subr.mxu0 %v39
  %97 = vmatpush1.msra.mxu0 %v38
  %98 = vmatprep.subr.mxu0 %v42
  %99 = vmatpush1.msra.mxu0 %v41
  %100 = vmatprep.subr.mxu0 %v45
  %101 = vmatpush1.msra.mxu0 %v44
  %102 = vmatprep.subr.mxu0 %v48
  %103 = vmatpush1.msra.mxu0 %v47
  %104 = vmatprep.subr.mxu0 %v51
  %105 = vmatpush1.msra.mxu0 %v50
  %106 = vmatprep.subr.mxu0 %v54
  %107 = vmatpush1.msra.mxu0 %v53
  %108 = vmatprep.subr.mxu0 %v57
  %109 = vmatpush1.msra.mxu0 %v56
  %110 = vmatprep.subr.mxu0 %v60
  %111 = vmatpush1.msra.mxu0 %v59
  %112 = vmatprep.subr.mxu0 %v63
  %113 = vmatpush1.msra.mxu0 %v62
  %114 = vmatprep.subr.mxu0 %v66
  %115 = vmatpush1.msra.mxu0 %v65
  %116 = vmatprep.subr.mxu0 %v69
  %117 = vmatpush1.msra.mxu0 %v68
  %118 = vmatprep.subr.mxu0 %v72
  %119 = vmatpush1.msra.mxu0 %v71
  %120 = vmatprep.subr.mxu0 %v75
  %121 = vmatpush1.msra.mxu0 %v74
  %122 = vmatprep.subr.mxu0 %v78
  %123 = vmatpush1.msra.mxu0 %v77
  %124 = vmatprep.subr.mxu0 0.0
  %125 = vmatpush1.msra.mxu0 0.0
  %126 = vmatprep.subr.mxu0 0.0
  %127 = vmatpush1.msra.mxu0 0.0
  %128 = vmatprep.subr.mxu0 0.0
  %129 = vmatpush1.msra.mxu0 0.0
  %130 = vmatprep.subr.mxu0 0.0
  %131 = vmatpush1.msra.mxu0 0.0
  %132 = vmatprep.subr.mxu0 0.0
  %133 = vmatpush1.msra.mxu0 0.0
  %134 = vmatprep.subr.mxu0 0.0
  %135 = vmatpush1.msra.mxu0 0.0
  %136 = vmatprep.subr.mxu0 0.0
  %137 = vmatpush1.msra.mxu0 0.0
  %138 = vmatprep.subr.mxu0 0.0
  %139 = vmatpush1.msra.mxu0 0.0
  %140 = vmatprep.subr.mxu0 0.0
  %141 = vmatpush1.msra.mxu0 0.0
  %142 = vmatprep.subr.mxu0 0.0
  %143 = vmatpush1.msra.mxu0 0.0
  %144 = vmatprep.subr.mxu0 0.0
  %145 = vmatpush1.msra.mxu0 0.0
  %146 = vmatprep.subr.mxu0 0.0
  %147 = vmatpush1.msra.mxu0 0.0
  %148 = vmatprep.subr.mxu0 0.0
  %149 = vmatpush1.msra.mxu0 0.0
  %150 = vmatprep.subr.mxu0 0.0
  %151 = vmatpush1.msra.mxu0 0.0
  %152 = vmatprep.subr.mxu0 0.0
  %153 = vmatpush1.msra.mxu0 0.0
  %154 = vmatprep.subr.mxu0 0.0
  %155 = vmatpush1.msra.mxu0 0.0
  %156 = vmatprep.mubr.f32.mxu0 0.0
  %157 = vmatmul.mubr.f32.gmra.mrb[0].mxu0 %v88
  %v158 = vpop.f32.mrb[0].mxu0
  %v159 = vadd.f32 0.0, %v158
  %v160 = vpop.f32.mrb[0].mxu0
  %v161 = vadd.f32 0.0, %v160
  %162 = vmatprep.mubr.f32.mxu0 0.0
  %163 = vmatmul.mubr.f32.gmra.mrb[0].mxu0 %v89
  %v164 = vpop.f32.mrb[0].mxu0
  %v165 = vadd.f32 0.0, %v164
  %v166 = vpop.f32.mrb[0].mxu0
  %v167 = vadd.f32 0.0, %v166
  %168 = vmatprep.mubr.f32.mxu0 0.0
  %169 = vmatmul.mubr.f32.gmra.mrb[0].mxu0 %v90
  %v170 = vpop.f32.mrb[0].mxu0
  %v171 = vadd.f32 0.0, %v170
  %v172 = vpop.f32.mrb[0].mxu0
  %v173 = vadd.f32 0.0, %v172
  %174 = vmatprep.mubr.f32.mxu0 0.0
  %175 = vmatmul.mubr.f32.gmra.mrb[0].mxu0 %v91
  %v176 = vpop.f32.mrb[0].mxu0
  %v177 = vadd.f32 0.0, %v176
  %v178 = vpop.f32.mrb[0].mxu0
  %v179 = vadd.f32 0.0, %v178
  %180 = vdwg.mxu0
  %181 = vmatprep.subr.mxu0 0.0
  %182 = vmatpush1.msra.mxu0 %v34
  %183 = vmatprep.subr.mxu0 0.0
  %184 = vmatpush1.msra.mxu0 %v37
  %185 = vmatprep.subr.mxu0 0.0
  %186 = vmatpush1.msra.mxu0 %v40
  %187 = vmatprep.subr.mxu0 0.0
  %188 = vmatpush1.msra.mxu0 %v43
  %189 = vmatprep.subr.mxu0 0.0
  %190 = vmatpush1.msra.mxu0 %v46
  %191 = vmatprep.subr.mxu0 0.0
  %192 = vmatpush1.msra.mxu0 %v49
  %193 = vmatprep.subr.mxu0 0.0
  %194 = vmatpush1.msra.mxu0 %v52
  %195 = vmatprep.subr.mxu0 0.0
  %196 = vmatpush1.msra.mxu0 %v55
  %197 = vmatprep.subr.mxu0 0.0
  %198 = vmatpush1.msra.mxu0 %v58
  %199 = vmatprep.subr.mxu0 0.0
  %200 = vmatpush1.msra.mxu0 %v61
  %201 = vmatprep.subr.mxu0 0.0
  %202 = vmatpush1.msra.mxu0 %v64
  %203 = vmatprep.subr.mxu0 0.0
  %204 = vmatpush1.msra.mxu0 %v67
  %205 = vmatprep.subr.mxu0 0.0
  %206 = vmatpush1.msra.mxu0 %v70
  %207 = vmatprep.subr.mxu0 0.0
  %208 = vmatpush1.msra.mxu0 %v73
  %209 = vmatprep.subr.mxu0 0.0
  %210 = vmatpush1.msra.mxu0 %v76
  %211 = vmatprep.subr.mxu0 0.0
  %212 = vmatpush1.msra.mxu0 %v79
  %213 = vmatprep.subr.mxu0 0.0
  %214 = vmatpush1.msra.mxu0 0.0
  %215 = vmatprep.subr.mxu0 0.0
  %216 = vmatpush1.msra.mxu0 0.0
  %217 = vmatprep.subr.mxu0 0.0
  %218 = vmatpush1.msra.mxu0 0.0
  %219 = vmatprep.subr.mxu0 0.0
  %220 = vmatpush1.msra.mxu0 0.0
  %221 = vmatprep.subr.mxu0 0.0
  %222 = vmatpush1.msra.mxu0 0.0
  %223 = vmatprep.subr.mxu0 0.0
  %224 = vmatpush1.msra.mxu0 0.0
  %225 = vmatprep.subr.mxu0 0.0
  %226 = vmatpush1.msra.mxu0 0.0
  %227 = vmatprep.subr.mxu0 0.0
  %228 = vmatpush1.msra.mxu0 0.0
  %229 = vmatprep.subr.mxu0 0.0
  %230 = vmatpush1.msra.mxu0 0.0
  %231 = vmatprep.subr.mxu0 0.0
  %232 = vmatpush1.msra.mxu0 0.0
  %233 = vmatprep.subr.mxu0 0.0
  %234 = vmatpush1.msra.mxu0 0.0
  %235 = vmatprep.subr.mxu0 0.0
  %236 = vmatpush1.msra.mxu0 0.0
  %237 = vmatprep.subr.mxu0 0.0
  %238 = vmatpush1.msra.mxu0 0.0
  %239 = vmatprep.subr.mxu0 0.0
  %240 = vmatpush1.msra.mxu0 0.0
  %241 = vmatprep.subr.mxu0 0.0
  %242 = vmatpush1.msra.mxu0 0.0
  %243 = vmatprep.subr.mxu0 0.0
  %244 = vmatpush1.msra.mxu0 0.0
  %245 = vmatprep.mubr.f32.mxu0 0.0
  %246 = vmatmul.mubr.f32.gmra.mrb[0].mxu0 %v88
  %v247 = vpop.f32.mrb[0].mxu0
  %v248 = vadd.f32 0.0, %v247
  %v249 = vpop.f32.mrb[0].mxu0
  %250 = vmatprep.mubr.f32.mxu0 0.0
  %251 = vmatmul.mubr.f32.gmra.mrb[0].mxu0 %v89
  %v252 = vpop.f32.mrb[0].mxu0
  %v253 = vadd.f32 0.0, %v252
  %v254 = vpop.f32.mrb[0].mxu0
  %255 = vmatprep.mubr.f32.mxu0 0.0
  %256 = vmatmul.mubr.f32.gmra.mrb[0].mxu0 %v90
  %v257 = vpop.f32.mrb[0].mxu0
  %v258 = vadd.f32 0.0, %v257
  %v259 = vpop.f32.mrb[0].mxu0
  %260 = vmatprep.mubr.f32.mxu0 0.0
  %261 = vmatmul.mubr.f32.gmra.mrb[0].mxu0 %v91
  %v262 = vpop.f32.mrb[0].mxu0
  %v263 = vadd.f32 0.0, %v262
  %v264 = vpop.f32.mrb[0].mxu0
  %265 = vdwg.mxu0
  %v266 = vrot.slane %v159, 7
  %v267 = vrot.slane %v165, 7
  %v268 = vrot.slane %v171, 7
  %v269 = vrot.slane %v177, 7
  %vm270 = vcmp.lt.s32.totalorder %v18, 1
  %v271 = vsel %vm270, %v268, %v269
  %v272 = vsel %vm270, %v267, %v268
  %v273 = vsel %vm270, %v266, %v267
  %v274 = vsel %vm270, %v269, %v266
  %v275 = vmul.f32 %v24, %v274
  %v276 = vmul.f32 %v25, %v273
  %v277 = vmul.f32 %v24, %v272
  %v278 = vmul.f32 %v25, %v271
  %v279 = vadd.f32 %v275, %v161
  %v280 = vadd.f32 %v276, %v167
  %v281 = vadd.f32 %v277, %v173
  %v282 = vadd.f32 %v278, %v179
  %v283 = vrot.slane %v248, 1
  %v284 = vrot.slane %v253, 1
  %v285 = vrot.slane %v258, 1
  %v286 = vrot.slane %v263, 1
  %vm287 = vcmp.lt.s32.totalorder %v18, 7
  %v288 = vsel %vm287, %v285, %v286
  %v289 = vsel %vm287, %v284, %v285
  %v290 = vsel %vm287, %v283, %v284
  %v291 = vsel %vm287, %v286, %v283
  %v292 = vmul.f32 %v30, %v290
  %v293 = vmul.f32 %v31, %v289
  %v294 = vmul.f32 %v30, %v288
  %v295 = vmul.f32 %v31, %v291
  %v296 = vadd.f32 %v279, %v292
  %v297 = vadd.f32 %v280, %v293
  %v298 = vadd.f32 %v281, %v294
  %v299 = vadd.f32 %v282, %v295
  %v300 = vld [vmem:[%s1] sm:$0xff]
  %v301 = vld [vmem:[%s1 + $0x8] sm:$0xff]
  %v302 = vld [vmem:[%s1 + $0x10] sm:$0xff]
  %v303 = vld [vmem:[%s1 + $0x18] sm:$0xff]
  %v304 = vadd.f32 %v300, %v296
  %v305 = vadd.f32 %v301, %v297
  %v306 = vadd.f32 %v302, %v298
  %v307 = vadd.f32 %v303, %v299
  %v308 = vtanh.pop %v304
  %v309 = vtanh.pop %v305
  %v310 = vtanh.pop %v306
  %v311 = vtanh.pop %v307
  %v312 = vsub.f32 %v308, %v80
  %v313 = vsub.f32 %v309, %v81
  %v314 = vsub.f32 %v310, %v82
  %v315 = vsub.f32 %v311, %v83
  %v316 = vmul.f32 %v84, %v312
  %v317 = vmul.f32 %v85, %v313
  %v318 = vmul.f32 %v86, %v314
  %v319 = vmul.f32 %v87, %v315
  %v320 = vadd.f32 %v80, %v316
  %v321 = vadd.f32 %v81, %v317
  %v322 = vadd.f32 %v82, %v318
  %v323 = vadd.f32 %v83, %v319
  %324 = vst [vmem:[%s4] sm:$0xff] %v320
  %325 = vst [vmem:[%s4 + $0x8] sm:$0xff] %v321
  %326 = vst [vmem:[%s4 + $0x10] sm:$0xff] %v322
  %327 = vst [vmem:[%s4 + $0x18] sm:$0xff] %v323
  %s328 = scalar_lea.vmem %s0, 32
  %v329 = vld [vmem:[%s328] sm:$0xff]
  %v330 = vld [vmem:[%s328 + $0x8] sm:$0xff]
  %v331 = vld [vmem:[%s328 + $0x10] sm:$0xff]
  %v332 = vld [vmem:[%s328 + $0x18] sm:$0xff]
  %v333 = vmul.f32 %v329, %v320
  %v334 = vmul.f32 %v330, %v321
  %v335 = vmul.f32 %v331, %v322
  %v336 = vmul.f32 %v332, %v323
  %337 = vmatprep.subr.mxu0 %v33
  %338 = vmatpush1.msra.mxu0 %v32
  %339 = vmatprep.subr.mxu0 %v36
  %340 = vmatpush1.msra.mxu0 %v35
  %341 = vmatprep.subr.mxu0 %v39
  %342 = vmatpush1.msra.mxu0 %v38
  %343 = vmatprep.subr.mxu0 %v42
  %344 = vmatpush1.msra.mxu0 %v41
  %345 = vmatprep.subr.mxu0 %v45
  %346 = vmatpush1.msra.mxu0 %v44
  %347 = vmatprep.subr.mxu0 %v48
  %348 = vmatpush1.msra.mxu0 %v47
  %349 = vmatprep.subr.mxu0 %v51
  %350 = vmatpush1.msra.mxu0 %v50
  %351 = vmatprep.subr.mxu0 %v54
  %352 = vmatpush1.msra.mxu0 %v53
  %353 = vmatprep.subr.mxu0 %v57
  %354 = vmatpush1.msra.mxu0 %v56
  %355 = vmatprep.subr.mxu0 %v60
  %356 = vmatpush1.msra.mxu0 %v59
  %357 = vmatprep.subr.mxu0 %v63
  %358 = vmatpush1.msra.mxu0 %v62
  %359 = vmatprep.subr.mxu0 %v66
  %360 = vmatpush1.msra.mxu0 %v65
  %361 = vmatprep.subr.mxu0 %v69
  %362 = vmatpush1.msra.mxu0 %v68
  %363 = vmatprep.subr.mxu0 %v72
  %364 = vmatpush1.msra.mxu0 %v71
  %365 = vmatprep.subr.mxu0 %v75
  %366 = vmatpush1.msra.mxu0 %v74
  %367 = vmatprep.subr.mxu0 %v78
  %368 = vmatpush1.msra.mxu0 %v77
  %369 = vmatprep.subr.mxu0 0.0
  %370 = vmatpush1.msra.mxu0 0.0
  %371 = vmatprep.subr.mxu0 0.0
  %372 = vmatpush1.msra.mxu0 0.0
  %373 = vmatprep.subr.mxu0 0.0
  %374 = vmatpush1.msra.mxu0 0.0
  %375 = vmatprep.subr.mxu0 0.0
  %376 = vmatpush1.msra.mxu0 0.0
  %377 = vmatprep.subr.mxu0 0.0
  %378 = vmatpush1.msra.mxu0 0.0
  %379 = vmatprep.subr.mxu0 0.0
  %380 = vmatpush1.msra.mxu0 0.0
  %381 = vmatprep.subr.mxu0 0.0
  %382 = vmatpush1.msra.mxu0 0.0
  %383 = vmatprep.subr.mxu0 0.0
  %384 = vmatpush1.msra.mxu0 0.0
  %385 = vmatprep.subr.mxu0 0.0
  %386 = vmatpush1.msra.mxu0 0.0
  %387 = vmatprep.subr.mxu0 0.0
  %388 = vmatpush1.msra.mxu0 0.0
  %389 = vmatprep.subr.mxu0 0.0
  %390 = vmatpush1.msra.mxu0 0.0
  %391 = vmatprep.subr.mxu0 0.0
  %392 = vmatpush1.msra.mxu0 0.0
  %393 = vmatprep.subr.mxu0 0.0
  %394 = vmatpush1.msra.mxu0 0.0
  %395 = vmatprep.subr.mxu0 0.0
  %396 = vmatpush1.msra.mxu0 0.0
  %397 = vmatprep.subr.mxu0 0.0
  %398 = vmatpush1.msra.mxu0 0.0
  %399 = vmatprep.subr.mxu0 0.0
  %400 = vmatpush1.msra.mxu0 0.0
  %401 = vmatprep.mubr.f32.mxu0 0.0
  %402 = vmatmul.mubr.f32.gmra.mrb[0].mxu0 %v333
  %v403 = vpop.f32.mrb[0].mxu0
  %v404 = vadd.f32 0.0, %v403
  %v405 = vpop.f32.mrb[0].mxu0
  %v406 = vadd.f32 0.0, %v405
  %407 = vmatprep.mubr.f32.mxu0 0.0
  %408 = vmatmul.mubr.f32.gmra.mrb[0].mxu0 %v334
  %v409 = vpop.f32.mrb[0].mxu0
  %v410 = vadd.f32 0.0, %v409
  %v411 = vpop.f32.mrb[0].mxu0
  %v412 = vadd.f32 0.0, %v411
  %413 = vmatprep.mubr.f32.mxu0 0.0
  %414 = vmatmul.mubr.f32.gmra.mrb[0].mxu0 %v335
  %v415 = vpop.f32.mrb[0].mxu0
  %v416 = vadd.f32 0.0, %v415
  %v417 = vpop.f32.mrb[0].mxu0
  %v418 = vadd.f32 0.0, %v417
  %419 = vmatprep.mubr.f32.mxu0 0.0
  %420 = vmatmul.mubr.f32.gmra.mrb[0].mxu0 %v336
  %v421 = vpop.f32.mrb[0].mxu0
  %v422 = vadd.f32 0.0, %v421
  %v423 = vpop.f32.mrb[0].mxu0
  %v424 = vadd.f32 0.0, %v423
  %425 = vdwg.mxu0
  %426 = vmatprep.subr.mxu0 0.0
  %427 = vmatpush1.msra.mxu0 %v34
  %428 = vmatprep.subr.mxu0 0.0
  %429 = vmatpush1.msra.mxu0 %v37
  %430 = vmatprep.subr.mxu0 0.0
  %431 = vmatpush1.msra.mxu0 %v40
  %432 = vmatprep.subr.mxu0 0.0
  %433 = vmatpush1.msra.mxu0 %v43
  %434 = vmatprep.subr.mxu0 0.0
  %435 = vmatpush1.msra.mxu0 %v46
  %436 = vmatprep.subr.mxu0 0.0
  %437 = vmatpush1.msra.mxu0 %v49
  %438 = vmatprep.subr.mxu0 0.0
  %439 = vmatpush1.msra.mxu0 %v52
  %440 = vmatprep.subr.mxu0 0.0
  %441 = vmatpush1.msra.mxu0 %v55
  %442 = vmatprep.subr.mxu0 0.0
  %443 = vmatpush1.msra.mxu0 %v58
  %444 = vmatprep.subr.mxu0 0.0
  %445 = vmatpush1.msra.mxu0 %v61
  %446 = vmatprep.subr.mxu0 0.0
  %447 = vmatpush1.msra.mxu0 %v64
  %448 = vmatprep.subr.mxu0 0.0
  %449 = vmatpush1.msra.mxu0 %v67
  %450 = vmatprep.subr.mxu0 0.0
  %451 = vmatpush1.msra.mxu0 %v70
  %452 = vmatprep.subr.mxu0 0.0
  %453 = vmatpush1.msra.mxu0 %v73
  %454 = vmatprep.subr.mxu0 0.0
  %455 = vmatpush1.msra.mxu0 %v76
  %456 = vmatprep.subr.mxu0 0.0
  %457 = vmatpush1.msra.mxu0 %v79
  %458 = vmatprep.subr.mxu0 0.0
  %459 = vmatpush1.msra.mxu0 0.0
  %460 = vmatprep.subr.mxu0 0.0
  %461 = vmatpush1.msra.mxu0 0.0
  %462 = vmatprep.subr.mxu0 0.0
  %463 = vmatpush1.msra.mxu0 0.0
  %464 = vmatprep.subr.mxu0 0.0
  %465 = vmatpush1.msra.mxu0 0.0
  %466 = vmatprep.subr.mxu0 0.0
  %467 = vmatpush1.msra.mxu0 0.0
  %468 = vmatprep.subr.mxu0 0.0
  %469 = vmatpush1.msra.mxu0 0.0
  %470 = vmatprep.subr.mxu0 0.0
  %471 = vmatpush1.msra.mxu0 0.0
  %472 = vmatprep.subr.mxu0 0.0
  %473 = vmatpush1.msra.mxu0 0.0
  %474 = vmatprep.subr.mxu0 0.0
  %475 = vmatpush1.msra.mxu0 0.0
  %476 = vmatprep.subr.mxu0 0.0
  %477 = vmatpush1.msra.mxu0 0.0
  %478 = vmatprep.subr.mxu0 0.0
  %479 = vmatpush1.msra.mxu0 0.0
  %480 = vmatprep.subr.mxu0 0.0
  %481 = vmatpush1.msra.mxu0 0.0
  %482 = vmatprep.subr.mxu0 0.0
  %483 = vmatpush1.msra.mxu0 0.0
  %484 = vmatprep.subr.mxu0 0.0
  %485 = vmatpush1.msra.mxu0 0.0
  %486 = vmatprep.subr.mxu0 0.0
  %487 = vmatpush1.msra.mxu0 0.0
  %488 = vmatprep.subr.mxu0 0.0
  %489 = vmatpush1.msra.mxu0 0.0
  %490 = vmatprep.mubr.f32.mxu0 0.0
  %491 = vmatmul.mubr.f32.gmra.mrb[0].mxu0 %v333
  %v492 = vpop.f32.mrb[0].mxu0
  %v493 = vadd.f32 0.0, %v492
  %v494 = vpop.f32.mrb[0].mxu0
  %495 = vmatprep.mubr.f32.mxu0 0.0
  %496 = vmatmul.mubr.f32.gmra.mrb[0].mxu0 %v334
  %v497 = vpop.f32.mrb[0].mxu0
  %v498 = vadd.f32 0.0, %v497
  %v499 = vpop.f32.mrb[0].mxu0
  %500 = vmatprep.mubr.f32.mxu0 0.0
  %501 = vmatmul.mubr.f32.gmra.mrb[0].mxu0 %v335
  %v502 = vpop.f32.mrb[0].mxu0
  %v503 = vadd.f32 0.0, %v502
  %v504 = vpop.f32.mrb[0].mxu0
  %505 = vmatprep.mubr.f32.mxu0 0.0
  %506 = vmatmul.mubr.f32.gmra.mrb[0].mxu0 %v336
  %v507 = vpop.f32.mrb[0].mxu0
  %v508 = vadd.f32 0.0, %v507
  %v509 = vpop.f32.mrb[0].mxu0
  %510 = vdwg.mxu0
  %v511 = vrot.slane %v404, 7
  %v512 = vrot.slane %v410, 7
  %v513 = vrot.slane %v416, 7
  %v514 = vrot.slane %v422, 7
  %v515 = vsel %vm270, %v513, %v514
  %v516 = vsel %vm270, %v512, %v513
  %v517 = vsel %vm270, %v511, %v512
  %v518 = vsel %vm270, %v514, %v511
  %v519 = vmul.f32 %v24, %v518
  %v520 = vmul.f32 %v25, %v517
  %v521 = vmul.f32 %v24, %v516
  %v522 = vmul.f32 %v25, %v515
  %v523 = vadd.f32 %v519, %v406
  %v524 = vadd.f32 %v520, %v412
  %v525 = vadd.f32 %v521, %v418
  %v526 = vadd.f32 %v522, %v424
  %v527 = vrot.slane %v493, 1
  %v528 = vrot.slane %v498, 1
  %v529 = vrot.slane %v503, 1
  %v530 = vrot.slane %v508, 1
  %v531 = vsel %vm287, %v529, %v530
  %v532 = vsel %vm287, %v528, %v529
  %v533 = vsel %vm287, %v527, %v528
  %v534 = vsel %vm287, %v530, %v527
  %v535 = vmul.f32 %v30, %v533
  %v536 = vmul.f32 %v31, %v532
  %v537 = vmul.f32 %v30, %v531
  %v538 = vmul.f32 %v31, %v534
  %v539 = vadd.f32 %v523, %v535
  %v540 = vadd.f32 %v524, %v536
  %v541 = vadd.f32 %v525, %v537
  %v542 = vadd.f32 %v526, %v538
  %s543 = scalar_lea.vmem %s1, 32
  %v544 = vld [vmem:[%s543] sm:$0xff]
  %v545 = vld [vmem:[%s543 + $0x8] sm:$0xff]
  %v546 = vld [vmem:[%s543 + $0x10] sm:$0xff]
  %v547 = vld [vmem:[%s543 + $0x18] sm:$0xff]
  %v548 = vadd.f32 %v544, %v539
  %v549 = vadd.f32 %v545, %v540
  %v550 = vadd.f32 %v546, %v541
  %v551 = vadd.f32 %v547, %v542
  %v552 = vtanh.pop %v548
  %v553 = vtanh.pop %v549
  %v554 = vtanh.pop %v550
  %v555 = vtanh.pop %v551
  %v556 = vsub.f32 %v552, %v320
  %v557 = vsub.f32 %v553, %v321
  %v558 = vsub.f32 %v554, %v322
  %v559 = vsub.f32 %v555, %v323
  %v560 = vmul.f32 %v329, %v556
  %v561 = vmul.f32 %v330, %v557
  %v562 = vmul.f32 %v331, %v558
  %v563 = vmul.f32 %v332, %v559
  %v564 = vadd.f32 %v320, %v560
  %v565 = vadd.f32 %v321, %v561
  %v566 = vadd.f32 %v322, %v562
  %v567 = vadd.f32 %v323, %v563
  %s568 = scalar_lea.vmem %s4, 32
  %569 = vst [vmem:[%s568] sm:$0xff] %v564
  %570 = vst [vmem:[%s568 + $0x8] sm:$0xff] %v565
  %571 = vst [vmem:[%s568 + $0x10] sm:$0xff] %v566
  %572 = vst [vmem:[%s568 + $0x18] sm:$0xff] %v567
  %s573 = scalar_lea.vmem %s0, 64
  %v574 = vld [vmem:[%s573] sm:$0xff]
  %v575 = vld [vmem:[%s573 + $0x8] sm:$0xff]
  %v576 = vld [vmem:[%s573 + $0x10] sm:$0xff]
  %v577 = vld [vmem:[%s573 + $0x18] sm:$0xff]
  %v578 = vmul.f32 %v574, %v564
  %v579 = vmul.f32 %v575, %v565
  %v580 = vmul.f32 %v576, %v566
  %v581 = vmul.f32 %v577, %v567
  %582 = vmatprep.subr.mxu0 %v33
  %583 = vmatpush1.msra.mxu0 %v32
  %584 = vmatprep.subr.mxu0 %v36
  %585 = vmatpush1.msra.mxu0 %v35
  %586 = vmatprep.subr.mxu0 %v39
  %587 = vmatpush1.msra.mxu0 %v38
  %588 = vmatprep.subr.mxu0 %v42
  %589 = vmatpush1.msra.mxu0 %v41
  %590 = vmatprep.subr.mxu0 %v45
  %591 = vmatpush1.msra.mxu0 %v44
  %592 = vmatprep.subr.mxu0 %v48
  %593 = vmatpush1.msra.mxu0 %v47
  %594 = vmatprep.subr.mxu0 %v51
  %595 = vmatpush1.msra.mxu0 %v50
  %596 = vmatprep.subr.mxu0 %v54
  %597 = vmatpush1.msra.mxu0 %v53
  %598 = vmatprep.subr.mxu0 %v57
  %599 = vmatpush1.msra.mxu0 %v56
  %600 = vmatprep.subr.mxu0 %v60
  %601 = vmatpush1.msra.mxu0 %v59
  %602 = vmatprep.subr.mxu0 %v63
  %603 = vmatpush1.msra.mxu0 %v62
  %604 = vmatprep.subr.mxu0 %v66
  %605 = vmatpush1.msra.mxu0 %v65
  %606 = vmatprep.subr.mxu0 %v69
  %607 = vmatpush1.msra.mxu0 %v68
  %608 = vmatprep.subr.mxu0 %v72
  %609 = vmatpush1.msra.mxu0 %v71
  %610 = vmatprep.subr.mxu0 %v75
  %611 = vmatpush1.msra.mxu0 %v74
  %612 = vmatprep.subr.mxu0 %v78
  %613 = vmatpush1.msra.mxu0 %v77
  %614 = vmatprep.subr.mxu0 0.0
  %615 = vmatpush1.msra.mxu0 0.0
  %616 = vmatprep.subr.mxu0 0.0
  %617 = vmatpush1.msra.mxu0 0.0
  %618 = vmatprep.subr.mxu0 0.0
  %619 = vmatpush1.msra.mxu0 0.0
  %620 = vmatprep.subr.mxu0 0.0
  %621 = vmatpush1.msra.mxu0 0.0
  %622 = vmatprep.subr.mxu0 0.0
  %623 = vmatpush1.msra.mxu0 0.0
  %624 = vmatprep.subr.mxu0 0.0
  %625 = vmatpush1.msra.mxu0 0.0
  %626 = vmatprep.subr.mxu0 0.0
  %627 = vmatpush1.msra.mxu0 0.0
  %628 = vmatprep.subr.mxu0 0.0
  %629 = vmatpush1.msra.mxu0 0.0
  %630 = vmatprep.subr.mxu0 0.0
  %631 = vmatpush1.msra.mxu0 0.0
  %632 = vmatprep.subr.mxu0 0.0
  %633 = vmatpush1.msra.mxu0 0.0
  %634 = vmatprep.subr.mxu0 0.0
  %635 = vmatpush1.msra.mxu0 0.0
  %636 = vmatprep.subr.mxu0 0.0
  %637 = vmatpush1.msra.mxu0 0.0
  %638 = vmatprep.subr.mxu0 0.0
  %639 = vmatpush1.msra.mxu0 0.0
  %640 = vmatprep.subr.mxu0 0.0
  %641 = vmatpush1.msra.mxu0 0.0
  %642 = vmatprep.subr.mxu0 0.0
  %643 = vmatpush1.msra.mxu0 0.0
  %644 = vmatprep.subr.mxu0 0.0
  %645 = vmatpush1.msra.mxu0 0.0
  %646 = vmatprep.mubr.f32.mxu0 0.0
  %647 = vmatmul.mubr.f32.gmra.mrb[0].mxu0 %v578
  %v648 = vpop.f32.mrb[0].mxu0
  %v649 = vadd.f32 0.0, %v648
  %v650 = vpop.f32.mrb[0].mxu0
  %v651 = vadd.f32 0.0, %v650
  %652 = vmatprep.mubr.f32.mxu0 0.0
  %653 = vmatmul.mubr.f32.gmra.mrb[0].mxu0 %v579
  %v654 = vpop.f32.mrb[0].mxu0
  %v655 = vadd.f32 0.0, %v654
  %v656 = vpop.f32.mrb[0].mxu0
  %v657 = vadd.f32 0.0, %v656
  %658 = vmatprep.mubr.f32.mxu0 0.0
  %659 = vmatmul.mubr.f32.gmra.mrb[0].mxu0 %v580
  %v660 = vpop.f32.mrb[0].mxu0
  %v661 = vadd.f32 0.0, %v660
  %v662 = vpop.f32.mrb[0].mxu0
  %v663 = vadd.f32 0.0, %v662
  %664 = vmatprep.mubr.f32.mxu0 0.0
  %665 = vmatmul.mubr.f32.gmra.mrb[0].mxu0 %v581
  %v666 = vpop.f32.mrb[0].mxu0
  %v667 = vadd.f32 0.0, %v666
  %v668 = vpop.f32.mrb[0].mxu0
  %v669 = vadd.f32 0.0, %v668
  %670 = vdwg.mxu0
  %671 = vmatprep.subr.mxu0 0.0
  %672 = vmatpush1.msra.mxu0 %v34
  %673 = vmatprep.subr.mxu0 0.0
  %674 = vmatpush1.msra.mxu0 %v37
  %675 = vmatprep.subr.mxu0 0.0
  %676 = vmatpush1.msra.mxu0 %v40
  %677 = vmatprep.subr.mxu0 0.0
  %678 = vmatpush1.msra.mxu0 %v43
  %679 = vmatprep.subr.mxu0 0.0
  %680 = vmatpush1.msra.mxu0 %v46
  %681 = vmatprep.subr.mxu0 0.0
  %682 = vmatpush1.msra.mxu0 %v49
  %683 = vmatprep.subr.mxu0 0.0
  %684 = vmatpush1.msra.mxu0 %v52
  %685 = vmatprep.subr.mxu0 0.0
  %686 = vmatpush1.msra.mxu0 %v55
  %687 = vmatprep.subr.mxu0 0.0
  %688 = vmatpush1.msra.mxu0 %v58
  %689 = vmatprep.subr.mxu0 0.0
  %690 = vmatpush1.msra.mxu0 %v61
  %691 = vmatprep.subr.mxu0 0.0
  %692 = vmatpush1.msra.mxu0 %v64
  %693 = vmatprep.subr.mxu0 0.0
  %694 = vmatpush1.msra.mxu0 %v67
  %695 = vmatprep.subr.mxu0 0.0
  %696 = vmatpush1.msra.mxu0 %v70
  %697 = vmatprep.subr.mxu0 0.0
  %698 = vmatpush1.msra.mxu0 %v73
  %699 = vmatprep.subr.mxu0 0.0
  %700 = vmatpush1.msra.mxu0 %v76
  %701 = vmatprep.subr.mxu0 0.0
  %702 = vmatpush1.msra.mxu0 %v79
  %703 = vmatprep.subr.mxu0 0.0
  %704 = vmatpush1.msra.mxu0 0.0
  %705 = vmatprep.subr.mxu0 0.0
  %706 = vmatpush1.msra.mxu0 0.0
  %707 = vmatprep.subr.mxu0 0.0
  %708 = vmatpush1.msra.mxu0 0.0
  %709 = vmatprep.subr.mxu0 0.0
  %710 = vmatpush1.msra.mxu0 0.0
  %711 = vmatprep.subr.mxu0 0.0
  %712 = vmatpush1.msra.mxu0 0.0
  %713 = vmatprep.subr.mxu0 0.0
  %714 = vmatpush1.msra.mxu0 0.0
  %715 = vmatprep.subr.mxu0 0.0
  %716 = vmatpush1.msra.mxu0 0.0
  %717 = vmatprep.subr.mxu0 0.0
  %718 = vmatpush1.msra.mxu0 0.0
  %719 = vmatprep.subr.mxu0 0.0
  %720 = vmatpush1.msra.mxu0 0.0
  %721 = vmatprep.subr.mxu0 0.0
  %722 = vmatpush1.msra.mxu0 0.0
  %723 = vmatprep.subr.mxu0 0.0
  %724 = vmatpush1.msra.mxu0 0.0
  %725 = vmatprep.subr.mxu0 0.0
  %726 = vmatpush1.msra.mxu0 0.0
  %727 = vmatprep.subr.mxu0 0.0
  %728 = vmatpush1.msra.mxu0 0.0
  %729 = vmatprep.subr.mxu0 0.0
  %730 = vmatpush1.msra.mxu0 0.0
  %731 = vmatprep.subr.mxu0 0.0
  %732 = vmatpush1.msra.mxu0 0.0
  %733 = vmatprep.subr.mxu0 0.0
  %734 = vmatpush1.msra.mxu0 0.0
  %735 = vmatprep.mubr.f32.mxu0 0.0
  %736 = vmatmul.mubr.f32.gmra.mrb[0].mxu0 %v578
  %v737 = vpop.f32.mrb[0].mxu0
  %v738 = vadd.f32 0.0, %v737
  %v739 = vpop.f32.mrb[0].mxu0
  %740 = vmatprep.mubr.f32.mxu0 0.0
  %741 = vmatmul.mubr.f32.gmra.mrb[0].mxu0 %v579
  %v742 = vpop.f32.mrb[0].mxu0
  %v743 = vadd.f32 0.0, %v742
  %v744 = vpop.f32.mrb[0].mxu0
  %745 = vmatprep.mubr.f32.mxu0 0.0
  %746 = vmatmul.mubr.f32.gmra.mrb[0].mxu0 %v580
  %v747 = vpop.f32.mrb[0].mxu0
  %v748 = vadd.f32 0.0, %v747
  %v749 = vpop.f32.mrb[0].mxu0
  %750 = vmatprep.mubr.f32.mxu0 0.0
  %751 = vmatmul.mubr.f32.gmra.mrb[0].mxu0 %v581
  %v752 = vpop.f32.mrb[0].mxu0
  %v753 = vadd.f32 0.0, %v752
  %v754 = vpop.f32.mrb[0].mxu0
  %755 = vdwg.mxu0
  %v756 = vrot.slane %v649, 7
  %v757 = vrot.slane %v655, 7
  %v758 = vrot.slane %v661, 7
  %v759 = vrot.slane %v667, 7
  %v760 = vsel %vm270, %v758, %v759
  %v761 = vsel %vm270, %v757, %v758
  %v762 = vsel %vm270, %v756, %v757
  %v763 = vsel %vm270, %v759, %v756
  %v764 = vmul.f32 %v24, %v763
  %v765 = vmul.f32 %v25, %v762
  %v766 = vmul.f32 %v24, %v761
  %v767 = vmul.f32 %v25, %v760
  %v768 = vadd.f32 %v764, %v651
  %v769 = vadd.f32 %v765, %v657
  %v770 = vadd.f32 %v766, %v663
  %v771 = vadd.f32 %v767, %v669
  %v772 = vrot.slane %v738, 1
  %v773 = vrot.slane %v743, 1
  %v774 = vrot.slane %v748, 1
  %v775 = vrot.slane %v753, 1
  %v776 = vsel %vm287, %v774, %v775
  %v777 = vsel %vm287, %v773, %v774
  %v778 = vsel %vm287, %v772, %v773
  %v779 = vsel %vm287, %v775, %v772
  %v780 = vmul.f32 %v30, %v778
  %v781 = vmul.f32 %v31, %v777
  %v782 = vmul.f32 %v30, %v776
  %v783 = vmul.f32 %v31, %v779
  %v784 = vadd.f32 %v768, %v780
  %v785 = vadd.f32 %v769, %v781
  %v786 = vadd.f32 %v770, %v782
  %v787 = vadd.f32 %v771, %v783
  %s788 = scalar_lea.vmem %s1, 64
  %v789 = vld [vmem:[%s788] sm:$0xff]
  %v790 = vld [vmem:[%s788 + $0x8] sm:$0xff]
  %v791 = vld [vmem:[%s788 + $0x10] sm:$0xff]
  %v792 = vld [vmem:[%s788 + $0x18] sm:$0xff]
  %v793 = vadd.f32 %v789, %v784
  %v794 = vadd.f32 %v790, %v785
  %v795 = vadd.f32 %v791, %v786
  %v796 = vadd.f32 %v792, %v787
  %v797 = vtanh.pop %v793
  %v798 = vtanh.pop %v794
  %v799 = vtanh.pop %v795
  %v800 = vtanh.pop %v796
  %v801 = vsub.f32 %v797, %v564
  %v802 = vsub.f32 %v798, %v565
  %v803 = vsub.f32 %v799, %v566
  %v804 = vsub.f32 %v800, %v567
  %v805 = vmul.f32 %v574, %v801
  %v806 = vmul.f32 %v575, %v802
  %v807 = vmul.f32 %v576, %v803
  %v808 = vmul.f32 %v577, %v804
  %v809 = vadd.f32 %v564, %v805
  %v810 = vadd.f32 %v565, %v806
  %v811 = vadd.f32 %v566, %v807
  %v812 = vadd.f32 %v567, %v808
  %s813 = scalar_lea.vmem %s4, 64
  %814 = vst [vmem:[%s813] sm:$0xff] %v809
  %815 = vst [vmem:[%s813 + $0x8] sm:$0xff] %v810
  %816 = vst [vmem:[%s813 + $0x10] sm:$0xff] %v811
  %817 = vst [vmem:[%s813 + $0x18] sm:$0xff] %v812
  %s818 = scalar_lea.vmem %s0, 96
  %v819 = vld [vmem:[%s818] sm:$0xff]
  %v820 = vld [vmem:[%s818 + $0x8] sm:$0xff]
  %v821 = vld [vmem:[%s818 + $0x10] sm:$0xff]
  %v822 = vld [vmem:[%s818 + $0x18] sm:$0xff]
  %v823 = vmul.f32 %v819, %v809
  %v824 = vmul.f32 %v820, %v810
  %v825 = vmul.f32 %v821, %v811
  %v826 = vmul.f32 %v822, %v812
  %827 = vmatprep.subr.mxu0 %v33
  %828 = vmatpush1.msra.mxu0 %v32
  %829 = vmatprep.subr.mxu0 %v36
  %830 = vmatpush1.msra.mxu0 %v35
  %831 = vmatprep.subr.mxu0 %v39
  %832 = vmatpush1.msra.mxu0 %v38
  %833 = vmatprep.subr.mxu0 %v42
  %834 = vmatpush1.msra.mxu0 %v41
  %835 = vmatprep.subr.mxu0 %v45
  %836 = vmatpush1.msra.mxu0 %v44
  %837 = vmatprep.subr.mxu0 %v48
  %838 = vmatpush1.msra.mxu0 %v47
  %839 = vmatprep.subr.mxu0 %v51
  %840 = vmatpush1.msra.mxu0 %v50
  %841 = vmatprep.subr.mxu0 %v54
  %842 = vmatpush1.msra.mxu0 %v53
  %843 = vmatprep.subr.mxu0 %v57
  %844 = vmatpush1.msra.mxu0 %v56
  %845 = vmatprep.subr.mxu0 %v60
  %846 = vmatpush1.msra.mxu0 %v59
  %847 = vmatprep.subr.mxu0 %v63
  %848 = vmatpush1.msra.mxu0 %v62
  %849 = vmatprep.subr.mxu0 %v66
  %850 = vmatpush1.msra.mxu0 %v65
  %851 = vmatprep.subr.mxu0 %v69
  %852 = vmatpush1.msra.mxu0 %v68
  %853 = vmatprep.subr.mxu0 %v72
  %854 = vmatpush1.msra.mxu0 %v71
  %855 = vmatprep.subr.mxu0 %v75
  %856 = vmatpush1.msra.mxu0 %v74
  %857 = vmatprep.subr.mxu0 %v78
  %858 = vmatpush1.msra.mxu0 %v77
  %859 = vmatprep.subr.mxu0 0.0
  %860 = vmatpush1.msra.mxu0 0.0
  %861 = vmatprep.subr.mxu0 0.0
  %862 = vmatpush1.msra.mxu0 0.0
  %863 = vmatprep.subr.mxu0 0.0
  %864 = vmatpush1.msra.mxu0 0.0
  %865 = vmatprep.subr.mxu0 0.0
  %866 = vmatpush1.msra.mxu0 0.0
  %867 = vmatprep.subr.mxu0 0.0
  %868 = vmatpush1.msra.mxu0 0.0
  %869 = vmatprep.subr.mxu0 0.0
  %870 = vmatpush1.msra.mxu0 0.0
  %871 = vmatprep.subr.mxu0 0.0
  %872 = vmatpush1.msra.mxu0 0.0
  %873 = vmatprep.subr.mxu0 0.0
  %874 = vmatpush1.msra.mxu0 0.0
  %875 = vmatprep.subr.mxu0 0.0
  %876 = vmatpush1.msra.mxu0 0.0
  %877 = vmatprep.subr.mxu0 0.0
  %878 = vmatpush1.msra.mxu0 0.0
  %879 = vmatprep.subr.mxu0 0.0
  %880 = vmatpush1.msra.mxu0 0.0
  %881 = vmatprep.subr.mxu0 0.0
  %882 = vmatpush1.msra.mxu0 0.0
  %883 = vmatprep.subr.mxu0 0.0
  %884 = vmatpush1.msra.mxu0 0.0
  %885 = vmatprep.subr.mxu0 0.0
  %886 = vmatpush1.msra.mxu0 0.0
  %887 = vmatprep.subr.mxu0 0.0
  %888 = vmatpush1.msra.mxu0 0.0
  %889 = vmatprep.subr.mxu0 0.0
  %890 = vmatpush1.msra.mxu0 0.0
  %891 = vmatprep.mubr.f32.mxu0 0.0
  %892 = vmatmul.mubr.f32.gmra.mrb[0].mxu0 %v823
  %v893 = vpop.f32.mrb[0].mxu0
  %v894 = vadd.f32 0.0, %v893
  %v895 = vpop.f32.mrb[0].mxu0
  %v896 = vadd.f32 0.0, %v895
  %897 = vmatprep.mubr.f32.mxu0 0.0
  %898 = vmatmul.mubr.f32.gmra.mrb[0].mxu0 %v824
  %v899 = vpop.f32.mrb[0].mxu0
  %v900 = vadd.f32 0.0, %v899
  %v901 = vpop.f32.mrb[0].mxu0
  %v902 = vadd.f32 0.0, %v901
  %903 = vmatprep.mubr.f32.mxu0 0.0
  %904 = vmatmul.mubr.f32.gmra.mrb[0].mxu0 %v825
  %v905 = vpop.f32.mrb[0].mxu0
  %v906 = vadd.f32 0.0, %v905
  %v907 = vpop.f32.mrb[0].mxu0
  %v908 = vadd.f32 0.0, %v907
  %909 = vmatprep.mubr.f32.mxu0 0.0
  %910 = vmatmul.mubr.f32.gmra.mrb[0].mxu0 %v826
  %v911 = vpop.f32.mrb[0].mxu0
  %v912 = vadd.f32 0.0, %v911
  %v913 = vpop.f32.mrb[0].mxu0
  %v914 = vadd.f32 0.0, %v913
  %915 = vdwg.mxu0
  %916 = vmatprep.subr.mxu0 0.0
  %917 = vmatpush1.msra.mxu0 %v34
  %918 = vmatprep.subr.mxu0 0.0
  %919 = vmatpush1.msra.mxu0 %v37
  %920 = vmatprep.subr.mxu0 0.0
  %921 = vmatpush1.msra.mxu0 %v40
  %922 = vmatprep.subr.mxu0 0.0
  %923 = vmatpush1.msra.mxu0 %v43
  %924 = vmatprep.subr.mxu0 0.0
  %925 = vmatpush1.msra.mxu0 %v46
  %926 = vmatprep.subr.mxu0 0.0
  %927 = vmatpush1.msra.mxu0 %v49
  %928 = vmatprep.subr.mxu0 0.0
  %929 = vmatpush1.msra.mxu0 %v52
  %930 = vmatprep.subr.mxu0 0.0
  %931 = vmatpush1.msra.mxu0 %v55
  %932 = vmatprep.subr.mxu0 0.0
  %933 = vmatpush1.msra.mxu0 %v58
  %934 = vmatprep.subr.mxu0 0.0
  %935 = vmatpush1.msra.mxu0 %v61
  %936 = vmatprep.subr.mxu0 0.0
  %937 = vmatpush1.msra.mxu0 %v64
  %938 = vmatprep.subr.mxu0 0.0
  %939 = vmatpush1.msra.mxu0 %v67
  %940 = vmatprep.subr.mxu0 0.0
  %941 = vmatpush1.msra.mxu0 %v70
  %942 = vmatprep.subr.mxu0 0.0
  %943 = vmatpush1.msra.mxu0 %v73
  %944 = vmatprep.subr.mxu0 0.0
  %945 = vmatpush1.msra.mxu0 %v76
  %946 = vmatprep.subr.mxu0 0.0
  %947 = vmatpush1.msra.mxu0 %v79
  %948 = vmatprep.subr.mxu0 0.0
  %949 = vmatpush1.msra.mxu0 0.0
  %950 = vmatprep.subr.mxu0 0.0
  %951 = vmatpush1.msra.mxu0 0.0
  %952 = vmatprep.subr.mxu0 0.0
  %953 = vmatpush1.msra.mxu0 0.0
  %954 = vmatprep.subr.mxu0 0.0
  %955 = vmatpush1.msra.mxu0 0.0
  %956 = vmatprep.subr.mxu0 0.0
  %957 = vmatpush1.msra.mxu0 0.0
  %958 = vmatprep.subr.mxu0 0.0
  %959 = vmatpush1.msra.mxu0 0.0
  %960 = vmatprep.subr.mxu0 0.0
  %961 = vmatpush1.msra.mxu0 0.0
  %962 = vmatprep.subr.mxu0 0.0
  %963 = vmatpush1.msra.mxu0 0.0
  %964 = vmatprep.subr.mxu0 0.0
  %965 = vmatpush1.msra.mxu0 0.0
  %966 = vmatprep.subr.mxu0 0.0
  %967 = vmatpush1.msra.mxu0 0.0
  %968 = vmatprep.subr.mxu0 0.0
  %969 = vmatpush1.msra.mxu0 0.0
  %970 = vmatprep.subr.mxu0 0.0
  %971 = vmatpush1.msra.mxu0 0.0
  %972 = vmatprep.subr.mxu0 0.0
  %973 = vmatpush1.msra.mxu0 0.0
  %974 = vmatprep.subr.mxu0 0.0
  %975 = vmatpush1.msra.mxu0 0.0
  %976 = vmatprep.subr.mxu0 0.0
  %977 = vmatpush1.msra.mxu0 0.0
  %978 = vmatprep.subr.mxu0 0.0
  %979 = vmatpush1.msra.mxu0 0.0
  %980 = vmatprep.mubr.f32.mxu0 0.0
  %981 = vmatmul.mubr.f32.gmra.mrb[0].mxu0 %v823
  %v982 = vpop.f32.mrb[0].mxu0
  %v983 = vadd.f32 0.0, %v982
  %v984 = vpop.f32.mrb[0].mxu0
  %985 = vmatprep.mubr.f32.mxu0 0.0
  %986 = vmatmul.mubr.f32.gmra.mrb[0].mxu0 %v824
  %v987 = vpop.f32.mrb[0].mxu0
  %v988 = vadd.f32 0.0, %v987
  %v989 = vpop.f32.mrb[0].mxu0
  %990 = vmatprep.mubr.f32.mxu0 0.0
  %991 = vmatmul.mubr.f32.gmra.mrb[0].mxu0 %v825
  %v992 = vpop.f32.mrb[0].mxu0
  %v993 = vadd.f32 0.0, %v992
  %v994 = vpop.f32.mrb[0].mxu0
  %995 = vmatprep.mubr.f32.mxu0 0.0
  %996 = vmatmul.mubr.f32.gmra.mrb[0].mxu0 %v826
  %v997 = vpop.f32.mrb[0].mxu0
  %v998 = vadd.f32 0.0, %v997
  %v999 = vpop.f32.mrb[0].mxu0
  %1000 = vdwg.mxu0
  %v1001 = vrot.slane %v894, 7
  %v1002 = vrot.slane %v900, 7
  %v1003 = vrot.slane %v906, 7
  %v1004 = vrot.slane %v912, 7
  %v1005 = vsel %vm270, %v1003, %v1004
  %v1006 = vsel %vm270, %v1002, %v1003
  %v1007 = vsel %vm270, %v1001, %v1002
  %v1008 = vsel %vm270, %v1004, %v1001
  %v1009 = vmul.f32 %v24, %v1008
  %v1010 = vmul.f32 %v25, %v1007
  %v1011 = vmul.f32 %v24, %v1006
  %v1012 = vmul.f32 %v25, %v1005
  %v1013 = vadd.f32 %v1009, %v896
  %v1014 = vadd.f32 %v1010, %v902
  %v1015 = vadd.f32 %v1011, %v908
  %v1016 = vadd.f32 %v1012, %v914
  %v1017 = vrot.slane %v983, 1
  %v1018 = vrot.slane %v988, 1
  %v1019 = vrot.slane %v993, 1
  %v1020 = vrot.slane %v998, 1
  %v1021 = vsel %vm287, %v1019, %v1020
  %v1022 = vsel %vm287, %v1018, %v1019
  %v1023 = vsel %vm287, %v1017, %v1018
  %v1024 = vsel %vm287, %v1020, %v1017
  %v1025 = vmul.f32 %v30, %v1023
  %v1026 = vmul.f32 %v31, %v1022
  %v1027 = vmul.f32 %v30, %v1021
  %v1028 = vmul.f32 %v31, %v1024
  %v1029 = vadd.f32 %v1013, %v1025
  %v1030 = vadd.f32 %v1014, %v1026
  %v1031 = vadd.f32 %v1015, %v1027
  %v1032 = vadd.f32 %v1016, %v1028
  %s1033 = scalar_lea.vmem %s1, 96
  %v1034 = vld [vmem:[%s1033] sm:$0xff]
  %v1035 = vld [vmem:[%s1033 + $0x8] sm:$0xff]
  %v1036 = vld [vmem:[%s1033 + $0x10] sm:$0xff]
  %v1037 = vld [vmem:[%s1033 + $0x18] sm:$0xff]
  %v1038 = vadd.f32 %v1034, %v1029
  %v1039 = vadd.f32 %v1035, %v1030
  %v1040 = vadd.f32 %v1036, %v1031
  %v1041 = vadd.f32 %v1037, %v1032
  %v1042 = vtanh.pop %v1038
  %v1043 = vtanh.pop %v1039
  %v1044 = vtanh.pop %v1040
  %v1045 = vtanh.pop %v1041
  %v1046 = vsub.f32 %v1042, %v809
  %v1047 = vsub.f32 %v1043, %v810
  %v1048 = vsub.f32 %v1044, %v811
  %v1049 = vsub.f32 %v1045, %v812
  %v1050 = vmul.f32 %v819, %v1046
  %v1051 = vmul.f32 %v820, %v1047
  %v1052 = vmul.f32 %v821, %v1048
  %v1053 = vmul.f32 %v822, %v1049
  %v1054 = vadd.f32 %v809, %v1050
  %v1055 = vadd.f32 %v810, %v1051
  %v1056 = vadd.f32 %v811, %v1052
  %v1057 = vadd.f32 %v812, %v1053
  %s1058 = scalar_lea.vmem %s4, 96
  %1059 = vst [vmem:[%s1058] sm:$0xff] %v1054
  %1060 = vst [vmem:[%s1058 + $0x8] sm:$0xff] %v1055
  %1061 = vst [vmem:[%s1058 + $0x10] sm:$0xff] %v1056
  %1062 = vst [vmem:[%s1058 + $0x18] sm:$0xff] %v1057
  %s1063 = scalar_lea.vmem %s0, 128
  %v1064 = vld [vmem:[%s1063] sm:$0xff]
  %v1065 = vld [vmem:[%s1063 + $0x8] sm:$0xff]
  %v1066 = vld [vmem:[%s1063 + $0x10] sm:$0xff]
  %v1067 = vld [vmem:[%s1063 + $0x18] sm:$0xff]
  %v1068 = vmul.f32 %v1064, %v1054
  %v1069 = vmul.f32 %v1065, %v1055
  %v1070 = vmul.f32 %v1066, %v1056
  %v1071 = vmul.f32 %v1067, %v1057
  %1072 = vmatprep.subr.mxu0 %v33
  %1073 = vmatpush1.msra.mxu0 %v32
  %1074 = vmatprep.subr.mxu0 %v36
  %1075 = vmatpush1.msra.mxu0 %v35
  %1076 = vmatprep.subr.mxu0 %v39
  %1077 = vmatpush1.msra.mxu0 %v38
  %1078 = vmatprep.subr.mxu0 %v42
  %1079 = vmatpush1.msra.mxu0 %v41
  %1080 = vmatprep.subr.mxu0 %v45
  %1081 = vmatpush1.msra.mxu0 %v44
  %1082 = vmatprep.subr.mxu0 %v48
  %1083 = vmatpush1.msra.mxu0 %v47
  %1084 = vmatprep.subr.mxu0 %v51
  %1085 = vmatpush1.msra.mxu0 %v50
  %1086 = vmatprep.subr.mxu0 %v54
  %1087 = vmatpush1.msra.mxu0 %v53
  %1088 = vmatprep.subr.mxu0 %v57
  %1089 = vmatpush1.msra.mxu0 %v56
  %1090 = vmatprep.subr.mxu0 %v60
  %1091 = vmatpush1.msra.mxu0 %v59
  %1092 = vmatprep.subr.mxu0 %v63
  %1093 = vmatpush1.msra.mxu0 %v62
  %1094 = vmatprep.subr.mxu0 %v66
  %1095 = vmatpush1.msra.mxu0 %v65
  %1096 = vmatprep.subr.mxu0 %v69
  %1097 = vmatpush1.msra.mxu0 %v68
  %1098 = vmatprep.subr.mxu0 %v72
  %1099 = vmatpush1.msra.mxu0 %v71
  %1100 = vmatprep.subr.mxu0 %v75
  %1101 = vmatpush1.msra.mxu0 %v74
  %1102 = vmatprep.subr.mxu0 %v78
  %1103 = vmatpush1.msra.mxu0 %v77
  %1104 = vmatprep.subr.mxu0 0.0
  %1105 = vmatpush1.msra.mxu0 0.0
  %1106 = vmatprep.subr.mxu0 0.0
  %1107 = vmatpush1.msra.mxu0 0.0
  %1108 = vmatprep.subr.mxu0 0.0
  %1109 = vmatpush1.msra.mxu0 0.0
  %1110 = vmatprep.subr.mxu0 0.0
  %1111 = vmatpush1.msra.mxu0 0.0
  %1112 = vmatprep.subr.mxu0 0.0
  %1113 = vmatpush1.msra.mxu0 0.0
  %1114 = vmatprep.subr.mxu0 0.0
  %1115 = vmatpush1.msra.mxu0 0.0
  %1116 = vmatprep.subr.mxu0 0.0
  %1117 = vmatpush1.msra.mxu0 0.0
  %1118 = vmatprep.subr.mxu0 0.0
  %1119 = vmatpush1.msra.mxu0 0.0
  %1120 = vmatprep.subr.mxu0 0.0
  %1121 = vmatpush1.msra.mxu0 0.0
  %1122 = vmatprep.subr.mxu0 0.0
  %1123 = vmatpush1.msra.mxu0 0.0
  %1124 = vmatprep.subr.mxu0 0.0
  %1125 = vmatpush1.msra.mxu0 0.0
  %1126 = vmatprep.subr.mxu0 0.0
  %1127 = vmatpush1.msra.mxu0 0.0
  %1128 = vmatprep.subr.mxu0 0.0
  %1129 = vmatpush1.msra.mxu0 0.0
  %1130 = vmatprep.subr.mxu0 0.0
  %1131 = vmatpush1.msra.mxu0 0.0
  %1132 = vmatprep.subr.mxu0 0.0
  %1133 = vmatpush1.msra.mxu0 0.0
  %1134 = vmatprep.subr.mxu0 0.0
  %1135 = vmatpush1.msra.mxu0 0.0
  %1136 = vmatprep.mubr.f32.mxu0 0.0
  %1137 = vmatmul.mubr.f32.gmra.mrb[0].mxu0 %v1068
  %v1138 = vpop.f32.mrb[0].mxu0
  %v1139 = vadd.f32 0.0, %v1138
  %v1140 = vpop.f32.mrb[0].mxu0
  %v1141 = vadd.f32 0.0, %v1140
  %1142 = vmatprep.mubr.f32.mxu0 0.0
  %1143 = vmatmul.mubr.f32.gmra.mrb[0].mxu0 %v1069
  %v1144 = vpop.f32.mrb[0].mxu0
  %v1145 = vadd.f32 0.0, %v1144
  %v1146 = vpop.f32.mrb[0].mxu0
  %v1147 = vadd.f32 0.0, %v1146
  %1148 = vmatprep.mubr.f32.mxu0 0.0
  %1149 = vmatmul.mubr.f32.gmra.mrb[0].mxu0 %v1070
  %v1150 = vpop.f32.mrb[0].mxu0
  %v1151 = vadd.f32 0.0, %v1150
  %v1152 = vpop.f32.mrb[0].mxu0
  %v1153 = vadd.f32 0.0, %v1152
  %1154 = vmatprep.mubr.f32.mxu0 0.0
  %1155 = vmatmul.mubr.f32.gmra.mrb[0].mxu0 %v1071
  %v1156 = vpop.f32.mrb[0].mxu0
  %v1157 = vadd.f32 0.0, %v1156
  %v1158 = vpop.f32.mrb[0].mxu0
  %v1159 = vadd.f32 0.0, %v1158
  %1160 = vdwg.mxu0
  %1161 = vmatprep.subr.mxu0 0.0
  %1162 = vmatpush1.msra.mxu0 %v34
  %1163 = vmatprep.subr.mxu0 0.0
  %1164 = vmatpush1.msra.mxu0 %v37
  %1165 = vmatprep.subr.mxu0 0.0
  %1166 = vmatpush1.msra.mxu0 %v40
  %1167 = vmatprep.subr.mxu0 0.0
  %1168 = vmatpush1.msra.mxu0 %v43
  %1169 = vmatprep.subr.mxu0 0.0
  %1170 = vmatpush1.msra.mxu0 %v46
  %1171 = vmatprep.subr.mxu0 0.0
  %1172 = vmatpush1.msra.mxu0 %v49
  %1173 = vmatprep.subr.mxu0 0.0
  %1174 = vmatpush1.msra.mxu0 %v52
  %1175 = vmatprep.subr.mxu0 0.0
  %1176 = vmatpush1.msra.mxu0 %v55
  %1177 = vmatprep.subr.mxu0 0.0
  %1178 = vmatpush1.msra.mxu0 %v58
  %1179 = vmatprep.subr.mxu0 0.0
  %1180 = vmatpush1.msra.mxu0 %v61
  %1181 = vmatprep.subr.mxu0 0.0
  %1182 = vmatpush1.msra.mxu0 %v64
  %1183 = vmatprep.subr.mxu0 0.0
  %1184 = vmatpush1.msra.mxu0 %v67
  %1185 = vmatprep.subr.mxu0 0.0
  %1186 = vmatpush1.msra.mxu0 %v70
  %1187 = vmatprep.subr.mxu0 0.0
  %1188 = vmatpush1.msra.mxu0 %v73
  %1189 = vmatprep.subr.mxu0 0.0
  %1190 = vmatpush1.msra.mxu0 %v76
  %1191 = vmatprep.subr.mxu0 0.0
  %1192 = vmatpush1.msra.mxu0 %v79
  %1193 = vmatprep.subr.mxu0 0.0
  %1194 = vmatpush1.msra.mxu0 0.0
  %1195 = vmatprep.subr.mxu0 0.0
  %1196 = vmatpush1.msra.mxu0 0.0
  %1197 = vmatprep.subr.mxu0 0.0
  %1198 = vmatpush1.msra.mxu0 0.0
  %1199 = vmatprep.subr.mxu0 0.0
  %1200 = vmatpush1.msra.mxu0 0.0
  %1201 = vmatprep.subr.mxu0 0.0
  %1202 = vmatpush1.msra.mxu0 0.0
  %1203 = vmatprep.subr.mxu0 0.0
  %1204 = vmatpush1.msra.mxu0 0.0
  %1205 = vmatprep.subr.mxu0 0.0
  %1206 = vmatpush1.msra.mxu0 0.0
  %1207 = vmatprep.subr.mxu0 0.0
  %1208 = vmatpush1.msra.mxu0 0.0
  %1209 = vmatprep.subr.mxu0 0.0
  %1210 = vmatpush1.msra.mxu0 0.0
  %1211 = vmatprep.subr.mxu0 0.0
  %1212 = vmatpush1.msra.mxu0 0.0
  %1213 = vmatprep.subr.mxu0 0.0
  %1214 = vmatpush1.msra.mxu0 0.0
  %1215 = vmatprep.subr.mxu0 0.0
  %1216 = vmatpush1.msra.mxu0 0.0
  %1217 = vmatprep.subr.mxu0 0.0
  %1218 = vmatpush1.msra.mxu0 0.0
  %1219 = vmatprep.subr.mxu0 0.0
  %1220 = vmatpush1.msra.mxu0 0.0
  %1221 = vmatprep.subr.mxu0 0.0
  %1222 = vmatpush1.msra.mxu0 0.0
  %1223 = vmatprep.subr.mxu0 0.0
  %1224 = vmatpush1.msra.mxu0 0.0
  %1225 = vmatprep.mubr.f32.mxu0 0.0
  %1226 = vmatmul.mubr.f32.gmra.mrb[0].mxu0 %v1068
  %v1227 = vpop.f32.mrb[0].mxu0
  %v1228 = vadd.f32 0.0, %v1227
  %v1229 = vpop.f32.mrb[0].mxu0
  %1230 = vmatprep.mubr.f32.mxu0 0.0
  %1231 = vmatmul.mubr.f32.gmra.mrb[0].mxu0 %v1069
  %v1232 = vpop.f32.mrb[0].mxu0
  %v1233 = vadd.f32 0.0, %v1232
  %v1234 = vpop.f32.mrb[0].mxu0
  %1235 = vmatprep.mubr.f32.mxu0 0.0
  %1236 = vmatmul.mubr.f32.gmra.mrb[0].mxu0 %v1070
  %v1237 = vpop.f32.mrb[0].mxu0
  %v1238 = vadd.f32 0.0, %v1237
  %v1239 = vpop.f32.mrb[0].mxu0
  %1240 = vmatprep.mubr.f32.mxu0 0.0
  %1241 = vmatmul.mubr.f32.gmra.mrb[0].mxu0 %v1071
  %v1242 = vpop.f32.mrb[0].mxu0
  %v1243 = vadd.f32 0.0, %v1242
  %v1244 = vpop.f32.mrb[0].mxu0
  %1245 = vdwg.mxu0
  %v1246 = vrot.slane %v1139, 7
  %v1247 = vrot.slane %v1145, 7
  %v1248 = vrot.slane %v1151, 7
  %v1249 = vrot.slane %v1157, 7
  %v1250 = vsel %vm270, %v1248, %v1249
  %v1251 = vsel %vm270, %v1247, %v1248
  %v1252 = vsel %vm270, %v1246, %v1247
  %v1253 = vsel %vm270, %v1249, %v1246
  %v1254 = vmul.f32 %v24, %v1253
  %v1255 = vmul.f32 %v25, %v1252
  %v1256 = vmul.f32 %v24, %v1251
  %v1257 = vmul.f32 %v25, %v1250
  %v1258 = vadd.f32 %v1254, %v1141
  %v1259 = vadd.f32 %v1255, %v1147
  %v1260 = vadd.f32 %v1256, %v1153
  %v1261 = vadd.f32 %v1257, %v1159
  %v1262 = vrot.slane %v1228, 1
  %v1263 = vrot.slane %v1233, 1
  %v1264 = vrot.slane %v1238, 1
  %v1265 = vrot.slane %v1243, 1
  %v1266 = vsel %vm287, %v1264, %v1265
  %v1267 = vsel %vm287, %v1263, %v1264
  %v1268 = vsel %vm287, %v1262, %v1263
  %v1269 = vsel %vm287, %v1265, %v1262
  %v1270 = vmul.f32 %v30, %v1268
  %v1271 = vmul.f32 %v31, %v1267
  %v1272 = vmul.f32 %v30, %v1266
  %v1273 = vmul.f32 %v31, %v1269
  %v1274 = vadd.f32 %v1258, %v1270
  %v1275 = vadd.f32 %v1259, %v1271
  %v1276 = vadd.f32 %v1260, %v1272
  %v1277 = vadd.f32 %v1261, %v1273
  %s1278 = scalar_lea.vmem %s1, 128
  %v1279 = vld [vmem:[%s1278] sm:$0xff]
  %v1280 = vld [vmem:[%s1278 + $0x8] sm:$0xff]
  %v1281 = vld [vmem:[%s1278 + $0x10] sm:$0xff]
  %v1282 = vld [vmem:[%s1278 + $0x18] sm:$0xff]
  %v1283 = vadd.f32 %v1279, %v1274
  %v1284 = vadd.f32 %v1280, %v1275
  %v1285 = vadd.f32 %v1281, %v1276
  %v1286 = vadd.f32 %v1282, %v1277
  %v1287 = vtanh.pop %v1283
  %v1288 = vtanh.pop %v1284
  %v1289 = vtanh.pop %v1285
  %v1290 = vtanh.pop %v1286
  %v1291 = vsub.f32 %v1287, %v1054
  %v1292 = vsub.f32 %v1288, %v1055
  %v1293 = vsub.f32 %v1289, %v1056
  %v1294 = vsub.f32 %v1290, %v1057
  %v1295 = vmul.f32 %v1064, %v1291
  %v1296 = vmul.f32 %v1065, %v1292
  %v1297 = vmul.f32 %v1066, %v1293
  %v1298 = vmul.f32 %v1067, %v1294
  %v1299 = vadd.f32 %v1054, %v1295
  %v1300 = vadd.f32 %v1055, %v1296
  %v1301 = vadd.f32 %v1056, %v1297
  %v1302 = vadd.f32 %v1057, %v1298
  %s1303 = scalar_lea.vmem %s4, 128
  %1304 = vst [vmem:[%s1303] sm:$0xff] %v1299
  %1305 = vst [vmem:[%s1303 + $0x8] sm:$0xff] %v1300
  %1306 = vst [vmem:[%s1303 + $0x10] sm:$0xff] %v1301
  %1307 = vst [vmem:[%s1303 + $0x18] sm:$0xff] %v1302
  %s1308 = scalar_lea.vmem %s0, 160
  %v1309 = vld [vmem:[%s1308] sm:$0xff]
  %v1310 = vld [vmem:[%s1308 + $0x8] sm:$0xff]
  %v1311 = vld [vmem:[%s1308 + $0x10] sm:$0xff]
  %v1312 = vld [vmem:[%s1308 + $0x18] sm:$0xff]
  %v1313 = vmul.f32 %v1309, %v1299
  %v1314 = vmul.f32 %v1310, %v1300
  %v1315 = vmul.f32 %v1311, %v1301
  %v1316 = vmul.f32 %v1312, %v1302
  %1317 = vmatprep.subr.mxu0 %v33
  %1318 = vmatpush1.msra.mxu0 %v32
  %1319 = vmatprep.subr.mxu0 %v36
  %1320 = vmatpush1.msra.mxu0 %v35
  %1321 = vmatprep.subr.mxu0 %v39
  %1322 = vmatpush1.msra.mxu0 %v38
  %1323 = vmatprep.subr.mxu0 %v42
  %1324 = vmatpush1.msra.mxu0 %v41
  %1325 = vmatprep.subr.mxu0 %v45
  %1326 = vmatpush1.msra.mxu0 %v44
  %1327 = vmatprep.subr.mxu0 %v48
  %1328 = vmatpush1.msra.mxu0 %v47
  %1329 = vmatprep.subr.mxu0 %v51
  %1330 = vmatpush1.msra.mxu0 %v50
  %1331 = vmatprep.subr.mxu0 %v54
  %1332 = vmatpush1.msra.mxu0 %v53
  %1333 = vmatprep.subr.mxu0 %v57
  %1334 = vmatpush1.msra.mxu0 %v56
  %1335 = vmatprep.subr.mxu0 %v60
  %1336 = vmatpush1.msra.mxu0 %v59
  %1337 = vmatprep.subr.mxu0 %v63
  %1338 = vmatpush1.msra.mxu0 %v62
  %1339 = vmatprep.subr.mxu0 %v66
  %1340 = vmatpush1.msra.mxu0 %v65
  %1341 = vmatprep.subr.mxu0 %v69
  %1342 = vmatpush1.msra.mxu0 %v68
  %1343 = vmatprep.subr.mxu0 %v72
  %1344 = vmatpush1.msra.mxu0 %v71
  %1345 = vmatprep.subr.mxu0 %v75
  %1346 = vmatpush1.msra.mxu0 %v74
  %1347 = vmatprep.subr.mxu0 %v78
  %1348 = vmatpush1.msra.mxu0 %v77
  %1349 = vmatprep.subr.mxu0 0.0
  %1350 = vmatpush1.msra.mxu0 0.0
  %1351 = vmatprep.subr.mxu0 0.0
  %1352 = vmatpush1.msra.mxu0 0.0
  %1353 = vmatprep.subr.mxu0 0.0
  %1354 = vmatpush1.msra.mxu0 0.0
  %1355 = vmatprep.subr.mxu0 0.0
  %1356 = vmatpush1.msra.mxu0 0.0
  %1357 = vmatprep.subr.mxu0 0.0
  %1358 = vmatpush1.msra.mxu0 0.0
  %1359 = vmatprep.subr.mxu0 0.0
  %1360 = vmatpush1.msra.mxu0 0.0
  %1361 = vmatprep.subr.mxu0 0.0
  %1362 = vmatpush1.msra.mxu0 0.0
  %1363 = vmatprep.subr.mxu0 0.0
  %1364 = vmatpush1.msra.mxu0 0.0
  %1365 = vmatprep.subr.mxu0 0.0
  %1366 = vmatpush1.msra.mxu0 0.0
  %1367 = vmatprep.subr.mxu0 0.0
  %1368 = vmatpush1.msra.mxu0 0.0
  %1369 = vmatprep.subr.mxu0 0.0
  %1370 = vmatpush1.msra.mxu0 0.0
  %1371 = vmatprep.subr.mxu0 0.0
  %1372 = vmatpush1.msra.mxu0 0.0
  %1373 = vmatprep.subr.mxu0 0.0
  %1374 = vmatpush1.msra.mxu0 0.0
  %1375 = vmatprep.subr.mxu0 0.0
  %1376 = vmatpush1.msra.mxu0 0.0
  %1377 = vmatprep.subr.mxu0 0.0
  %1378 = vmatpush1.msra.mxu0 0.0
  %1379 = vmatprep.subr.mxu0 0.0
  %1380 = vmatpush1.msra.mxu0 0.0
  %1381 = vmatprep.mubr.f32.mxu0 0.0
  %1382 = vmatmul.mubr.f32.gmra.mrb[0].mxu0 %v1313
  %v1383 = vpop.f32.mrb[0].mxu0
  %v1384 = vadd.f32 0.0, %v1383
  %v1385 = vpop.f32.mrb[0].mxu0
  %v1386 = vadd.f32 0.0, %v1385
  %1387 = vmatprep.mubr.f32.mxu0 0.0
  %1388 = vmatmul.mubr.f32.gmra.mrb[0].mxu0 %v1314
  %v1389 = vpop.f32.mrb[0].mxu0
  %v1390 = vadd.f32 0.0, %v1389
  %v1391 = vpop.f32.mrb[0].mxu0
  %v1392 = vadd.f32 0.0, %v1391
  %1393 = vmatprep.mubr.f32.mxu0 0.0
  %1394 = vmatmul.mubr.f32.gmra.mrb[0].mxu0 %v1315
  %v1395 = vpop.f32.mrb[0].mxu0
  %v1396 = vadd.f32 0.0, %v1395
  %v1397 = vpop.f32.mrb[0].mxu0
  %v1398 = vadd.f32 0.0, %v1397
  %1399 = vmatprep.mubr.f32.mxu0 0.0
  %1400 = vmatmul.mubr.f32.gmra.mrb[0].mxu0 %v1316
  %v1401 = vpop.f32.mrb[0].mxu0
  %v1402 = vadd.f32 0.0, %v1401
  %v1403 = vpop.f32.mrb[0].mxu0
  %v1404 = vadd.f32 0.0, %v1403
  %1405 = vdwg.mxu0
  %1406 = vmatprep.subr.mxu0 0.0
  %1407 = vmatpush1.msra.mxu0 %v34
  %1408 = vmatprep.subr.mxu0 0.0
  %1409 = vmatpush1.msra.mxu0 %v37
  %1410 = vmatprep.subr.mxu0 0.0
  %1411 = vmatpush1.msra.mxu0 %v40
  %1412 = vmatprep.subr.mxu0 0.0
  %1413 = vmatpush1.msra.mxu0 %v43
  %1414 = vmatprep.subr.mxu0 0.0
  %1415 = vmatpush1.msra.mxu0 %v46
  %1416 = vmatprep.subr.mxu0 0.0
  %1417 = vmatpush1.msra.mxu0 %v49
  %1418 = vmatprep.subr.mxu0 0.0
  %1419 = vmatpush1.msra.mxu0 %v52
  %1420 = vmatprep.subr.mxu0 0.0
  %1421 = vmatpush1.msra.mxu0 %v55
  %1422 = vmatprep.subr.mxu0 0.0
  %1423 = vmatpush1.msra.mxu0 %v58
  %1424 = vmatprep.subr.mxu0 0.0
  %1425 = vmatpush1.msra.mxu0 %v61
  %1426 = vmatprep.subr.mxu0 0.0
  %1427 = vmatpush1.msra.mxu0 %v64
  %1428 = vmatprep.subr.mxu0 0.0
  %1429 = vmatpush1.msra.mxu0 %v67
  %1430 = vmatprep.subr.mxu0 0.0
  %1431 = vmatpush1.msra.mxu0 %v70
  %1432 = vmatprep.subr.mxu0 0.0
  %1433 = vmatpush1.msra.mxu0 %v73
  %1434 = vmatprep.subr.mxu0 0.0
  %1435 = vmatpush1.msra.mxu0 %v76
  %1436 = vmatprep.subr.mxu0 0.0
  %1437 = vmatpush1.msra.mxu0 %v79
  %1438 = vmatprep.subr.mxu0 0.0
  %1439 = vmatpush1.msra.mxu0 0.0
  %1440 = vmatprep.subr.mxu0 0.0
  %1441 = vmatpush1.msra.mxu0 0.0
  %1442 = vmatprep.subr.mxu0 0.0
  %1443 = vmatpush1.msra.mxu0 0.0
  %1444 = vmatprep.subr.mxu0 0.0
  %1445 = vmatpush1.msra.mxu0 0.0
  %1446 = vmatprep.subr.mxu0 0.0
  %1447 = vmatpush1.msra.mxu0 0.0
  %1448 = vmatprep.subr.mxu0 0.0
  %1449 = vmatpush1.msra.mxu0 0.0
  %1450 = vmatprep.subr.mxu0 0.0
  %1451 = vmatpush1.msra.mxu0 0.0
  %1452 = vmatprep.subr.mxu0 0.0
  %1453 = vmatpush1.msra.mxu0 0.0
  %1454 = vmatprep.subr.mxu0 0.0
  %1455 = vmatpush1.msra.mxu0 0.0
  %1456 = vmatprep.subr.mxu0 0.0
  %1457 = vmatpush1.msra.mxu0 0.0
  %1458 = vmatprep.subr.mxu0 0.0
  %1459 = vmatpush1.msra.mxu0 0.0
  %1460 = vmatprep.subr.mxu0 0.0
  %1461 = vmatpush1.msra.mxu0 0.0
  %1462 = vmatprep.subr.mxu0 0.0
  %1463 = vmatpush1.msra.mxu0 0.0
  %1464 = vmatprep.subr.mxu0 0.0
  %1465 = vmatpush1.msra.mxu0 0.0
  %1466 = vmatprep.subr.mxu0 0.0
  %1467 = vmatpush1.msra.mxu0 0.0
  %1468 = vmatprep.subr.mxu0 0.0
  %1469 = vmatpush1.msra.mxu0 0.0
  %1470 = vmatprep.mubr.f32.mxu0 0.0
  %1471 = vmatmul.mubr.f32.gmra.mrb[0].mxu0 %v1313
  %v1472 = vpop.f32.mrb[0].mxu0
  %v1473 = vadd.f32 0.0, %v1472
  %v1474 = vpop.f32.mrb[0].mxu0
  %1475 = vmatprep.mubr.f32.mxu0 0.0
  %1476 = vmatmul.mubr.f32.gmra.mrb[0].mxu0 %v1314
  %v1477 = vpop.f32.mrb[0].mxu0
  %v1478 = vadd.f32 0.0, %v1477
  %v1479 = vpop.f32.mrb[0].mxu0
  %1480 = vmatprep.mubr.f32.mxu0 0.0
  %1481 = vmatmul.mubr.f32.gmra.mrb[0].mxu0 %v1315
  %v1482 = vpop.f32.mrb[0].mxu0
  %v1483 = vadd.f32 0.0, %v1482
  %v1484 = vpop.f32.mrb[0].mxu0
  %1485 = vmatprep.mubr.f32.mxu0 0.0
  %1486 = vmatmul.mubr.f32.gmra.mrb[0].mxu0 %v1316
  %v1487 = vpop.f32.mrb[0].mxu0
  %v1488 = vadd.f32 0.0, %v1487
  %v1489 = vpop.f32.mrb[0].mxu0
  %1490 = vdwg.mxu0
  %v1491 = vrot.slane %v1384, 7
  %v1492 = vrot.slane %v1390, 7
  %v1493 = vrot.slane %v1396, 7
  %v1494 = vrot.slane %v1402, 7
  %v1495 = vsel %vm270, %v1493, %v1494
  %v1496 = vsel %vm270, %v1492, %v1493
  %v1497 = vsel %vm270, %v1491, %v1492
  %v1498 = vsel %vm270, %v1494, %v1491
  %v1499 = vmul.f32 %v24, %v1498
  %v1500 = vmul.f32 %v25, %v1497
  %v1501 = vmul.f32 %v24, %v1496
  %v1502 = vmul.f32 %v25, %v1495
  %v1503 = vadd.f32 %v1499, %v1386
  %v1504 = vadd.f32 %v1500, %v1392
  %v1505 = vadd.f32 %v1501, %v1398
  %v1506 = vadd.f32 %v1502, %v1404
  %v1507 = vrot.slane %v1473, 1
  %v1508 = vrot.slane %v1478, 1
  %v1509 = vrot.slane %v1483, 1
  %v1510 = vrot.slane %v1488, 1
  %v1511 = vsel %vm287, %v1509, %v1510
  %v1512 = vsel %vm287, %v1508, %v1509
  %v1513 = vsel %vm287, %v1507, %v1508
  %v1514 = vsel %vm287, %v1510, %v1507
  %v1515 = vmul.f32 %v30, %v1513
  %v1516 = vmul.f32 %v31, %v1512
  %v1517 = vmul.f32 %v30, %v1511
  %v1518 = vmul.f32 %v31, %v1514
  %v1519 = vadd.f32 %v1503, %v1515
  %v1520 = vadd.f32 %v1504, %v1516
  %v1521 = vadd.f32 %v1505, %v1517
  %v1522 = vadd.f32 %v1506, %v1518
  %s1523 = scalar_lea.vmem %s1, 160
  %v1524 = vld [vmem:[%s1523] sm:$0xff]
  %v1525 = vld [vmem:[%s1523 + $0x8] sm:$0xff]
  %v1526 = vld [vmem:[%s1523 + $0x10] sm:$0xff]
  %v1527 = vld [vmem:[%s1523 + $0x18] sm:$0xff]
  %v1528 = vadd.f32 %v1524, %v1519
  %v1529 = vadd.f32 %v1525, %v1520
  %v1530 = vadd.f32 %v1526, %v1521
  %v1531 = vadd.f32 %v1527, %v1522
  %v1532 = vtanh.pop %v1528
  %v1533 = vtanh.pop %v1529
  %v1534 = vtanh.pop %v1530
  %v1535 = vtanh.pop %v1531
  %v1536 = vsub.f32 %v1532, %v1299
  %v1537 = vsub.f32 %v1533, %v1300
  %v1538 = vsub.f32 %v1534, %v1301
  %v1539 = vsub.f32 %v1535, %v1302
  %v1540 = vmul.f32 %v1309, %v1536
  %v1541 = vmul.f32 %v1310, %v1537
  %v1542 = vmul.f32 %v1311, %v1538
  %v1543 = vmul.f32 %v1312, %v1539
  %v1544 = vadd.f32 %v1299, %v1540
  %v1545 = vadd.f32 %v1300, %v1541
  %v1546 = vadd.f32 %v1301, %v1542
  %v1547 = vadd.f32 %v1302, %v1543
  %s1548 = scalar_lea.vmem %s4, 160
  %1549 = vst [vmem:[%s1548] sm:$0xff] %v1544
  %1550 = vst [vmem:[%s1548 + $0x8] sm:$0xff] %v1545
  %1551 = vst [vmem:[%s1548 + $0x10] sm:$0xff] %v1546
  %1552 = vst [vmem:[%s1548 + $0x18] sm:$0xff] %v1547
  %s1553 = scalar_lea.vmem %s0, 192
  %v1554 = vld [vmem:[%s1553] sm:$0xff]
  %v1555 = vld [vmem:[%s1553 + $0x8] sm:$0xff]
  %v1556 = vld [vmem:[%s1553 + $0x10] sm:$0xff]
  %v1557 = vld [vmem:[%s1553 + $0x18] sm:$0xff]
  %v1558 = vmul.f32 %v1554, %v1544
  %v1559 = vmul.f32 %v1555, %v1545
  %v1560 = vmul.f32 %v1556, %v1546
  %v1561 = vmul.f32 %v1557, %v1547
  %1562 = vmatprep.subr.mxu0 %v33
  %1563 = vmatpush1.msra.mxu0 %v32
  %1564 = vmatprep.subr.mxu0 %v36
  %1565 = vmatpush1.msra.mxu0 %v35
  %1566 = vmatprep.subr.mxu0 %v39
  %1567 = vmatpush1.msra.mxu0 %v38
  %1568 = vmatprep.subr.mxu0 %v42
  %1569 = vmatpush1.msra.mxu0 %v41
  %1570 = vmatprep.subr.mxu0 %v45
  %1571 = vmatpush1.msra.mxu0 %v44
  %1572 = vmatprep.subr.mxu0 %v48
  %1573 = vmatpush1.msra.mxu0 %v47
  %1574 = vmatprep.subr.mxu0 %v51
  %1575 = vmatpush1.msra.mxu0 %v50
  %1576 = vmatprep.subr.mxu0 %v54
  %1577 = vmatpush1.msra.mxu0 %v53
  %1578 = vmatprep.subr.mxu0 %v57
  %1579 = vmatpush1.msra.mxu0 %v56
  %1580 = vmatprep.subr.mxu0 %v60
  %1581 = vmatpush1.msra.mxu0 %v59
  %1582 = vmatprep.subr.mxu0 %v63
  %1583 = vmatpush1.msra.mxu0 %v62
  %1584 = vmatprep.subr.mxu0 %v66
  %1585 = vmatpush1.msra.mxu0 %v65
  %1586 = vmatprep.subr.mxu0 %v69
  %1587 = vmatpush1.msra.mxu0 %v68
  %1588 = vmatprep.subr.mxu0 %v72
  %1589 = vmatpush1.msra.mxu0 %v71
  %1590 = vmatprep.subr.mxu0 %v75
  %1591 = vmatpush1.msra.mxu0 %v74
  %1592 = vmatprep.subr.mxu0 %v78
  %1593 = vmatpush1.msra.mxu0 %v77
  %1594 = vmatprep.subr.mxu0 0.0
  %1595 = vmatpush1.msra.mxu0 0.0
  %1596 = vmatprep.subr.mxu0 0.0
  %1597 = vmatpush1.msra.mxu0 0.0
  %1598 = vmatprep.subr.mxu0 0.0
  %1599 = vmatpush1.msra.mxu0 0.0
  %1600 = vmatprep.subr.mxu0 0.0
  %1601 = vmatpush1.msra.mxu0 0.0
  %1602 = vmatprep.subr.mxu0 0.0
  %1603 = vmatpush1.msra.mxu0 0.0
  %1604 = vmatprep.subr.mxu0 0.0
  %1605 = vmatpush1.msra.mxu0 0.0
  %1606 = vmatprep.subr.mxu0 0.0
  %1607 = vmatpush1.msra.mxu0 0.0
  %1608 = vmatprep.subr.mxu0 0.0
  %1609 = vmatpush1.msra.mxu0 0.0
  %1610 = vmatprep.subr.mxu0 0.0
  %1611 = vmatpush1.msra.mxu0 0.0
  %1612 = vmatprep.subr.mxu0 0.0
  %1613 = vmatpush1.msra.mxu0 0.0
  %1614 = vmatprep.subr.mxu0 0.0
  %1615 = vmatpush1.msra.mxu0 0.0
  %1616 = vmatprep.subr.mxu0 0.0
  %1617 = vmatpush1.msra.mxu0 0.0
  %1618 = vmatprep.subr.mxu0 0.0
  %1619 = vmatpush1.msra.mxu0 0.0
  %1620 = vmatprep.subr.mxu0 0.0
  %1621 = vmatpush1.msra.mxu0 0.0
  %1622 = vmatprep.subr.mxu0 0.0
  %1623 = vmatpush1.msra.mxu0 0.0
  %1624 = vmatprep.subr.mxu0 0.0
  %1625 = vmatpush1.msra.mxu0 0.0
  %1626 = vmatprep.mubr.f32.mxu0 0.0
  %1627 = vmatmul.mubr.f32.gmra.mrb[0].mxu0 %v1558
  %v1628 = vpop.f32.mrb[0].mxu0
  %v1629 = vadd.f32 0.0, %v1628
  %v1630 = vpop.f32.mrb[0].mxu0
  %v1631 = vadd.f32 0.0, %v1630
  %1632 = vmatprep.mubr.f32.mxu0 0.0
  %1633 = vmatmul.mubr.f32.gmra.mrb[0].mxu0 %v1559
  %v1634 = vpop.f32.mrb[0].mxu0
  %v1635 = vadd.f32 0.0, %v1634
  %v1636 = vpop.f32.mrb[0].mxu0
  %v1637 = vadd.f32 0.0, %v1636
  %1638 = vmatprep.mubr.f32.mxu0 0.0
  %1639 = vmatmul.mubr.f32.gmra.mrb[0].mxu0 %v1560
  %v1640 = vpop.f32.mrb[0].mxu0
  %v1641 = vadd.f32 0.0, %v1640
  %v1642 = vpop.f32.mrb[0].mxu0
  %v1643 = vadd.f32 0.0, %v1642
  %1644 = vmatprep.mubr.f32.mxu0 0.0
  %1645 = vmatmul.mubr.f32.gmra.mrb[0].mxu0 %v1561
  %v1646 = vpop.f32.mrb[0].mxu0
  %v1647 = vadd.f32 0.0, %v1646
  %v1648 = vpop.f32.mrb[0].mxu0
  %v1649 = vadd.f32 0.0, %v1648
  %1650 = vdwg.mxu0
  %1651 = vmatprep.subr.mxu0 0.0
  %1652 = vmatpush1.msra.mxu0 %v34
  %1653 = vmatprep.subr.mxu0 0.0
  %1654 = vmatpush1.msra.mxu0 %v37
  %1655 = vmatprep.subr.mxu0 0.0
  %1656 = vmatpush1.msra.mxu0 %v40
  %1657 = vmatprep.subr.mxu0 0.0
  %1658 = vmatpush1.msra.mxu0 %v43
  %1659 = vmatprep.subr.mxu0 0.0
  %1660 = vmatpush1.msra.mxu0 %v46
  %1661 = vmatprep.subr.mxu0 0.0
  %1662 = vmatpush1.msra.mxu0 %v49
  %1663 = vmatprep.subr.mxu0 0.0
  %1664 = vmatpush1.msra.mxu0 %v52
  %1665 = vmatprep.subr.mxu0 0.0
  %1666 = vmatpush1.msra.mxu0 %v55
  %1667 = vmatprep.subr.mxu0 0.0
  %1668 = vmatpush1.msra.mxu0 %v58
  %1669 = vmatprep.subr.mxu0 0.0
  %1670 = vmatpush1.msra.mxu0 %v61
  %1671 = vmatprep.subr.mxu0 0.0
  %1672 = vmatpush1.msra.mxu0 %v64
  %1673 = vmatprep.subr.mxu0 0.0
  %1674 = vmatpush1.msra.mxu0 %v67
  %1675 = vmatprep.subr.mxu0 0.0
  %1676 = vmatpush1.msra.mxu0 %v70
  %1677 = vmatprep.subr.mxu0 0.0
  %1678 = vmatpush1.msra.mxu0 %v73
  %1679 = vmatprep.subr.mxu0 0.0
  %1680 = vmatpush1.msra.mxu0 %v76
  %1681 = vmatprep.subr.mxu0 0.0
  %1682 = vmatpush1.msra.mxu0 %v79
  %1683 = vmatprep.subr.mxu0 0.0
  %1684 = vmatpush1.msra.mxu0 0.0
  %1685 = vmatprep.subr.mxu0 0.0
  %1686 = vmatpush1.msra.mxu0 0.0
  %1687 = vmatprep.subr.mxu0 0.0
  %1688 = vmatpush1.msra.mxu0 0.0
  %1689 = vmatprep.subr.mxu0 0.0
  %1690 = vmatpush1.msra.mxu0 0.0
  %1691 = vmatprep.subr.mxu0 0.0
  %1692 = vmatpush1.msra.mxu0 0.0
  %1693 = vmatprep.subr.mxu0 0.0
  %1694 = vmatpush1.msra.mxu0 0.0
  %1695 = vmatprep.subr.mxu0 0.0
  %1696 = vmatpush1.msra.mxu0 0.0
  %1697 = vmatprep.subr.mxu0 0.0
  %1698 = vmatpush1.msra.mxu0 0.0
  %1699 = vmatprep.subr.mxu0 0.0
  %1700 = vmatpush1.msra.mxu0 0.0
  %1701 = vmatprep.subr.mxu0 0.0
  %1702 = vmatpush1.msra.mxu0 0.0
  %1703 = vmatprep.subr.mxu0 0.0
  %1704 = vmatpush1.msra.mxu0 0.0
  %1705 = vmatprep.subr.mxu0 0.0
  %1706 = vmatpush1.msra.mxu0 0.0
  %1707 = vmatprep.subr.mxu0 0.0
  %1708 = vmatpush1.msra.mxu0 0.0
  %1709 = vmatprep.subr.mxu0 0.0
  %1710 = vmatpush1.msra.mxu0 0.0
  %1711 = vmatprep.subr.mxu0 0.0
  %1712 = vmatpush1.msra.mxu0 0.0
  %1713 = vmatprep.subr.mxu0 0.0
  %1714 = vmatpush1.msra.mxu0 0.0
  %1715 = vmatprep.mubr.f32.mxu0 0.0
  %1716 = vmatmul.mubr.f32.gmra.mrb[0].mxu0 %v1558
  %v1717 = vpop.f32.mrb[0].mxu0
  %v1718 = vadd.f32 0.0, %v1717
  %v1719 = vpop.f32.mrb[0].mxu0
  %1720 = vmatprep.mubr.f32.mxu0 0.0
  %1721 = vmatmul.mubr.f32.gmra.mrb[0].mxu0 %v1559
  %v1722 = vpop.f32.mrb[0].mxu0
  %v1723 = vadd.f32 0.0, %v1722
  %v1724 = vpop.f32.mrb[0].mxu0
  %1725 = vmatprep.mubr.f32.mxu0 0.0
  %1726 = vmatmul.mubr.f32.gmra.mrb[0].mxu0 %v1560
  %v1727 = vpop.f32.mrb[0].mxu0
  %v1728 = vadd.f32 0.0, %v1727
  %v1729 = vpop.f32.mrb[0].mxu0
  %1730 = vmatprep.mubr.f32.mxu0 0.0
  %1731 = vmatmul.mubr.f32.gmra.mrb[0].mxu0 %v1561
  %v1732 = vpop.f32.mrb[0].mxu0
  %v1733 = vadd.f32 0.0, %v1732
  %v1734 = vpop.f32.mrb[0].mxu0
  %1735 = vdwg.mxu0
  %v1736 = vrot.slane %v1629, 7
  %v1737 = vrot.slane %v1635, 7
  %v1738 = vrot.slane %v1641, 7
  %v1739 = vrot.slane %v1647, 7
  %v1740 = vsel %vm270, %v1738, %v1739
  %v1741 = vsel %vm270, %v1737, %v1738
  %v1742 = vsel %vm270, %v1736, %v1737
  %v1743 = vsel %vm270, %v1739, %v1736
  %v1744 = vmul.f32 %v24, %v1743
  %v1745 = vmul.f32 %v25, %v1742
  %v1746 = vmul.f32 %v24, %v1741
  %v1747 = vmul.f32 %v25, %v1740
  %v1748 = vadd.f32 %v1744, %v1631
  %v1749 = vadd.f32 %v1745, %v1637
  %v1750 = vadd.f32 %v1746, %v1643
  %v1751 = vadd.f32 %v1747, %v1649
  %v1752 = vrot.slane %v1718, 1
  %v1753 = vrot.slane %v1723, 1
  %v1754 = vrot.slane %v1728, 1
  %v1755 = vrot.slane %v1733, 1
  %v1756 = vsel %vm287, %v1754, %v1755
  %v1757 = vsel %vm287, %v1753, %v1754
  %v1758 = vsel %vm287, %v1752, %v1753
  %v1759 = vsel %vm287, %v1755, %v1752
  %v1760 = vmul.f32 %v30, %v1758
  %v1761 = vmul.f32 %v31, %v1757
  %v1762 = vmul.f32 %v30, %v1756
  %v1763 = vmul.f32 %v31, %v1759
  %v1764 = vadd.f32 %v1748, %v1760
  %v1765 = vadd.f32 %v1749, %v1761
  %v1766 = vadd.f32 %v1750, %v1762
  %v1767 = vadd.f32 %v1751, %v1763
  %s1768 = scalar_lea.vmem %s1, 192
  %v1769 = vld [vmem:[%s1768] sm:$0xff]
  %v1770 = vld [vmem:[%s1768 + $0x8] sm:$0xff]
  %v1771 = vld [vmem:[%s1768 + $0x10] sm:$0xff]
  %v1772 = vld [vmem:[%s1768 + $0x18] sm:$0xff]
  %v1773 = vadd.f32 %v1769, %v1764
  %v1774 = vadd.f32 %v1770, %v1765
  %v1775 = vadd.f32 %v1771, %v1766
  %v1776 = vadd.f32 %v1772, %v1767
  %v1777 = vtanh.pop %v1773
  %v1778 = vtanh.pop %v1774
  %v1779 = vtanh.pop %v1775
  %v1780 = vtanh.pop %v1776
  %v1781 = vsub.f32 %v1777, %v1544
  %v1782 = vsub.f32 %v1778, %v1545
  %v1783 = vsub.f32 %v1779, %v1546
  %v1784 = vsub.f32 %v1780, %v1547
  %v1785 = vmul.f32 %v1554, %v1781
  %v1786 = vmul.f32 %v1555, %v1782
  %v1787 = vmul.f32 %v1556, %v1783
  %v1788 = vmul.f32 %v1557, %v1784
  %v1789 = vadd.f32 %v1544, %v1785
  %v1790 = vadd.f32 %v1545, %v1786
  %v1791 = vadd.f32 %v1546, %v1787
  %v1792 = vadd.f32 %v1547, %v1788
  %s1793 = scalar_lea.vmem %s4, 192
  %1794 = vst [vmem:[%s1793] sm:$0xff] %v1789
  %1795 = vst [vmem:[%s1793 + $0x8] sm:$0xff] %v1790
  %1796 = vst [vmem:[%s1793 + $0x10] sm:$0xff] %v1791
  %1797 = vst [vmem:[%s1793 + $0x18] sm:$0xff] %v1792
  %s1798 = scalar_lea.vmem %s0, 224
  %v1799 = vld [vmem:[%s1798] sm:$0xff]
  %v1800 = vld [vmem:[%s1798 + $0x8] sm:$0xff]
  %v1801 = vld [vmem:[%s1798 + $0x10] sm:$0xff]
  %v1802 = vld [vmem:[%s1798 + $0x18] sm:$0xff]
  %v1803 = vmul.f32 %v1799, %v1789
  %v1804 = vmul.f32 %v1800, %v1790
  %v1805 = vmul.f32 %v1801, %v1791
  %v1806 = vmul.f32 %v1802, %v1792
  %1807 = vmatprep.subr.mxu0 %v33
  %1808 = vmatpush1.msra.mxu0 %v32
  %1809 = vmatprep.subr.mxu0 %v36
  %1810 = vmatpush1.msra.mxu0 %v35
  %1811 = vmatprep.subr.mxu0 %v39
  %1812 = vmatpush1.msra.mxu0 %v38
  %1813 = vmatprep.subr.mxu0 %v42
  %1814 = vmatpush1.msra.mxu0 %v41
  %1815 = vmatprep.subr.mxu0 %v45
  %1816 = vmatpush1.msra.mxu0 %v44
  %1817 = vmatprep.subr.mxu0 %v48
  %1818 = vmatpush1.msra.mxu0 %v47
  %1819 = vmatprep.subr.mxu0 %v51
  %1820 = vmatpush1.msra.mxu0 %v50
  %1821 = vmatprep.subr.mxu0 %v54
  %1822 = vmatpush1.msra.mxu0 %v53
  %1823 = vmatprep.subr.mxu0 %v57
  %1824 = vmatpush1.msra.mxu0 %v56
  %1825 = vmatprep.subr.mxu0 %v60
  %1826 = vmatpush1.msra.mxu0 %v59
  %1827 = vmatprep.subr.mxu0 %v63
  %1828 = vmatpush1.msra.mxu0 %v62
  %1829 = vmatprep.subr.mxu0 %v66
  %1830 = vmatpush1.msra.mxu0 %v65
  %1831 = vmatprep.subr.mxu0 %v69
  %1832 = vmatpush1.msra.mxu0 %v68
  %1833 = vmatprep.subr.mxu0 %v72
  %1834 = vmatpush1.msra.mxu0 %v71
  %1835 = vmatprep.subr.mxu0 %v75
  %1836 = vmatpush1.msra.mxu0 %v74
  %1837 = vmatprep.subr.mxu0 %v78
  %1838 = vmatpush1.msra.mxu0 %v77
  %1839 = vmatprep.subr.mxu0 0.0
  %1840 = vmatpush1.msra.mxu0 0.0
  %1841 = vmatprep.subr.mxu0 0.0
  %1842 = vmatpush1.msra.mxu0 0.0
  %1843 = vmatprep.subr.mxu0 0.0
  %1844 = vmatpush1.msra.mxu0 0.0
  %1845 = vmatprep.subr.mxu0 0.0
  %1846 = vmatpush1.msra.mxu0 0.0
  %1847 = vmatprep.subr.mxu0 0.0
  %1848 = vmatpush1.msra.mxu0 0.0
  %1849 = vmatprep.subr.mxu0 0.0
  %1850 = vmatpush1.msra.mxu0 0.0
  %1851 = vmatprep.subr.mxu0 0.0
  %1852 = vmatpush1.msra.mxu0 0.0
  %1853 = vmatprep.subr.mxu0 0.0
  %1854 = vmatpush1.msra.mxu0 0.0
  %1855 = vmatprep.subr.mxu0 0.0
  %1856 = vmatpush1.msra.mxu0 0.0
  %1857 = vmatprep.subr.mxu0 0.0
  %1858 = vmatpush1.msra.mxu0 0.0
  %1859 = vmatprep.subr.mxu0 0.0
  %1860 = vmatpush1.msra.mxu0 0.0
  %1861 = vmatprep.subr.mxu0 0.0
  %1862 = vmatpush1.msra.mxu0 0.0
  %1863 = vmatprep.subr.mxu0 0.0
  %1864 = vmatpush1.msra.mxu0 0.0
  %1865 = vmatprep.subr.mxu0 0.0
  %1866 = vmatpush1.msra.mxu0 0.0
  %1867 = vmatprep.subr.mxu0 0.0
  %1868 = vmatpush1.msra.mxu0 0.0
  %1869 = vmatprep.subr.mxu0 0.0
  %1870 = vmatpush1.msra.mxu0 0.0
  %1871 = vmatprep.mubr.f32.mxu0 0.0
  %1872 = vmatmul.mubr.f32.gmra.mrb[0].mxu0 %v1803
  %v1873 = vpop.f32.mrb[0].mxu0
  %v1874 = vadd.f32 0.0, %v1873
  %v1875 = vpop.f32.mrb[0].mxu0
  %v1876 = vadd.f32 0.0, %v1875
  %1877 = vmatprep.mubr.f32.mxu0 0.0
  %1878 = vmatmul.mubr.f32.gmra.mrb[0].mxu0 %v1804
  %v1879 = vpop.f32.mrb[0].mxu0
  %v1880 = vadd.f32 0.0, %v1879
  %v1881 = vpop.f32.mrb[0].mxu0
  %v1882 = vadd.f32 0.0, %v1881
  %1883 = vmatprep.mubr.f32.mxu0 0.0
  %1884 = vmatmul.mubr.f32.gmra.mrb[0].mxu0 %v1805
  %v1885 = vpop.f32.mrb[0].mxu0
  %v1886 = vadd.f32 0.0, %v1885
  %v1887 = vpop.f32.mrb[0].mxu0
  %v1888 = vadd.f32 0.0, %v1887
  %1889 = vmatprep.mubr.f32.mxu0 0.0
  %1890 = vmatmul.mubr.f32.gmra.mrb[0].mxu0 %v1806
  %v1891 = vpop.f32.mrb[0].mxu0
  %v1892 = vadd.f32 0.0, %v1891
  %v1893 = vpop.f32.mrb[0].mxu0
  %v1894 = vadd.f32 0.0, %v1893
  %1895 = vdwg.mxu0
  %1896 = vmatprep.subr.mxu0 0.0
  %1897 = vmatpush1.msra.mxu0 %v34
  %1898 = vmatprep.subr.mxu0 0.0
  %1899 = vmatpush1.msra.mxu0 %v37
  %1900 = vmatprep.subr.mxu0 0.0
  %1901 = vmatpush1.msra.mxu0 %v40
  %1902 = vmatprep.subr.mxu0 0.0
  %1903 = vmatpush1.msra.mxu0 %v43
  %1904 = vmatprep.subr.mxu0 0.0
  %1905 = vmatpush1.msra.mxu0 %v46
  %1906 = vmatprep.subr.mxu0 0.0
  %1907 = vmatpush1.msra.mxu0 %v49
  %1908 = vmatprep.subr.mxu0 0.0
  %1909 = vmatpush1.msra.mxu0 %v52
  %1910 = vmatprep.subr.mxu0 0.0
  %1911 = vmatpush1.msra.mxu0 %v55
  %1912 = vmatprep.subr.mxu0 0.0
  %1913 = vmatpush1.msra.mxu0 %v58
  %1914 = vmatprep.subr.mxu0 0.0
  %1915 = vmatpush1.msra.mxu0 %v61
  %1916 = vmatprep.subr.mxu0 0.0
  %1917 = vmatpush1.msra.mxu0 %v64
  %1918 = vmatprep.subr.mxu0 0.0
  %1919 = vmatpush1.msra.mxu0 %v67
  %1920 = vmatprep.subr.mxu0 0.0
  %1921 = vmatpush1.msra.mxu0 %v70
  %1922 = vmatprep.subr.mxu0 0.0
  %1923 = vmatpush1.msra.mxu0 %v73
  %1924 = vmatprep.subr.mxu0 0.0
  %1925 = vmatpush1.msra.mxu0 %v76
  %1926 = vmatprep.subr.mxu0 0.0
  %1927 = vmatpush1.msra.mxu0 %v79
  %1928 = vmatprep.subr.mxu0 0.0
  %1929 = vmatpush1.msra.mxu0 0.0
  %1930 = vmatprep.subr.mxu0 0.0
  %1931 = vmatpush1.msra.mxu0 0.0
  %1932 = vmatprep.subr.mxu0 0.0
  %1933 = vmatpush1.msra.mxu0 0.0
  %1934 = vmatprep.subr.mxu0 0.0
  %1935 = vmatpush1.msra.mxu0 0.0
  %1936 = vmatprep.subr.mxu0 0.0
  %1937 = vmatpush1.msra.mxu0 0.0
  %1938 = vmatprep.subr.mxu0 0.0
  %1939 = vmatpush1.msra.mxu0 0.0
  %1940 = vmatprep.subr.mxu0 0.0
  %1941 = vmatpush1.msra.mxu0 0.0
  %1942 = vmatprep.subr.mxu0 0.0
  %1943 = vmatpush1.msra.mxu0 0.0
  %1944 = vmatprep.subr.mxu0 0.0
  %1945 = vmatpush1.msra.mxu0 0.0
  %1946 = vmatprep.subr.mxu0 0.0
  %1947 = vmatpush1.msra.mxu0 0.0
  %1948 = vmatprep.subr.mxu0 0.0
  %1949 = vmatpush1.msra.mxu0 0.0
  %1950 = vmatprep.subr.mxu0 0.0
  %1951 = vmatpush1.msra.mxu0 0.0
  %1952 = vmatprep.subr.mxu0 0.0
  %1953 = vmatpush1.msra.mxu0 0.0
  %1954 = vmatprep.subr.mxu0 0.0
  %1955 = vmatpush1.msra.mxu0 0.0
  %1956 = vmatprep.subr.mxu0 0.0
  %1957 = vmatpush1.msra.mxu0 0.0
  %1958 = vmatprep.subr.mxu0 0.0
  %1959 = vmatpush1.msra.mxu0 0.0
  %1960 = vmatprep.mubr.f32.mxu0 0.0
  %1961 = vmatmul.mubr.f32.gmra.mrb[0].mxu0 %v1803
  %v1962 = vpop.f32.mrb[0].mxu0
  %v1963 = vadd.f32 0.0, %v1962
  %v1964 = vpop.f32.mrb[0].mxu0
  %1965 = vmatprep.mubr.f32.mxu0 0.0
  %1966 = vmatmul.mubr.f32.gmra.mrb[0].mxu0 %v1804
  %v1967 = vpop.f32.mrb[0].mxu0
  %v1968 = vadd.f32 0.0, %v1967
  %v1969 = vpop.f32.mrb[0].mxu0
  %1970 = vmatprep.mubr.f32.mxu0 0.0
  %1971 = vmatmul.mubr.f32.gmra.mrb[0].mxu0 %v1805
  %v1972 = vpop.f32.mrb[0].mxu0
  %v1973 = vadd.f32 0.0, %v1972
  %v1974 = vpop.f32.mrb[0].mxu0
  %1975 = vmatprep.mubr.f32.mxu0 0.0
  %1976 = vmatmul.mubr.f32.gmra.mrb[0].mxu0 %v1806
  %v1977 = vpop.f32.mrb[0].mxu0
  %v1978 = vadd.f32 0.0, %v1977
  %v1979 = vpop.f32.mrb[0].mxu0
  %1980 = vdwg.mxu0
  %v1981 = vrot.slane %v1874, 7
  %v1982 = vrot.slane %v1880, 7
  %v1983 = vrot.slane %v1886, 7
  %v1984 = vrot.slane %v1892, 7
  %v1985 = vsel %vm270, %v1983, %v1984
  %v1986 = vsel %vm270, %v1982, %v1983
  %v1987 = vsel %vm270, %v1981, %v1982
  %v1988 = vsel %vm270, %v1984, %v1981
  %v1989 = vmul.f32 %v24, %v1988
  %v1990 = vmul.f32 %v25, %v1987
  %v1991 = vmul.f32 %v24, %v1986
  %v1992 = vmul.f32 %v25, %v1985
  %v1993 = vadd.f32 %v1989, %v1876
  %v1994 = vadd.f32 %v1990, %v1882
  %v1995 = vadd.f32 %v1991, %v1888
  %v1996 = vadd.f32 %v1992, %v1894
  %v1997 = vrot.slane %v1963, 1
  %v1998 = vrot.slane %v1968, 1
  %v1999 = vrot.slane %v1973, 1
  %v2000 = vrot.slane %v1978, 1
  %v2001 = vsel %vm287, %v1999, %v2000
  %v2002 = vsel %vm287, %v1998, %v1999
  %v2003 = vsel %vm287, %v1997, %v1998
  %v2004 = vsel %vm287, %v2000, %v1997
  %v2005 = vmul.f32 %v30, %v2003
  %v2006 = vmul.f32 %v31, %v2002
  %v2007 = vmul.f32 %v30, %v2001
  %v2008 = vmul.f32 %v31, %v2004
  %v2009 = vadd.f32 %v1993, %v2005
  %v2010 = vadd.f32 %v1994, %v2006
  %v2011 = vadd.f32 %v1995, %v2007
  %v2012 = vadd.f32 %v1996, %v2008
  %s2013 = scalar_lea.vmem %s1, 224
  %v2014 = vld [vmem:[%s2013] sm:$0xff]
  %v2015 = vld [vmem:[%s2013 + $0x8] sm:$0xff]
  %v2016 = vld [vmem:[%s2013 + $0x10] sm:$0xff]
  %v2017 = vld [vmem:[%s2013 + $0x18] sm:$0xff]
  %v2018 = vadd.f32 %v2014, %v2009
  %v2019 = vadd.f32 %v2015, %v2010
  %v2020 = vadd.f32 %v2016, %v2011
  %v2021 = vadd.f32 %v2017, %v2012
  %v2022 = vtanh.pop %v2018
  %v2023 = vtanh.pop %v2019
  %v2024 = vtanh.pop %v2020
  %v2025 = vtanh.pop %v2021
  %v2026 = vsub.f32 %v2022, %v1789
  %v2027 = vsub.f32 %v2023, %v1790
  %v2028 = vsub.f32 %v2024, %v1791
  %v2029 = vsub.f32 %v2025, %v1792
  %v2030 = vmul.f32 %v1799, %v2026
  %v2031 = vmul.f32 %v1800, %v2027
  %v2032 = vmul.f32 %v1801, %v2028
  %v2033 = vmul.f32 %v1802, %v2029
  %v2034 = vadd.f32 %v1789, %v2030
  %v2035 = vadd.f32 %v1790, %v2031
  %v2036 = vadd.f32 %v1791, %v2032
  %v2037 = vadd.f32 %v1792, %v2033
  %s2038 = scalar_lea.vmem %s4, 224
  %2039 = vst [vmem:[%s2038] sm:$0xff] %v2034
  %2040 = vst [vmem:[%s2038 + $0x8] sm:$0xff] %v2035
  %2041 = vst [vmem:[%s2038 + $0x10] sm:$0xff] %v2036
  %2042 = vst [vmem:[%s2038 + $0x18] sm:$0xff] %v2037
  // Predicated region
  $region18: #{convgru_pallas.3} parent=0 // pred_check
    _
  $region19: #{convgru_pallas.3} parent=0 // pred_check_branch
    %2044 = sbr.rel (0) target = $region21
  $region20: #{convgru_pallas.3} parent=0 // pred_region
    _
  $region21: #{convgru_pallas.3} parent=0 // pred_fallthru
    _
  // Predicated region
  $region22: #{convgru_pallas.3} parent=0 // pred_check
    _
  $region23: #{convgru_pallas.3} parent=0 // pred_check_branch
    %2046 = sbr.rel (0) target = $region25
  $region24: #{convgru_pallas.3} parent=0 // pred_region
    _
  $region25: #{convgru_pallas.3} parent=0 // pred_fallthru
    _

</llo_original>
